<compile_context>
chip_gen: v7x
topology: tpu7x:2x2x1
jax: 0.10.0
libtpu: 0.0.40
codegen_flags: <defaults>
</compile_context>

<pallas_src>
import functools

import jax
import jax.numpy as jnp
import numpy as np
from jax import lax
from jax.experimental import pallas as pl
from jax.experimental.pallas import tpu as pltpu

D1 = 2048                     # synthetic cat_net stream-1 feature dim
D2 = 1633                     # synthetic cat_net stream-2 feature dim
DCAT = D1 + D2                # 3681 — matches nn.Linear(3681, ...) in the module
D2P = 1664                    # D2 padded to a multiple of 128 lanes (13 * 128)
D2_FULL = (D2 // 128) * 128   # 1536 — x2 lanes reducible without a mask
HID = 64
NCLS = 10
NOUT = 16                     # fused head lanes: [0:10] ava, [10] baid, rest pad


def nima_kernel(x1_ref, x2_ref,
                fc_w_ref, fc_b_ref, fc1_w_ref, fc1_b_ref,
                hw1_ref, hw2_ref, hb_ref,
                out_ref):
    tm = x1_ref.shape[0]

    x1 = x1_ref[...]                            # [TM, D1]  bf16
    x2 = x2_ref[...]                            # [TM, D2P] bf16 (lanes >= D2 are 0)

    # ---- heads, independent of the gating chain ---------------------------
    # relu(x * s) == s * relu(x) holds ONLY because s = sigmoid(..) > 0; keep
    # this comment if the gate activation ever changes.
    r1 = jnp.maximum(x1, 0.0)                   # bf16
    r2 = jnp.maximum(x2, 0.0)                   # bf16 (padded lanes stay 0)
    head1 = jnp.dot(r1, hw1_ref[...], preferred_element_type=jnp.float32)
    head2 = jnp.dot(r2, hw2_ref[...], preferred_element_type=jnp.float32)

    # ---- per-row feature statistics (torch.max/min/mean/std, ddof=1) ------
    # sum / sum-of-squares on the MXU (ones matmul, f32 accumulate); max/min
    # on the XLU in bf16 (exact); only the [TM,1] stats are cast to f32.
    ones1 = jnp.ones((D1, 8), jnp.bfloat16)
    ones2 = jnp.ones((D2P, 8), jnp.bfloat16)
    sum1 = jnp.dot(x1, ones1, preferred_element_type=jnp.float32)[:, 0:1]
    sum2 = jnp.dot(x2, ones2, preferred_element_type=jnp.float32)[:, 0:1]
    ssq1 = jnp.dot(x1 * x1, ones1, preferred_element_type=jnp.float32)[:, 0:1]
    ssq2 = jnp.dot(x2 * x2, ones2, preferred_element_type=jnp.float32)[:, 0:1]

    mx1 = jnp.max(x1, axis=1, keepdims=True).astype(jnp.float32)
    mn1 = jnp.min(x1, axis=1, keepdims=True).astype(jnp.float32)

    # x2: 12 full 128-lane columns reduced unmasked; only the last column
    # (lanes D2_FULL:D2P, of which D2 - D2_FULL = 97 are valid) is masked.
    x2_head = x2[:, :D2_FULL]
    x2_tail = x2[:, D2_FULL:]                   # [TM, 128]
    lane_t = lax.broadcasted_iota(jnp.int32, (tm, D2P - D2_FULL), 1)
    valid_t = lane_t < (D2 - D2_FULL)
    mx2 = jnp.maximum(
        jnp.max(x2_head, axis=1, keepdims=True),
        jnp.max(jnp.where(valid_t, x2_tail, -jnp.inf), axis=1, keepdims=True),
    ).astype(jnp.float32)
    mn2 = jnp.minimum(
        jnp.min(x2_head, axis=1, keepdims=True),
        jnp.min(jnp.where(valid_t, x2_tail, jnp.inf), axis=1, keepdims=True),
    ).astype(jnp.float32)

    def mean_std(s, ssq, d):
        # single-pass variance: var = (sumsq - sum*mean) / (d - 1)
        mean = s * (1.0 / d)
        var = (ssq - s * mean) * (1.0 / (d - 1.0))
        return mean, jnp.sqrt(jnp.maximum(var, 0.0))

    mean1, std1 = mean_std(sum1, ssq1, float(D1))
    mean2, std2 = mean_std(sum2, ssq2, float(D2))
    stats = [mx1, mn1, mean1, std1, mx2, mn2, mean2, std2]   # each [TM, 1] f32

    # ---- gating MLP: Linear(8,64) -> Tanh -> Linear(64,2) -> Sigmoid ------
    # fc as a pairwise tree of stat_i * fc_w[i, :] (no in-kernel lane concat,
    # half the dependence depth of a serial chain).
    fc_w = fc_w_ref[...]                        # [8, HID] f32
    w = [fc_w[i:i + 1, :] for i in range(8)]
    t01 = stats[0] * w[0] + stats[1] * w[1]
    t23 = stats[2] * w[2] + stats[3] * w[3]
    t45 = stats[4] * w[4] + stats[5] * w[5]
    t67 = stats[6] * w[6] + stats[7] * w[7]
    h = jnp.tanh(((t01 + t23) + (t45 + t67)) + fc_b_ref[...])   # self.relu = Tanh
    gate = jax.nn.sigmoid(
        jnp.dot(h, fc1_w_ref[...], preferred_element_type=jnp.float32)
        + fc1_b_ref[...])                       # [TM, 2]
    s1 = gate[:, 0:1]
    s2 = gate[:, 1:2]

    # ---- fused heads: scale the [TM,16] matmul results, not the inputs ----
    logits = s1 * head1 + s2 * head2 + hb_ref[...]              # [TM, NOUT] f32

    lane = lax.broadcasted_iota(jnp.int32, (tm, NOUT), 1)
    is_ava = lane < NCLS
    m = jnp.max(jnp.where(is_ava, logits, -jnp.inf), axis=1, keepdims=True)
    e = jnp.where(is_ava, jnp.exp(logits - m), 0.0)
    probs = e * pl.reciprocal(jnp.sum(e, axis=1, keepdims=True), approx=True)
    baid = jax.nn.sigmoid(logits)
    out_ref[...] = jnp.where(is_ava, probs,
                             jnp.where(lane == NCLS, baid, 0.0))


def _prepare_kernel_params(p):
    """Pre-fuse / pre-pad head weights once at init (not per forward call)."""
    w = jnp.concatenate(
        [p['head_w'], p['baid_w'],
         jnp.zeros((DCAT, NOUT - NCLS - 1), jnp.float32)], axis=1)       # [DCAT, 16]
    b = jnp.concatenate(
        [p['head_b'], p['baid_b'],
         jnp.zeros((1, NOUT - NCLS - 1), jnp.float32)], axis=1)          # [1, 16]
    hw1 = w[:D1].astype(jnp.bfloat16)                                    # [D1, 16]
    hw2 = jnp.pad(w[D1:], ((0, D2P - D2), (0, 0))).astype(jnp.bfloat16)  # [D2P, 16]
    return dict(fc_w=p['fc_w'], fc_b=p['fc_b'],
                fc1_w=p['fc1_w'], fc1_b=p['fc1_b'],
                hw1=hw1, hw2=hw2, hb=b)


def init_params(key, in_features):
    ks = jax.random.split(key, 8)

    def lin_w(k, fan_in, fan_out):
        return (jax.random.normal(k, (fan_in, fan_out), jnp.float32)
                / np.sqrt(fan_in)).astype(jnp.float32)

    params = dict(
        # TODO(synk): cat_net() backbone is undefined in the provided snippet;
        # stand in with two deterministic linear+tanh feature extractors.
        base_w1=lin_w(ks[0], in_features, D1),
        base_w2=lin_w(ks[1], in_features, D2),
        fc_w=lin_w(ks[2], 8, HID),             # nn.Linear(8, 64)   (stored [in,out])
        fc_b=jnp.zeros((1, HID), jnp.float32),
        fc1_w=lin_w(ks[3], HID, 2),            # nn.Linear(64, 2)
        fc1_b=jnp.zeros((1, 2), jnp.float32),
        head_w=lin_w(ks[4], DCAT, NCLS),       # nn.Linear(3681, 10)
        head_b=jnp.zeros((1, NCLS), jnp.float32),
        baid_w=lin_w(ks[5], DCAT, 1),          # nn.Linear(3681, 1)
        baid_b=jnp.zeros((1, 1), jnp.float32),
    )
    params['kernel'] = _prepare_kernel_params(params)
    return params


def _round_up(x, m):
    return ((x + m - 1) // m) * m


def _choose_tm(b):
    # Up to 512-row batch tiles (amortizes the ~0.35 us/grid-step overhead);
    # split the batch into >= 2 grid steps when it is large enough so v7x's
    # two TensorCores both get work.  With bf16 intermediates a 512-row tile
    # stays well inside v7x's 64 MiB VMEM.
    half = (b + 1) // 2
    return max(8, min(512, _round_up(half, 8)))


def _base_model_bf16(x, params):
    """Synthetic cat_net stand-in; emits bf16, lane-padded activations so the
    cast/pad fuses into the producing matmuls (no extra f32 HBM round trip)."""
    b = x.shape[0]
    feat = x.reshape(b, -1).astype(jnp.float32)
    x1 = jnp.tanh(feat @ params['base_w1']).astype(jnp.bfloat16)          # [B, D1]
    x2 = jnp.pad(jnp.tanh(feat @ params['base_w2']).astype(jnp.bfloat16),
                 ((0, 0), (0, D2P - D2)))                                  # [B, D2P]
    return x1, x2


def _nima_heads(x1, x2, kp):
    """x1: [B, D1] bf16, x2: [B, D2P] bf16 (lane-padded). Returns (ava, baid)."""
    b = x1.shape[0]
    tm = _choose_tm(b)
    bp = _round_up(b, tm)
    x1p = jnp.pad(x1, ((0, bp - b), (0, 0)))
    x2p = jnp.pad(x2, ((0, bp - b), (0, 0)))

    def tile_spec(d):
        return pl.BlockSpec((tm, d), lambda i: (i, 0))

    def full_spec(arr):
        return pl.BlockSpec(arr.shape, lambda i: (0,) * arr.ndim)

    out = pl.pallas_call(
        nima_kernel,
        out_shape=jax.ShapeDtypeStruct((bp, NOUT), jnp.float32),
        grid=(bp // tm,),
        in_specs=[
            tile_spec(D1), tile_spec(D2P),
            full_spec(kp['fc_w']), full_spec(kp['fc_b']),
            full_spec(kp['fc1_w']), full_spec(kp['fc1_b']),
            full_spec(kp['hw1']), full_spec(kp['hw2']), full_spec(kp['hb']),
        ],
        out_specs=tile_spec(NOUT),
        compiler_params=pltpu.CompilerParams(
            dimension_semantics=("parallel",),
            vmem_limit_bytes=48 * 1024 * 1024),
    )(x1p, x2p, kp['fc_w'], kp['fc_b'], kp['fc1_w'], kp['fc1_b'],
      kp['hw1'], kp['hw2'], kp['hb'])

    ava = out[:b, :NCLS]
    baid = out[:b, NCLS:NCLS + 1]
    return ava, baid


@functools.partial(jax.jit, static_argnames=("mode",))
def nima_finetune_forward(x, params, mode='ava'):
    x1, x2 = _base_model_bf16(x, params)
    ava, baid = _nima_heads(x1, x2, params['kernel'])
    if mode == 'ava':
        return ava
    elif mode == 'baid':
        return baid
    return ava, baid


def reference_forward(x, params):
    """Pure-JAX f32 reference mirroring the PyTorch forward (mode='both')."""
    b = x.shape[0]
    feat = x.reshape(b, -1).astype(jnp.float32)
    x1 = jnp.tanh(feat @ params['base_w1'])
    x2 = jnp.tanh(feat @ params['base_w2'])

    def stats(z):
        d = z.shape[1]
        mx = jnp.max(z, axis=1, keepdims=True)
        mn = jnp.min(z, axis=1, keepdims=True)
        mean = jnp.mean(z, axis=1, keepdims=True)
        std = jnp.sqrt(jnp.sum((z - mean) ** 2, axis=1, keepdims=True) / (d - 1))
        return jnp.concatenate([mx, mn, mean, std], axis=1)

    x_in = jnp.concatenate([stats(x1), stats(x2)], axis=1)          # [B, 8]
    h = jnp.tanh(x_in @ params['fc_w'] + params['fc_b'])
    x_out = jax.nn.sigmoid(h @ params['fc1_w'] + params['fc1_b'])   # [B, 2]
    x1s = x1 * x_out[:, 0:1]
    x2s = x2 * x_out[:, 1:2]
    r = jnp.maximum(jnp.concatenate([x1s, x2s], axis=1), 0.0)       # Dropout = id
    ava = jax.nn.softmax(r @ params['head_w'] + params['head_b'], axis=1)
    baid = jax.nn.sigmoid(r @ params['baid_w'] + params['baid_b'])
    return ava, baid


if __name__ == "__main__":
    key = jax.random.PRNGKey(0)
    kx, kp = jax.random.split(key)

    B, C, H, W = 2, 4, 16, 16                  # small NCHW input
    x = jax.random.normal(kx, (B, C, H, W), jnp.float32)
    params = init_params(kp, C * H * W)

    ava, baid = nima_finetune_forward(x, params, mode='both')
    jax.block_until_ready((ava, baid))

    ref_ava, ref_baid = reference_forward(x, params)
    assert ava.shape == (B, NCLS) and baid.shape == (B, 1)
    assert np.allclose(np.asarray(ava), np.asarray(ref_ava), atol=1e-2, rtol=1e-2)
    assert np.allclose(np.asarray(baid), np.asarray(ref_baid), atol=1e-2, rtol=1e-2)

    print("KERNEL_OK")
</pallas_src>

<mosaic_0001>
module attributes {stable_mosaic.version = 11 : i64} {
  func.func @nima_kernel(%arg0: i32, %arg1: memref<8x2048xbf16, #tpu.memory_space<vmem>>, %arg2: memref<8x1664xbf16, #tpu.memory_space<vmem>>, %arg3: memref<8x64xf32, #tpu.memory_space<vmem>>, %arg4: memref<1x64xf32, #tpu.memory_space<vmem>>, %arg5: memref<64x2xf32, #tpu.memory_space<vmem>>, %arg6: memref<1x2xf32, #tpu.memory_space<vmem>>, %arg7: memref<2048x16xbf16, #tpu.memory_space<vmem>>, %arg8: memref<1664x16xbf16, #tpu.memory_space<vmem>>, %arg9: memref<1x16xf32, #tpu.memory_space<vmem>>, %arg10: memref<8x16xf32, #tpu.memory_space<vmem>>) attributes {dimension_semantics = [#tpu.dimension_semantics<parallel>], iteration_bounds = array<i64: 1>, scalar_prefetch = 0 : i64, scratch_operands = 0 : i64, tpu.core_type = #tpu.core_type<tc>, window_params = [{transform_indices = @transform_0, window_bounds = array<i64: 8, 2048>}, {transform_indices = @transform_1, window_bounds = array<i64: 8, 1664>}, {pipeline_mode = #tpu.pipeline_mode<synchronous>, transform_indices = @transform_2, window_bounds = array<i64: 8, 64>}, {pipeline_mode = #tpu.pipeline_mode<synchronous>, transform_indices = @transform_3, window_bounds = array<i64: 1, 64>}, {pipeline_mode = #tpu.pipeline_mode<synchronous>, transform_indices = @transform_4, window_bounds = array<i64: 64, 2>}, {pipeline_mode = #tpu.pipeline_mode<synchronous>, transform_indices = @transform_5, window_bounds = array<i64: 1, 2>}, {pipeline_mode = #tpu.pipeline_mode<synchronous>, transform_indices = @transform_6, window_bounds = array<i64: 2048, 16>}, {pipeline_mode = #tpu.pipeline_mode<synchronous>, transform_indices = @transform_7, window_bounds = array<i64: 1664, 16>}, {pipeline_mode = #tpu.pipeline_mode<synchronous>, transform_indices = @transform_8, window_bounds = array<i64: 1, 16>}, {transform_indices = @transform_9, window_bounds = array<i64: 8, 16>}]} {
    %c0 = arith.constant 0 : index
    %c0_0 = arith.constant 0 : index
    %0 = vector.load %arg1[%c0, %c0_0] : memref<8x2048xbf16, #tpu.memory_space<vmem>>, vector<8x2048xbf16>
    %c0_1 = arith.constant 0 : index
    %c0_2 = arith.constant 0 : index
    %1 = vector.load %arg2[%c0_1, %c0_2] : memref<8x1664xbf16, #tpu.memory_space<vmem>>, vector<8x1664xbf16>
    %cst = arith.constant 0.000000e+00 : bf16
    %2 = vector.broadcast %cst : bf16 to vector<8x2048xbf16>
    %3 = arith.maximumf %0, %2 : vector<8x2048xbf16>
    %cst_3 = arith.constant 0.000000e+00 : bf16
    %4 = vector.broadcast %cst_3 : bf16 to vector<8x1664xbf16>
    %5 = arith.maximumf %1, %4 : vector<8x1664xbf16>
    %c0_4 = arith.constant 0 : index
    %c0_5 = arith.constant 0 : index
    %6 = vector.load %arg7[%c0_4, %c0_5] : memref<2048x16xbf16, #tpu.memory_space<vmem>>, vector<2048x16xbf16>
    %cst_6 = arith.constant dense<0.000000e+00> : vector<8x16xf32>
    %7 = tpu.matmul %3, %6, %cst_6 {dimension_numbers = #tpu.dot_dimension_numbers<[1], [0], [0], [1], [0, 0, 1, 1], [], []>} : vector<8x2048xbf16>, vector<2048x16xbf16>, vector<8x16xf32> -> vector<8x16xf32>
    %c0_7 = arith.constant 0 : index
    %c0_8 = arith.constant 0 : index
    %8 = vector.load %arg8[%c0_7, %c0_8] : memref<1664x16xbf16, #tpu.memory_space<vmem>>, vector<1664x16xbf16>
    %cst_9 = arith.constant dense<0.000000e+00> : vector<8x16xf32>
    %9 = tpu.matmul %5, %8, %cst_9 {dimension_numbers = #tpu.dot_dimension_numbers<[1], [0], [0], [1], [0, 0, 1, 1], [], []>} : vector<8x1664xbf16>, vector<1664x16xbf16>, vector<8x16xf32> -> vector<8x16xf32>
    %cst_10 = arith.constant 1.000000e+00 : bf16
    %10 = vector.broadcast %cst_10 : bf16 to vector<2048x8xbf16>
    %cst_11 = arith.constant 1.000000e+00 : bf16
    %11 = vector.broadcast %cst_11 : bf16 to vector<1664x8xbf16>
    %cst_12 = arith.constant dense<0.000000e+00> : vector<8x8xf32>
    %12 = tpu.matmul %0, %10, %cst_12 {dimension_numbers = #tpu.dot_dimension_numbers<[1], [0], [0], [1], [0, 0, 1, 1], [], []>} : vector<8x2048xbf16>, vector<2048x8xbf16>, vector<8x8xf32> -> vector<8x8xf32>
    %13 = vector.extract_strided_slice %12 {offsets = [0, 0], sizes = [8, 1], strides = [1, 1]} : vector<8x8xf32> to vector<8x1xf32>
    %cst_13 = arith.constant dense<0.000000e+00> : vector<8x8xf32>
    %14 = tpu.matmul %1, %11, %cst_13 {dimension_numbers = #tpu.dot_dimension_numbers<[1], [0], [0], [1], [0, 0, 1, 1], [], []>} : vector<8x1664xbf16>, vector<1664x8xbf16>, vector<8x8xf32> -> vector<8x8xf32>
    %15 = vector.extract_strided_slice %14 {offsets = [0, 0], sizes = [8, 1], strides = [1, 1]} : vector<8x8xf32> to vector<8x1xf32>
    %16 = arith.mulf %0, %0 : vector<8x2048xbf16>
    %cst_14 = arith.constant dense<0.000000e+00> : vector<8x8xf32>
    %17 = tpu.matmul %16, %10, %cst_14 {dimension_numbers = #tpu.dot_dimension_numbers<[1], [0], [0], [1], [0, 0, 1, 1], [], []>} : vector<8x2048xbf16>, vector<2048x8xbf16>, vector<8x8xf32> -> vector<8x8xf32>
    %18 = vector.extract_strided_slice %17 {offsets = [0, 0], sizes = [8, 1], strides = [1, 1]} : vector<8x8xf32> to vector<8x1xf32>
    %19 = arith.mulf %1, %1 : vector<8x1664xbf16>
    %cst_15 = arith.constant dense<0.000000e+00> : vector<8x8xf32>
    %20 = tpu.matmul %19, %11, %cst_15 {dimension_numbers = #tpu.dot_dimension_numbers<[1], [0], [0], [1], [0, 0, 1, 1], [], []>} : vector<8x1664xbf16>, vector<1664x8xbf16>, vector<8x8xf32> -> vector<8x8xf32>
    %21 = vector.extract_strided_slice %20 {offsets = [0, 0], sizes = [8, 1], strides = [1, 1]} : vector<8x8xf32> to vector<8x1xf32>
    %cst_16 = arith.constant dense<0xFF80> : vector<8xbf16>
    %22 = vector.multi_reduction <maximumf>, %0, %cst_16 [1] : vector<8x2048xbf16> to vector<8xbf16>
    %23 = vector.shape_cast %22 : vector<8xbf16> to vector<8x1xbf16>
    %24 = arith.extf %23 : vector<8x1xbf16> to vector<8x1xf32>
    %cst_17 = arith.constant dense<0x7F80> : vector<8xbf16>
    %25 = vector.multi_reduction <minimumf>, %0, %cst_17 [1] : vector<8x2048xbf16> to vector<8xbf16>
    %26 = vector.shape_cast %25 : vector<8xbf16> to vector<8x1xbf16>
    %27 = arith.extf %26 : vector<8x1xbf16> to vector<8x1xf32>
    %28 = vector.extract_strided_slice %1 {offsets = [0, 0], sizes = [8, 1536], strides = [1, 1]} : vector<8x1664xbf16> to vector<8x1536xbf16>
    %29 = vector.extract_strided_slice %1 {offsets = [0, 1536], sizes = [8, 128], strides = [1, 1]} : vector<8x1664xbf16> to vector<8x128xbf16>
    %30 = tpu.iota {dimensions = array<i32: 1>} : vector<8x128xi32>
    %c97_i32 = arith.constant 97 : i32
    %31 = vector.broadcast %c97_i32 : i32 to vector<8x128xi32>
    %32 = arith.cmpi slt, %30, %31 : vector<8x128xi32>
    %cst_18 = arith.constant dense<0xFF80> : vector<8xbf16>
    %33 = vector.multi_reduction <maximumf>, %28, %cst_18 [1] : vector<8x1536xbf16> to vector<8xbf16>
    %34 = vector.shape_cast %33 : vector<8xbf16> to vector<8x1xbf16>
    %cst_19 = arith.constant 0xFF800000 : f32
    %35 = arith.truncf %cst_19 : f32 to bf16
    %36 = vector.broadcast %35 : bf16 to vector<8x128xbf16>
    %37 = arith.select %32, %29, %36 : vector<8x128xi1>, vector<8x128xbf16>
    %cst_20 = arith.constant dense<0xFF80> : vector<8xbf16>
    %38 = vector.multi_reduction <maximumf>, %37, %cst_20 [1] : vector<8x128xbf16> to vector<8xbf16>
    %39 = vector.shape_cast %38 : vector<8xbf16> to vector<8x1xbf16>
    %40 = arith.maximumf %34, %39 : vector<8x1xbf16>
    %41 = arith.extf %40 : vector<8x1xbf16> to vector<8x1xf32>
    %cst_21 = arith.constant dense<0x7F80> : vector<8xbf16>
    %42 = vector.multi_reduction <minimumf>, %28, %cst_21 [1] : vector<8x1536xbf16> to vector<8xbf16>
    %43 = vector.shape_cast %42 : vector<8xbf16> to vector<8x1xbf16>
    %cst_22 = arith.constant 0x7F800000 : f32
    %44 = arith.truncf %cst_22 : f32 to bf16
    %45 = vector.broadcast %44 : bf16 to vector<8x128xbf16>
    %46 = arith.select %32, %29, %45 : vector<8x128xi1>, vector<8x128xbf16>
    %cst_23 = arith.constant dense<0x7F80> : vector<8xbf16>
    %47 = vector.multi_reduction <minimumf>, %46, %cst_23 [1] : vector<8x128xbf16> to vector<8xbf16>
    %48 = vector.shape_cast %47 : vector<8xbf16> to vector<8x1xbf16>
    %49 = arith.minimumf %43, %48 : vector<8x1xbf16>
    %50 = arith.extf %49 : vector<8x1xbf16> to vector<8x1xf32>
    %cst_24 = arith.constant 4.8828125E-4 : f32
    %51 = vector.broadcast %cst_24 : f32 to vector<8x1xf32>
    %52 = arith.mulf %13, %51 : vector<8x1xf32>
    %53 = arith.mulf %13, %52 : vector<8x1xf32>
    %54 = arith.subf %18, %53 : vector<8x1xf32>
    %cst_25 = arith.constant 4.88519785E-4 : f32
    %55 = vector.broadcast %cst_25 : f32 to vector<8x1xf32>
    %56 = arith.mulf %54, %55 : vector<8x1xf32>
    %cst_26 = arith.constant 0.000000e+00 : f32
    %57 = vector.broadcast %cst_26 : f32 to vector<8x1xf32>
    %58 = arith.maximumf %56, %57 : vector<8x1xf32>
    %59 = math.sqrt %58 : vector<8x1xf32>
    %cst_27 = arith.constant 6.12369855E-4 : f32
    %60 = vector.broadcast %cst_27 : f32 to vector<8x1xf32>
    %61 = arith.mulf %15, %60 : vector<8x1xf32>
    %62 = arith.mulf %15, %61 : vector<8x1xf32>
    %63 = arith.subf %21, %62 : vector<8x1xf32>
    %cst_28 = arith.constant 6.1274512E-4 : f32
    %64 = vector.broadcast %cst_28 : f32 to vector<8x1xf32>
    %65 = arith.mulf %63, %64 : vector<8x1xf32>
    %cst_29 = arith.constant 0.000000e+00 : f32
    %66 = vector.broadcast %cst_29 : f32 to vector<8x1xf32>
    %67 = arith.maximumf %65, %66 : vector<8x1xf32>
    %68 = math.sqrt %67 : vector<8x1xf32>
    %c0_30 = arith.constant 0 : index
    %c0_31 = arith.constant 0 : index
    %69 = vector.load %arg3[%c0_30, %c0_31] : memref<8x64xf32, #tpu.memory_space<vmem>>, vector<8x64xf32>
    %70 = vector.extract_strided_slice %69 {offsets = [0, 0], sizes = [1, 64], strides = [1, 1]} : vector<8x64xf32> to vector<1x64xf32>
    %71 = vector.extract_strided_slice %69 {offsets = [1, 0], sizes = [1, 64], strides = [1, 1]} : vector<8x64xf32> to vector<1x64xf32>
    %72 = vector.extract_strided_slice %69 {offsets = [2, 0], sizes = [1, 64], strides = [1, 1]} : vector<8x64xf32> to vector<1x64xf32>
    %73 = vector.extract_strided_slice %69 {offsets = [3, 0], sizes = [1, 64], strides = [1, 1]} : vector<8x64xf32> to vector<1x64xf32>
    %74 = vector.extract_strided_slice %69 {offsets = [4, 0], sizes = [1, 64], strides = [1, 1]} : vector<8x64xf32> to vector<1x64xf32>
    %75 = vector.extract_strided_slice %69 {offsets = [5, 0], sizes = [1, 64], strides = [1, 1]} : vector<8x64xf32> to vector<1x64xf32>
    %76 = vector.extract_strided_slice %69 {offsets = [6, 0], sizes = [1, 64], strides = [1, 1]} : vector<8x64xf32> to vector<1x64xf32>
    %77 = vector.extract_strided_slice %69 {offsets = [7, 0], sizes = [1, 64], strides = [1, 1]} : vector<8x64xf32> to vector<1x64xf32>
    %78 = vector.broadcast %24 : vector<8x1xf32> to vector<8x64xf32>
    %79 = vector.broadcast %70 : vector<1x64xf32> to vector<8x64xf32>
    %80 = arith.mulf %78, %79 : vector<8x64xf32>
    %81 = vector.broadcast %27 : vector<8x1xf32> to vector<8x64xf32>
    %82 = vector.broadcast %71 : vector<1x64xf32> to vector<8x64xf32>
    %83 = arith.mulf %81, %82 : vector<8x64xf32>
    %84 = arith.addf %80, %83 : vector<8x64xf32>
    %85 = vector.broadcast %52 : vector<8x1xf32> to vector<8x64xf32>
    %86 = vector.broadcast %72 : vector<1x64xf32> to vector<8x64xf32>
    %87 = arith.mulf %85, %86 : vector<8x64xf32>
    %88 = vector.broadcast %59 : vector<8x1xf32> to vector<8x64xf32>
    %89 = vector.broadcast %73 : vector<1x64xf32> to vector<8x64xf32>
    %90 = arith.mulf %88, %89 : vector<8x64xf32>
    %91 = arith.addf %87, %90 : vector<8x64xf32>
    %92 = vector.broadcast %41 : vector<8x1xf32> to vector<8x64xf32>
    %93 = vector.broadcast %74 : vector<1x64xf32> to vector<8x64xf32>
    %94 = arith.mulf %92, %93 : vector<8x64xf32>
    %95 = vector.broadcast %50 : vector<8x1xf32> to vector<8x64xf32>
    %96 = vector.broadcast %75 : vector<1x64xf32> to vector<8x64xf32>
    %97 = arith.mulf %95, %96 : vector<8x64xf32>
    %98 = arith.addf %94, %97 : vector<8x64xf32>
    %99 = vector.broadcast %61 : vector<8x1xf32> to vector<8x64xf32>
    %100 = vector.broadcast %76 : vector<1x64xf32> to vector<8x64xf32>
    %101 = arith.mulf %99, %100 : vector<8x64xf32>
    %102 = vector.broadcast %68 : vector<8x1xf32> to vector<8x64xf32>
    %103 = vector.broadcast %77 : vector<1x64xf32> to vector<8x64xf32>
    %104 = arith.mulf %102, %103 : vector<8x64xf32>
    %105 = arith.addf %101, %104 : vector<8x64xf32>
    %106 = arith.addf %84, %91 : vector<8x64xf32>
    %107 = arith.addf %98, %105 : vector<8x64xf32>
    %108 = arith.addf %106, %107 : vector<8x64xf32>
    %c0_32 = arith.constant 0 : index
    %c0_33 = arith.constant 0 : index
    %109 = vector.load %arg4[%c0_32, %c0_33] : memref<1x64xf32, #tpu.memory_space<vmem>>, vector<1x64xf32>
    %110 = vector.broadcast %109 : vector<1x64xf32> to vector<8x64xf32>
    %111 = arith.addf %108, %110 : vector<8x64xf32>
    %112 = math.tanh %111 : vector<8x64xf32>
    %c0_34 = arith.constant 0 : index
    %c0_35 = arith.constant 0 : index
    %113 = vector.load %arg5[%c0_34, %c0_35] : memref<64x2xf32, #tpu.memory_space<vmem>>, vector<64x2xf32>
    %cst_36 = arith.constant dense<0.000000e+00> : vector<8x2xf32>
    %114 = tpu.matmul %112, %113, %cst_36 {dimension_numbers = #tpu.dot_dimension_numbers<[1], [0], [0], [1], [0, 0, 1, 1], [], []>} : vector<8x64xf32>, vector<64x2xf32>, vector<8x2xf32> -> vector<8x2xf32>
    %c0_37 = arith.constant 0 : index
    %c0_38 = arith.constant 0 : index
    %115 = vector.load %arg6[%c0_37, %c0_38] : memref<1x2xf32, #tpu.memory_space<vmem>>, vector<1x2xf32>
    %116 = vector.broadcast %115 : vector<1x2xf32> to vector<8x2xf32>
    %117 = arith.addf %114, %116 : vector<8x2xf32>
    %118 = arith.negf %117 : vector<8x2xf32>
    %119 = math.exp %118 : vector<8x2xf32>
    %cst_39 = arith.constant 1.000000e+00 : f32
    %120 = vector.broadcast %cst_39 : f32 to vector<8x2xf32>
    %121 = arith.addf %120, %119 : vector<8x2xf32>
    %122 = arith.divf %120, %121 : vector<8x2xf32>
    %123 = vector.extract_strided_slice %122 {offsets = [0, 0], sizes = [8, 1], strides = [1, 1]} : vector<8x2xf32> to vector<8x1xf32>
    %124 = vector.extract_strided_slice %122 {offsets = [0, 1], sizes = [8, 1], strides = [1, 1]} : vector<8x2xf32> to vector<8x1xf32>
    %125 = vector.broadcast %123 : vector<8x1xf32> to vector<8x16xf32>
    %126 = arith.mulf %125, %7 : vector<8x16xf32>
    %127 = vector.broadcast %124 : vector<8x1xf32> to vector<8x16xf32>
    %128 = arith.mulf %127, %9 : vector<8x16xf32>
    %129 = arith.addf %126, %128 : vector<8x16xf32>
    %c0_40 = arith.constant 0 : index
    %c0_41 = arith.constant 0 : index
    %130 = vector.load %arg9[%c0_40, %c0_41] : memref<1x16xf32, #tpu.memory_space<vmem>>, vector<1x16xf32>
    %131 = vector.broadcast %130 : vector<1x16xf32> to vector<8x16xf32>
    %132 = arith.addf %129, %131 : vector<8x16xf32>
    %133 = tpu.iota {dimensions = array<i32: 1>} : vector<8x16xi32>
    %c10_i32 = arith.constant 10 : i32
    %134 = vector.broadcast %c10_i32 : i32 to vector<8x16xi32>
    %135 = arith.cmpi slt, %133, %134 : vector<8x16xi32>
    %cst_42 = arith.constant 0xFF800000 : f32
    %136 = vector.broadcast %cst_42 : f32 to vector<8x16xf32>
    %137 = arith.select %135, %132, %136 : vector<8x16xi1>, vector<8x16xf32>
    %cst_43 = arith.constant dense<0xFF800000> : vector<8xf32>
    %138 = vector.multi_reduction <maximumf>, %137, %cst_43 [1] : vector<8x16xf32> to vector<8xf32>
    %139 = vector.shape_cast %138 : vector<8xf32> to vector<8x1xf32>
    %140 = vector.broadcast %139 : vector<8x1xf32> to vector<8x16xf32>
    %141 = arith.subf %132, %140 : vector<8x16xf32>
    %142 = math.exp %141 : vector<8x16xf32>
    %cst_44 = arith.constant 0.000000e+00 : f32
    %143 = vector.broadcast %cst_44 : f32 to vector<8x16xf32>
    %144 = arith.select %135, %142, %143 : vector<8x16xi1>, vector<8x16xf32>
    %cst_45 = arith.constant dense<0.000000e+00> : vector<8xf32>
    %145 = vector.multi_reduction <add>, %144, %cst_45 [1] : vector<8x16xf32> to vector<8xf32>
    %146 = vector.shape_cast %145 : vector<8xf32> to vector<8x1xf32>
    %147 = tpu.reciprocal %146 {approx = true} : vector<8x1xf32> -> vector<8x1xf32>
    %148 = vector.broadcast %147 : vector<8x1xf32> to vector<8x16xf32>
    %149 = arith.mulf %144, %148 : vector<8x16xf32>
    %150 = arith.negf %132 : vector<8x16xf32>
    %151 = math.exp %150 : vector<8x16xf32>
    %cst_46 = arith.constant 1.000000e+00 : f32
    %152 = vector.broadcast %cst_46 : f32 to vector<8x16xf32>
    %153 = arith.addf %152, %151 : vector<8x16xf32>
    %154 = arith.divf %152, %153 : vector<8x16xf32>
    %c10_i32_47 = arith.constant 10 : i32
    %155 = vector.broadcast %c10_i32_47 : i32 to vector<8x16xi32>
    %156 = arith.cmpi eq, %133, %155 : vector<8x16xi32>
    %cst_48 = arith.constant 0.000000e+00 : f32
    %157 = vector.broadcast %cst_48 : f32 to vector<8x16xf32>
    %158 = arith.select %156, %154, %157 : vector<8x16xi1>, vector<8x16xf32>
    %159 = arith.select %135, %149, %158 : vector<8x16xi1>, vector<8x16xf32>
    %c0_49 = arith.constant 0 : index
    %c0_50 = arith.constant 0 : index
    %160 = vector.load %arg10[%c0_49, %c0_50] : memref<8x16xf32, #tpu.memory_space<vmem>>, vector<8x16xf32>
    tpu.vector_store %arg10[%c0_49, %c0_50], %159 {strides = array<i32>} : memref<8x16xf32, #tpu.memory_space<vmem>>, vector<8x16xf32>,
    return
  }
  func.func @transform_0(%arg0: i32) -> (i32, i32) {
    %c0_i32 = arith.constant 0 : i32
    %c0_i32_0 = arith.constant 0 : i32
    return %arg0, %c0_i32 : i32, i32
  }
  func.func @transform_1(%arg0: i32) -> (i32, i32) {
    %c0_i32 = arith.constant 0 : i32
    %c0_i32_0 = arith.constant 0 : i32
    return %arg0, %c0_i32 : i32, i32
  }
  func.func @transform_2(%arg0: i32) -> (i32, i32) {
    %c0_i32 = arith.constant 0 : i32
    %c0_i32_0 = arith.constant 0 : i32
    %c0_i32_1 = arith.constant 0 : i32
    return %c0_i32, %c0_i32_0 : i32, i32
  }
  func.func @transform_3(%arg0: i32) -> (i32, i32) {
    %c0_i32 = arith.constant 0 : i32
    %c0_i32_0 = arith.constant 0 : i32
    %c0_i32_1 = arith.constant 0 : i32
    return %c0_i32, %c0_i32_0 : i32, i32
  }
  func.func @transform_4(%arg0: i32) -> (i32, i32) {
    %c0_i32 = arith.constant 0 : i32
    %c0_i32_0 = arith.constant 0 : i32
    %c0_i32_1 = arith.constant 0 : i32
    return %c0_i32, %c0_i32_0 : i32, i32
  }
  func.func @transform_5(%arg0: i32) -> (i32, i32) {
    %c0_i32 = arith.constant 0 : i32
    %c0_i32_0 = arith.constant 0 : i32
    %c0_i32_1 = arith.constant 0 : i32
    return %c0_i32, %c0_i32_0 : i32, i32
  }
  func.func @transform_6(%arg0: i32) -> (i32, i32) {
    %c0_i32 = arith.constant 0 : i32
    %c0_i32_0 = arith.constant 0 : i32
    %c0_i32_1 = arith.constant 0 : i32
    return %c0_i32, %c0_i32_0 : i32, i32
  }
  func.func @transform_7(%arg0: i32) -> (i32, i32) {
    %c0_i32 = arith.constant 0 : i32
    %c0_i32_0 = arith.constant 0 : i32
    %c0_i32_1 = arith.constant 0 : i32
    return %c0_i32, %c0_i32_0 : i32, i32
  }
  func.func @transform_8(%arg0: i32) -> (i32, i32) {
    %c0_i32 = arith.constant 0 : i32
    %c0_i32_0 = arith.constant 0 : i32
    %c0_i32_1 = arith.constant 0 : i32
    return %c0_i32, %c0_i32_0 : i32, i32
  }
  func.func @transform_9(%arg0: i32) -> (i32, i32) {
    %c0_i32 = arith.constant 0 : i32
    %c0_i32_0 = arith.constant 0 : i32
    return %arg0, %c0_i32 : i32, i32
  }
}

</mosaic_0001>

<llo_original>
// kernel: nima_finetune_forward.1
$region0: #{nima_finetune_forward.1}
  #allocation0 [shape = 'u32[]', space=smem, size = 0x4, offset = 0x4, fixed_abs, tag = 'smem constant byte address 0x4 - core index']
  #allocation1 [shape = 'u32[144,128]{1,0:T(1,128)}', space=vmem, size = 0x12000, scoped, tag = 'internal scratch']
  %s0 = inlined_call_operand.vmem [shape: bf16[8,2048], index: 0, kind: input, shape index: {}]
  %s1 = inlined_call_operand.vmem [shape: bf16[8,1664], index: 1, kind: input, shape index: {}]
  %s2 = inlined_call_operand.vmem [shape: f32[8,64], index: 2, kind: input, shape index: {}]
  %s3 = inlined_call_operand.vmem [shape: f32[1,64], index: 3, kind: input, shape index: {}]
  %s4 = inlined_call_operand.vmem [shape: f32[64,2], index: 4, kind: input, shape index: {}]
  %s5 = inlined_call_operand.vmem [shape: f32[1,2], index: 5, kind: input, shape index: {}]
  %s6 = inlined_call_operand.vmem [shape: bf16[2048,16], index: 6, kind: input, shape index: {}]
  %s7 = inlined_call_operand.vmem [shape: bf16[1664,16], index: 7, kind: input, shape index: {}]
  %s8 = inlined_call_operand.vmem [shape: f32[1,16], index: 8, kind: input, shape index: {}]
  %s9 = inlined_call_operand.vmem [shape: f32[8,16], index: 9, kind: output, shape index: {}]
  %s10 = sld [smem:[#allocation0]]
  $region46: #{nima_finetune_forward.1} parent=0
    _
  %s12 = ssub.s32 1, %s10
  %s13 = scalar_select 0, %s12, %s10
  // Predicated region
  $region2: #{nima_finetune_forward.1} parent=0 // pred_check
    _
  $region3: #{nima_finetune_forward.1} parent=0 // pred_check_branch
    %15 = sbr.rel (0) target = $region5
  $region4: #{nima_finetune_forward.1} parent=0 // pred_region
    _
  $region5: #{nima_finetune_forward.1} parent=0 // pred_fallthru
    _
  // Predicated region
  $region6: #{nima_finetune_forward.1} parent=0 // pred_check
    _
  $region7: #{nima_finetune_forward.1} parent=0 // pred_check_branch
    %17 = sbr.rel (0) target = $region9
  $region8: #{nima_finetune_forward.1} parent=0 // pred_region
    _
  $region9: #{nima_finetune_forward.1} parent=0 // pred_fallthru
    _
  // Predicated region
  $region10: #{nima_finetune_forward.1} parent=0 // pred_check
    _
  $region11: #{nima_finetune_forward.1} parent=0 // pred_check_branch
    %19 = sbr.rel (0) target = $region13
  $region12: #{nima_finetune_forward.1} parent=0 // pred_region
    _
  $region13: #{nima_finetune_forward.1} parent=0 // pred_fallthru
    _
  // Predicated region
  $region14: #{nima_finetune_forward.1} parent=0 // pred_check
    _
  $region15: #{nima_finetune_forward.1} parent=0 // pred_check_branch
    %21 = sbr.rel (0) target = $region17
  $region16: #{nima_finetune_forward.1} parent=0 // pred_region
    _
  $region17: #{nima_finetune_forward.1} parent=0 // pred_fallthru
    _
  // Predicated region
  $region18: #{nima_finetune_forward.1} parent=0 // pred_check
    _
  $region19: #{nima_finetune_forward.1} parent=0 // pred_check_branch
    %23 = sbr.rel (0) target = $region21
  $region20: #{nima_finetune_forward.1} parent=0 // pred_region
    _
  $region21: #{nima_finetune_forward.1} parent=0 // pred_fallthru
    _
  // Predicated region
  $region22: #{nima_finetune_forward.1} parent=0 // pred_check
    _
  $region23: #{nima_finetune_forward.1} parent=0 // pred_check_branch
    %25 = sbr.rel (0) target = $region25
  $region24: #{nima_finetune_forward.1} parent=0 // pred_region
    _
  $region25: #{nima_finetune_forward.1} parent=0 // pred_fallthru
    _
  // Predicated region
  $region26: #{nima_finetune_forward.1} parent=0 // pred_check
    _
  $region27: #{nima_finetune_forward.1} parent=0 // pred_check_branch
    %27 = sbr.rel (0) target = $region29
  $region28: #{nima_finetune_forward.1} parent=0 // pred_region
    _
  $region29: #{nima_finetune_forward.1} parent=0 // pred_fallthru
    _
  // Predicated region
  $region30: #{nima_finetune_forward.1} parent=0 // pred_check
    _
  $region31: #{nima_finetune_forward.1} parent=0 // pred_check_branch
    %29 = sbr.rel (0) target = $region33
  $region32: #{nima_finetune_forward.1} parent=0 // pred_region
    _
  $region33: #{nima_finetune_forward.1} parent=0 // pred_fallthru
    _
  // Predicated region
  $region34: #{nima_finetune_forward.1} parent=0 // pred_check
    _
  $region35: #{nima_finetune_forward.1} parent=0 // pred_check_branch
    %31 = sbr.rel (0) target = $region37
  $region36: #{nima_finetune_forward.1} parent=0 // pred_region
    _
  $region37: #{nima_finetune_forward.1} parent=0 // pred_fallthru
    _
  %v36 = vld [vmem:[%s0] sm:$0xff]
  %v37 = vld [vmem:[%s0 + $0x8] sm:$0xff]
  %v38 = vld [vmem:[%s0 + $0x10] sm:$0xff]
  %v39 = vld [vmem:[%s0 + $0x18] sm:$0xff]
  %v40 = vld [vmem:[%s0 + $0x20] sm:$0xff]
  %v41 = vld [vmem:[%s0 + $0x28] sm:$0xff]
  %v42 = vld [vmem:[%s0 + $0x30] sm:$0xff]
  %v43 = vld [vmem:[%s0 + $0x38] sm:$0xff]
  %v44 = vld [vmem:[%s1] sm:$0xff]
  %v45 = vld [vmem:[%s1 + $0x8] sm:$0xff]
  %v46 = vld [vmem:[%s1 + $0x10] sm:$0xff]
  %v47 = vld [vmem:[%s1 + $0x18] sm:$0xff]
  %v48 = vld [vmem:[%s1 + $0x20] sm:$0xff]
  %v49 = vld [vmem:[%s1 + $0x28] sm:$0xff]
  %v50 = vld [vmem:[%s1 + $0x30] sm:$0xf]
  %v51 = vmax.bf16 %v36, 0
  %v52 = vmax.bf16 %v37, 0
  %v53 = vmax.bf16 %v38, 0
  %v54 = vmax.bf16 %v39, 0
  %v55 = vmax.bf16 %v40, 0
  %v56 = vmax.bf16 %v41, 0
  %v57 = vmax.bf16 %v42, 0
  %v58 = vmax.bf16 %v43, 0
  %v59 = vmax.bf16 %v44, 0
  %v60 = vmax.bf16 %v45, 0
  %v61 = vmax.bf16 %v46, 0
  %v62 = vmax.bf16 %v47, 0
  %v63 = vmax.bf16 %v48, 0
  %v64 = vmax.bf16 %v49, 0
  %v65 = vmax.bf16 %v50, 0
  %v66 = vld [vmem:[%s6] sm:$0xf]
  %v67 = vld [vmem:[%s6 + $0x4] sm:$0xf]
  %v68 = vld [vmem:[%s6 + $0x8] sm:$0xf]
  %v69 = vld [vmem:[%s6 + $0xc] sm:$0xf]
  %v70 = vld [vmem:[%s6 + $0x10] sm:$0xf]
  %v71 = vld [vmem:[%s6 + $0x14] sm:$0xf]
  %v72 = vld [vmem:[%s6 + $0x18] sm:$0xf]
  %v73 = vld [vmem:[%s6 + $0x1c] sm:$0xf]
  %v74 = vld [vmem:[%s6 + $0x20] sm:$0xf]
  %v75 = vld [vmem:[%s6 + $0x24] sm:$0xf]
  %v76 = vld [vmem:[%s6 + $0x28] sm:$0xf]
  %v77 = vld [vmem:[%s6 + $0x2c] sm:$0xf]
  %v78 = vld [vmem:[%s6 + $0x30] sm:$0xf]
  %v79 = vld [vmem:[%s6 + $0x34] sm:$0xf]
  %v80 = vld [vmem:[%s6 + $0x38] sm:$0xf]
  %v81 = vld [vmem:[%s6 + $0x3c] sm:$0xf]
  %v82 = vld [vmem:[%s6 + $0x40] sm:$0xf]
  %v83 = vld [vmem:[%s6 + $0x44] sm:$0xf]
  %v84 = vld [vmem:[%s6 + $0x48] sm:$0xf]
  %v85 = vld [vmem:[%s6 + $0x4c] sm:$0xf]
  %v86 = vld [vmem:[%s6 + $0x50] sm:$0xf]
  %v87 = vld [vmem:[%s6 + $0x54] sm:$0xf]
  %v88 = vld [vmem:[%s6 + $0x58] sm:$0xf]
  %v89 = vld [vmem:[%s6 + $0x5c] sm:$0xf]
  %v90 = vld [vmem:[%s6 + $0x60] sm:$0xf]
  %v91 = vld [vmem:[%s6 + $0x64] sm:$0xf]
  %v92 = vld [vmem:[%s6 + $0x68] sm:$0xf]
  %v93 = vld [vmem:[%s6 + $0x6c] sm:$0xf]
  %v94 = vld [vmem:[%s6 + $0x70] sm:$0xf]
  %v95 = vld [vmem:[%s6 + $0x74] sm:$0xf]
  %v96 = vld [vmem:[%s6 + $0x78] sm:$0xf]
  %v97 = vld [vmem:[%s6 + $0x7c] sm:$0xf]
  %v98 = vld [vmem:[%s6 + $0x80] sm:$0xf]
  %v99 = vld [vmem:[%s6 + $0x84] sm:$0xf]
  %v100 = vld [vmem:[%s6 + $0x88] sm:$0xf]
  %v101 = vld [vmem:[%s6 + $0x8c] sm:$0xf]
  %v102 = vld [vmem:[%s6 + $0x90] sm:$0xf]
  %v103 = vld [vmem:[%s6 + $0x94] sm:$0xf]
  %v104 = vld [vmem:[%s6 + $0x98] sm:$0xf]
  %v105 = vld [vmem:[%s6 + $0x9c] sm:$0xf]
  %v106 = vld [vmem:[%s6 + $0xa0] sm:$0xf]
  %v107 = vld [vmem:[%s6 + $0xa4] sm:$0xf]
  %v108 = vld [vmem:[%s6 + $0xa8] sm:$0xf]
  %v109 = vld [vmem:[%s6 + $0xac] sm:$0xf]
  %v110 = vld [vmem:[%s6 + $0xb0] sm:$0xf]
  %v111 = vld [vmem:[%s6 + $0xb4] sm:$0xf]
  %v112 = vld [vmem:[%s6 + $0xb8] sm:$0xf]
  %v113 = vld [vmem:[%s6 + $0xbc] sm:$0xf]
  %v114 = vld [vmem:[%s6 + $0xc0] sm:$0xf]
  %v115 = vld [vmem:[%s6 + $0xc4] sm:$0xf]
  %v116 = vld [vmem:[%s6 + $0xc8] sm:$0xf]
  %v117 = vld [vmem:[%s6 + $0xcc] sm:$0xf]
  %v118 = vld [vmem:[%s6 + $0xd0] sm:$0xf]
  %v119 = vld [vmem:[%s6 + $0xd4] sm:$0xf]
  %v120 = vld [vmem:[%s6 + $0xd8] sm:$0xf]
  %v121 = vld [vmem:[%s6 + $0xdc] sm:$0xf]
  %v122 = vld [vmem:[%s6 + $0xe0] sm:$0xf]
  %v123 = vld [vmem:[%s6 + $0xe4] sm:$0xf]
  %v124 = vld [vmem:[%s6 + $0xe8] sm:$0xf]
  %v125 = vld [vmem:[%s6 + $0xec] sm:$0xf]
  %v126 = vld [vmem:[%s6 + $0xf0] sm:$0xf]
  %v127 = vld [vmem:[%s6 + $0xf4] sm:$0xf]
  %v128 = vld [vmem:[%s6 + $0xf8] sm:$0xf]
  %v129 = vld [vmem:[%s6 + $0xfc] sm:$0xf]
  %v130 = vld [vmem:[%s6 + $0x100] sm:$0xf]
  %v131 = vld [vmem:[%s6 + $0x104] sm:$0xf]
  %v132 = vld [vmem:[%s6 + $0x108] sm:$0xf]
  %v133 = vld [vmem:[%s6 + $0x10c] sm:$0xf]
  %v134 = vld [vmem:[%s6 + $0x110] sm:$0xf]
  %v135 = vld [vmem:[%s6 + $0x114] sm:$0xf]
  %v136 = vld [vmem:[%s6 + $0x118] sm:$0xf]
  %v137 = vld [vmem:[%s6 + $0x11c] sm:$0xf]
  %v138 = vld [vmem:[%s6 + $0x120] sm:$0xf]
  %v139 = vld [vmem:[%s6 + $0x124] sm:$0xf]
  %v140 = vld [vmem:[%s6 + $0x128] sm:$0xf]
  %v141 = vld [vmem:[%s6 + $0x12c] sm:$0xf]
  %v142 = vld [vmem:[%s6 + $0x130] sm:$0xf]
  %v143 = vld [vmem:[%s6 + $0x134] sm:$0xf]
  %v144 = vld [vmem:[%s6 + $0x138] sm:$0xf]
  %v145 = vld [vmem:[%s6 + $0x13c] sm:$0xf]
  %v146 = vld [vmem:[%s6 + $0x140] sm:$0xf]
  %v147 = vld [vmem:[%s6 + $0x144] sm:$0xf]
  %v148 = vld [vmem:[%s6 + $0x148] sm:$0xf]
  %v149 = vld [vmem:[%s6 + $0x14c] sm:$0xf]
  %v150 = vld [vmem:[%s6 + $0x150] sm:$0xf]
  %v151 = vld [vmem:[%s6 + $0x154] sm:$0xf]
  %v152 = vld [vmem:[%s6 + $0x158] sm:$0xf]
  %v153 = vld [vmem:[%s6 + $0x15c] sm:$0xf]
  %v154 = vld [vmem:[%s6 + $0x160] sm:$0xf]
  %v155 = vld [vmem:[%s6 + $0x164] sm:$0xf]
  %v156 = vld [vmem:[%s6 + $0x168] sm:$0xf]
  %v157 = vld [vmem:[%s6 + $0x16c] sm:$0xf]
  %v158 = vld [vmem:[%s6 + $0x170] sm:$0xf]
  %v159 = vld [vmem:[%s6 + $0x174] sm:$0xf]
  %v160 = vld [vmem:[%s6 + $0x178] sm:$0xf]
  %v161 = vld [vmem:[%s6 + $0x17c] sm:$0xf]
  %v162 = vld [vmem:[%s6 + $0x180] sm:$0xf]
  %v163 = vld [vmem:[%s6 + $0x184] sm:$0xf]
  %v164 = vld [vmem:[%s6 + $0x188] sm:$0xf]
  %v165 = vld [vmem:[%s6 + $0x18c] sm:$0xf]
  %v166 = vld [vmem:[%s6 + $0x190] sm:$0xf]
  %v167 = vld [vmem:[%s6 + $0x194] sm:$0xf]
  %v168 = vld [vmem:[%s6 + $0x198] sm:$0xf]
  %v169 = vld [vmem:[%s6 + $0x19c] sm:$0xf]
  %v170 = vld [vmem:[%s6 + $0x1a0] sm:$0xf]
  %v171 = vld [vmem:[%s6 + $0x1a4] sm:$0xf]
  %v172 = vld [vmem:[%s6 + $0x1a8] sm:$0xf]
  %v173 = vld [vmem:[%s6 + $0x1ac] sm:$0xf]
  %v174 = vld [vmem:[%s6 + $0x1b0] sm:$0xf]
  %v175 = vld [vmem:[%s6 + $0x1b4] sm:$0xf]
  %v176 = vld [vmem:[%s6 + $0x1b8] sm:$0xf]
  %v177 = vld [vmem:[%s6 + $0x1bc] sm:$0xf]
  %v178 = vld [vmem:[%s6 + $0x1c0] sm:$0xf]
  %v179 = vld [vmem:[%s6 + $0x1c4] sm:$0xf]
  %v180 = vld [vmem:[%s6 + $0x1c8] sm:$0xf]
  %v181 = vld [vmem:[%s6 + $0x1cc] sm:$0xf]
  %v182 = vld [vmem:[%s6 + $0x1d0] sm:$0xf]
  %v183 = vld [vmem:[%s6 + $0x1d4] sm:$0xf]
  %v184 = vld [vmem:[%s6 + $0x1d8] sm:$0xf]
  %v185 = vld [vmem:[%s6 + $0x1dc] sm:$0xf]
  %v186 = vld [vmem:[%s6 + $0x1e0] sm:$0xf]
  %v187 = vld [vmem:[%s6 + $0x1e4] sm:$0xf]
  %v188 = vld [vmem:[%s6 + $0x1e8] sm:$0xf]
  %v189 = vld [vmem:[%s6 + $0x1ec] sm:$0xf]
  %v190 = vld [vmem:[%s6 + $0x1f0] sm:$0xf]
  %v191 = vld [vmem:[%s6 + $0x1f4] sm:$0xf]
  %v192 = vld [vmem:[%s6 + $0x1f8] sm:$0xf]
  %v193 = vld [vmem:[%s6 + $0x1fc] sm:$0xf]
  %v194 = vld [vmem:[%s6 + $0x200] sm:$0xf]
  %v195 = vld [vmem:[%s6 + $0x204] sm:$0xf]
  %v196 = vld [vmem:[%s6 + $0x208] sm:$0xf]
  %v197 = vld [vmem:[%s6 + $0x20c] sm:$0xf]
  %v198 = vld [vmem:[%s6 + $0x210] sm:$0xf]
  %v199 = vld [vmem:[%s6 + $0x214] sm:$0xf]
  %v200 = vld [vmem:[%s6 + $0x218] sm:$0xf]
  %v201 = vld [vmem:[%s6 + $0x21c] sm:$0xf]
  %v202 = vld [vmem:[%s6 + $0x220] sm:$0xf]
  %v203 = vld [vmem:[%s6 + $0x224] sm:$0xf]
  %v204 = vld [vmem:[%s6 + $0x228] sm:$0xf]
  %v205 = vld [vmem:[%s6 + $0x22c] sm:$0xf]
  %v206 = vld [vmem:[%s6 + $0x230] sm:$0xf]
  %v207 = vld [vmem:[%s6 + $0x234] sm:$0xf]
  %v208 = vld [vmem:[%s6 + $0x238] sm:$0xf]
  %v209 = vld [vmem:[%s6 + $0x23c] sm:$0xf]
  %v210 = vld [vmem:[%s6 + $0x240] sm:$0xf]
  %v211 = vld [vmem:[%s6 + $0x244] sm:$0xf]
  %v212 = vld [vmem:[%s6 + $0x248] sm:$0xf]
  %v213 = vld [vmem:[%s6 + $0x24c] sm:$0xf]
  %v214 = vld [vmem:[%s6 + $0x250] sm:$0xf]
  %v215 = vld [vmem:[%s6 + $0x254] sm:$0xf]
  %v216 = vld [vmem:[%s6 + $0x258] sm:$0xf]
  %v217 = vld [vmem:[%s6 + $0x25c] sm:$0xf]
  %v218 = vld [vmem:[%s6 + $0x260] sm:$0xf]
  %v219 = vld [vmem:[%s6 + $0x264] sm:$0xf]
  %v220 = vld [vmem:[%s6 + $0x268] sm:$0xf]
  %v221 = vld [vmem:[%s6 + $0x26c] sm:$0xf]
  %v222 = vld [vmem:[%s6 + $0x270] sm:$0xf]
  %v223 = vld [vmem:[%s6 + $0x274] sm:$0xf]
  %v224 = vld [vmem:[%s6 + $0x278] sm:$0xf]
  %v225 = vld [vmem:[%s6 + $0x27c] sm:$0xf]
  %v226 = vld [vmem:[%s6 + $0x280] sm:$0xf]
  %v227 = vld [vmem:[%s6 + $0x284] sm:$0xf]
  %v228 = vld [vmem:[%s6 + $0x288] sm:$0xf]
  %v229 = vld [vmem:[%s6 + $0x28c] sm:$0xf]
  %v230 = vld [vmem:[%s6 + $0x290] sm:$0xf]
  %v231 = vld [vmem:[%s6 + $0x294] sm:$0xf]
  %v232 = vld [vmem:[%s6 + $0x298] sm:$0xf]
  %v233 = vld [vmem:[%s6 + $0x29c] sm:$0xf]
  %v234 = vld [vmem:[%s6 + $0x2a0] sm:$0xf]
  %v235 = vld [vmem:[%s6 + $0x2a4] sm:$0xf]
  %v236 = vld [vmem:[%s6 + $0x2a8] sm:$0xf]
  %v237 = vld [vmem:[%s6 + $0x2ac] sm:$0xf]
  %v238 = vld [vmem:[%s6 + $0x2b0] sm:$0xf]
  %v239 = vld [vmem:[%s6 + $0x2b4] sm:$0xf]
  %v240 = vld [vmem:[%s6 + $0x2b8] sm:$0xf]
  %v241 = vld [vmem:[%s6 + $0x2bc] sm:$0xf]
  %v242 = vld [vmem:[%s6 + $0x2c0] sm:$0xf]
  %v243 = vld [vmem:[%s6 + $0x2c4] sm:$0xf]
  %v244 = vld [vmem:[%s6 + $0x2c8] sm:$0xf]
  %v245 = vld [vmem:[%s6 + $0x2cc] sm:$0xf]
  %v246 = vld [vmem:[%s6 + $0x2d0] sm:$0xf]
  %v247 = vld [vmem:[%s6 + $0x2d4] sm:$0xf]
  %v248 = vld [vmem:[%s6 + $0x2d8] sm:$0xf]
  %v249 = vld [vmem:[%s6 + $0x2dc] sm:$0xf]
  %v250 = vld [vmem:[%s6 + $0x2e0] sm:$0xf]
  %v251 = vld [vmem:[%s6 + $0x2e4] sm:$0xf]
  %v252 = vld [vmem:[%s6 + $0x2e8] sm:$0xf]
  %v253 = vld [vmem:[%s6 + $0x2ec] sm:$0xf]
  %v254 = vld [vmem:[%s6 + $0x2f0] sm:$0xf]
  %v255 = vld [vmem:[%s6 + $0x2f4] sm:$0xf]
  %v256 = vld [vmem:[%s6 + $0x2f8] sm:$0xf]
  %v257 = vld [vmem:[%s6 + $0x2fc] sm:$0xf]
  %v258 = vld [vmem:[%s6 + $0x300] sm:$0xf]
  %v259 = vld [vmem:[%s6 + $0x304] sm:$0xf]
  %v260 = vld [vmem:[%s6 + $0x308] sm:$0xf]
  %v261 = vld [vmem:[%s6 + $0x30c] sm:$0xf]
  %v262 = vld [vmem:[%s6 + $0x310] sm:$0xf]
  %v263 = vld [vmem:[%s6 + $0x314] sm:$0xf]
  %v264 = vld [vmem:[%s6 + $0x318] sm:$0xf]
  %v265 = vld [vmem:[%s6 + $0x31c] sm:$0xf]
  %v266 = vld [vmem:[%s6 + $0x320] sm:$0xf]
  %v267 = vld [vmem:[%s6 + $0x324] sm:$0xf]
  %v268 = vld [vmem:[%s6 + $0x328] sm:$0xf]
  %v269 = vld [vmem:[%s6 + $0x32c] sm:$0xf]
  %v270 = vld [vmem:[%s6 + $0x330] sm:$0xf]
  %v271 = vld [vmem:[%s6 + $0x334] sm:$0xf]
  %v272 = vld [vmem:[%s6 + $0x338] sm:$0xf]
  %v273 = vld [vmem:[%s6 + $0x33c] sm:$0xf]
  %v274 = vld [vmem:[%s6 + $0x340] sm:$0xf]
  %v275 = vld [vmem:[%s6 + $0x344] sm:$0xf]
  %v276 = vld [vmem:[%s6 + $0x348] sm:$0xf]
  %v277 = vld [vmem:[%s6 + $0x34c] sm:$0xf]
  %v278 = vld [vmem:[%s6 + $0x350] sm:$0xf]
  %v279 = vld [vmem:[%s6 + $0x354] sm:$0xf]
  %v280 = vld [vmem:[%s6 + $0x358] sm:$0xf]
  %v281 = vld [vmem:[%s6 + $0x35c] sm:$0xf]
  %v282 = vld [vmem:[%s6 + $0x360] sm:$0xf]
  %v283 = vld [vmem:[%s6 + $0x364] sm:$0xf]
  %v284 = vld [vmem:[%s6 + $0x368] sm:$0xf]
  %v285 = vld [vmem:[%s6 + $0x36c] sm:$0xf]
  %v286 = vld [vmem:[%s6 + $0x370] sm:$0xf]
  %v287 = vld [vmem:[%s6 + $0x374] sm:$0xf]
  %v288 = vld [vmem:[%s6 + $0x378] sm:$0xf]
  %v289 = vld [vmem:[%s6 + $0x37c] sm:$0xf]
  %v290 = vld [vmem:[%s6 + $0x380] sm:$0xf]
  %v291 = vld [vmem:[%s6 + $0x384] sm:$0xf]
  %v292 = vld [vmem:[%s6 + $0x388] sm:$0xf]
  %v293 = vld [vmem:[%s6 + $0x38c] sm:$0xf]
  %v294 = vld [vmem:[%s6 + $0x390] sm:$0xf]
  %v295 = vld [vmem:[%s6 + $0x394] sm:$0xf]
  %v296 = vld [vmem:[%s6 + $0x398] sm:$0xf]
  %v297 = vld [vmem:[%s6 + $0x39c] sm:$0xf]
  %v298 = vld [vmem:[%s6 + $0x3a0] sm:$0xf]
  %v299 = vld [vmem:[%s6 + $0x3a4] sm:$0xf]
  %v300 = vld [vmem:[%s6 + $0x3a8] sm:$0xf]
  %v301 = vld [vmem:[%s6 + $0x3ac] sm:$0xf]
  %v302 = vld [vmem:[%s6 + $0x3b0] sm:$0xf]
  %v303 = vld [vmem:[%s6 + $0x3b4] sm:$0xf]
  %v304 = vld [vmem:[%s6 + $0x3b8] sm:$0xf]
  %v305 = vld [vmem:[%s6 + $0x3bc] sm:$0xf]
  %v306 = vld [vmem:[%s6 + $0x3c0] sm:$0xf]
  %v307 = vld [vmem:[%s6 + $0x3c4] sm:$0xf]
  %v308 = vld [vmem:[%s6 + $0x3c8] sm:$0xf]
  %v309 = vld [vmem:[%s6 + $0x3cc] sm:$0xf]
  %v310 = vld [vmem:[%s6 + $0x3d0] sm:$0xf]
  %v311 = vld [vmem:[%s6 + $0x3d4] sm:$0xf]
  %v312 = vld [vmem:[%s6 + $0x3d8] sm:$0xf]
  %v313 = vld [vmem:[%s6 + $0x3dc] sm:$0xf]
  %v314 = vld [vmem:[%s6 + $0x3e0] sm:$0xf]
  %v315 = vld [vmem:[%s6 + $0x3e4] sm:$0xf]
  %v316 = vld [vmem:[%s6 + $0x3e8] sm:$0xf]
  %v317 = vld [vmem:[%s6 + $0x3ec] sm:$0xf]
  %v318 = vld [vmem:[%s6 + $0x3f0] sm:$0xf]
  %v319 = vld [vmem:[%s6 + $0x3f4] sm:$0xf]
  %v320 = vld [vmem:[%s6 + $0x3f8] sm:$0xf]
  %v321 = vld [vmem:[%s6 + $0x3fc] sm:$0xf]
  %v330 = vunpack.c.l.b16 %v51
  %v331 = vunpack.c.h.b16 %v51
  %v332 = vunpack.c.l.b16 %v52
  %v333 = vunpack.c.h.b16 %v52
  %v334 = vunpack.c.l.b16 %v53
  %v335 = vunpack.c.h.b16 %v53
  %v336 = vunpack.c.l.b16 %v54
  %v337 = vunpack.c.h.b16 %v54
  %v338 = vunpack.c.l.b16 %v55
  %v339 = vunpack.c.h.b16 %v55
  %v340 = vunpack.c.l.b16 %v56
  %v341 = vunpack.c.h.b16 %v56
  %v342 = vunpack.c.l.b16 %v57
  %v343 = vunpack.c.h.b16 %v57
  %v344 = vunpack.c.l.b16 %v58
  %v345 = vunpack.c.h.b16 %v58
  %v346 = vpack.c.b16 %v330, %v330
  %v347 = vpack.c.b16 %v331, %v331
  %v348 = vpack.c.b16 %v332, %v332
  %v349 = vpack.c.b16 %v333, %v333
  %v350 = vpack.c.b16 %v334, %v334
  %v351 = vpack.c.b16 %v335, %v335
  %v352 = vpack.c.b16 %v336, %v336
  %v353 = vpack.c.b16 %v337, %v337
  %v354 = vpack.c.b16 %v338, %v338
  %v355 = vpack.c.b16 %v339, %v339
  %v356 = vpack.c.b16 %v340, %v340
  %v357 = vpack.c.b16 %v341, %v341
  %v358 = vpack.c.b16 %v342, %v342
  %v359 = vpack.c.b16 %v343, %v343
  %v360 = vpack.c.b16 %v344, %v344
  %v361 = vpack.c.b16 %v345, %v345
  %v634 = vunpack.c.l.b16 %v66
  %v635 = vunpack.c.l.b16 %v67
  %v636 = vunpack.c.l.b16 %v68
  %v637 = vunpack.c.l.b16 %v69
  %v638 = vunpack.c.l.b16 %v70
  %v639 = vunpack.c.l.b16 %v71
  %v640 = vunpack.c.l.b16 %v72
  %v641 = vunpack.c.l.b16 %v73
  %v642 = vunpack.c.l.b16 %v74
  %v643 = vunpack.c.l.b16 %v75
  %v644 = vunpack.c.l.b16 %v76
  %v645 = vunpack.c.l.b16 %v77
  %v646 = vunpack.c.l.b16 %v78
  %v647 = vunpack.c.l.b16 %v79
  %v648 = vunpack.c.l.b16 %v80
  %v649 = vunpack.c.l.b16 %v81
  %v650 = vunpack.c.l.b16 %v82
  %v651 = vunpack.c.l.b16 %v83
  %v652 = vunpack.c.l.b16 %v84
  %v653 = vunpack.c.l.b16 %v85
  %v654 = vunpack.c.l.b16 %v86
  %v655 = vunpack.c.l.b16 %v87
  %v656 = vunpack.c.l.b16 %v88
  %v657 = vunpack.c.l.b16 %v89
  %v658 = vunpack.c.l.b16 %v90
  %v659 = vunpack.c.l.b16 %v91
  %v660 = vunpack.c.l.b16 %v92
  %v661 = vunpack.c.l.b16 %v93
  %v662 = vunpack.c.l.b16 %v94
  %v663 = vunpack.c.l.b16 %v95
  %v664 = vunpack.c.l.b16 %v96
  %v665 = vunpack.c.l.b16 %v97
  %v666 = vunpack.c.l.b16 %v98
  %v667 = vunpack.c.l.b16 %v99
  %v668 = vunpack.c.l.b16 %v100
  %v669 = vunpack.c.l.b16 %v101
  %v670 = vunpack.c.l.b16 %v102
  %v671 = vunpack.c.l.b16 %v103
  %v672 = vunpack.c.l.b16 %v104
  %v673 = vunpack.c.l.b16 %v105
  %v674 = vunpack.c.l.b16 %v106
  %v675 = vunpack.c.l.b16 %v107
  %v676 = vunpack.c.l.b16 %v108
  %v677 = vunpack.c.l.b16 %v109
  %v678 = vunpack.c.l.b16 %v110
  %v679 = vunpack.c.l.b16 %v111
  %v680 = vunpack.c.l.b16 %v112
  %v681 = vunpack.c.l.b16 %v113
  %v682 = vunpack.c.l.b16 %v114
  %v683 = vunpack.c.l.b16 %v115
  %v684 = vunpack.c.l.b16 %v116
  %v685 = vunpack.c.l.b16 %v117
  %v686 = vunpack.c.l.b16 %v118
  %v687 = vunpack.c.l.b16 %v119
  %v688 = vunpack.c.l.b16 %v120
  %v689 = vunpack.c.l.b16 %v121
  %v690 = vunpack.c.l.b16 %v122
  %v691 = vunpack.c.l.b16 %v123
  %v692 = vunpack.c.l.b16 %v124
  %v693 = vunpack.c.l.b16 %v125
  %v694 = vunpack.c.l.b16 %v126
  %v695 = vunpack.c.l.b16 %v127
  %v696 = vunpack.c.l.b16 %v128
  %v697 = vunpack.c.l.b16 %v129
  %v698 = vunpack.c.l.b16 %v130
  %v699 = vunpack.c.l.b16 %v131
  %v700 = vunpack.c.l.b16 %v132
  %v701 = vunpack.c.l.b16 %v133
  %v702 = vunpack.c.l.b16 %v134
  %v703 = vunpack.c.l.b16 %v135
  %v704 = vunpack.c.l.b16 %v136
  %v705 = vunpack.c.l.b16 %v137
  %v706 = vunpack.c.l.b16 %v138
  %v707 = vunpack.c.l.b16 %v139
  %v708 = vunpack.c.l.b16 %v140
  %v709 = vunpack.c.l.b16 %v141
  %v710 = vunpack.c.l.b16 %v142
  %v711 = vunpack.c.l.b16 %v143
  %v712 = vunpack.c.l.b16 %v144
  %v713 = vunpack.c.l.b16 %v145
  %v714 = vunpack.c.l.b16 %v146
  %v715 = vunpack.c.l.b16 %v147
  %v716 = vunpack.c.l.b16 %v148
  %v717 = vunpack.c.l.b16 %v149
  %v718 = vunpack.c.l.b16 %v150
  %v719 = vunpack.c.l.b16 %v151
  %v720 = vunpack.c.l.b16 %v152
  %v721 = vunpack.c.l.b16 %v153
  %v722 = vunpack.c.l.b16 %v154
  %v723 = vunpack.c.l.b16 %v155
  %v724 = vunpack.c.l.b16 %v156
  %v725 = vunpack.c.l.b16 %v157
  %v726 = vunpack.c.l.b16 %v158
  %v727 = vunpack.c.l.b16 %v159
  %v728 = vunpack.c.l.b16 %v160
  %v729 = vunpack.c.l.b16 %v161
  %v730 = vunpack.c.l.b16 %v162
  %v731 = vunpack.c.l.b16 %v163
  %v732 = vunpack.c.l.b16 %v164
  %v733 = vunpack.c.l.b16 %v165
  %v734 = vunpack.c.l.b16 %v166
  %v735 = vunpack.c.l.b16 %v167
  %v736 = vunpack.c.l.b16 %v168
  %v737 = vunpack.c.l.b16 %v169
  %v738 = vunpack.c.l.b16 %v170
  %v739 = vunpack.c.l.b16 %v171
  %v740 = vunpack.c.l.b16 %v172
  %v741 = vunpack.c.l.b16 %v173
  %v742 = vunpack.c.l.b16 %v174
  %v743 = vunpack.c.l.b16 %v175
  %v744 = vunpack.c.l.b16 %v176
  %v745 = vunpack.c.l.b16 %v177
  %v746 = vunpack.c.l.b16 %v178
  %v747 = vunpack.c.l.b16 %v179
  %v748 = vunpack.c.l.b16 %v180
  %v749 = vunpack.c.l.b16 %v181
  %v750 = vunpack.c.l.b16 %v182
  %v751 = vunpack.c.l.b16 %v183
  %v752 = vunpack.c.l.b16 %v184
  %v753 = vunpack.c.l.b16 %v185
  %v754 = vunpack.c.l.b16 %v186
  %v755 = vunpack.c.l.b16 %v187
  %v756 = vunpack.c.l.b16 %v188
  %v757 = vunpack.c.l.b16 %v189
  %v758 = vunpack.c.l.b16 %v190
  %v759 = vunpack.c.l.b16 %v191
  %v760 = vunpack.c.l.b16 %v192
  %v761 = vunpack.c.l.b16 %v193
  %v762 = vunpack.c.l.b16 %v194
  %v763 = vunpack.c.l.b16 %v195
  %v764 = vunpack.c.l.b16 %v196
  %v765 = vunpack.c.l.b16 %v197
  %v766 = vunpack.c.l.b16 %v198
  %v767 = vunpack.c.l.b16 %v199
  %v768 = vunpack.c.l.b16 %v200
  %v769 = vunpack.c.l.b16 %v201
  %v770 = vunpack.c.l.b16 %v202
  %v771 = vunpack.c.l.b16 %v203
  %v772 = vunpack.c.l.b16 %v204
  %v773 = vunpack.c.l.b16 %v205
  %v774 = vunpack.c.l.b16 %v206
  %v775 = vunpack.c.l.b16 %v207
  %v776 = vunpack.c.l.b16 %v208
  %v777 = vunpack.c.l.b16 %v209
  %v778 = vunpack.c.l.b16 %v210
  %v779 = vunpack.c.l.b16 %v211
  %v780 = vunpack.c.l.b16 %v212
  %v781 = vunpack.c.l.b16 %v213
  %v782 = vunpack.c.l.b16 %v214
  %v783 = vunpack.c.l.b16 %v215
  %v784 = vunpack.c.l.b16 %v216
  %v785 = vunpack.c.l.b16 %v217
  %v786 = vunpack.c.l.b16 %v218
  %v787 = vunpack.c.l.b16 %v219
  %v788 = vunpack.c.l.b16 %v220
  %v789 = vunpack.c.l.b16 %v221
  %v790 = vunpack.c.l.b16 %v222
  %v791 = vunpack.c.l.b16 %v223
  %v792 = vunpack.c.l.b16 %v224
  %v793 = vunpack.c.l.b16 %v225
  %v794 = vunpack.c.l.b16 %v226
  %v795 = vunpack.c.l.b16 %v227
  %v796 = vunpack.c.l.b16 %v228
  %v797 = vunpack.c.l.b16 %v229
  %v798 = vunpack.c.l.b16 %v230
  %v799 = vunpack.c.l.b16 %v231
  %v800 = vunpack.c.l.b16 %v232
  %v801 = vunpack.c.l.b16 %v233
  %v802 = vunpack.c.l.b16 %v234
  %v803 = vunpack.c.l.b16 %v235
  %v804 = vunpack.c.l.b16 %v236
  %v805 = vunpack.c.l.b16 %v237
  %v806 = vunpack.c.l.b16 %v238
  %v807 = vunpack.c.l.b16 %v239
  %v808 = vunpack.c.l.b16 %v240
  %v809 = vunpack.c.l.b16 %v241
  %v810 = vunpack.c.l.b16 %v242
  %v811 = vunpack.c.l.b16 %v243
  %v812 = vunpack.c.l.b16 %v244
  %v813 = vunpack.c.l.b16 %v245
  %v814 = vunpack.c.l.b16 %v246
  %v815 = vunpack.c.l.b16 %v247
  %v816 = vunpack.c.l.b16 %v248
  %v817 = vunpack.c.l.b16 %v249
  %v818 = vunpack.c.l.b16 %v250
  %v819 = vunpack.c.l.b16 %v251
  %v820 = vunpack.c.l.b16 %v252
  %v821 = vunpack.c.l.b16 %v253
  %v822 = vunpack.c.l.b16 %v254
  %v823 = vunpack.c.l.b16 %v255
  %v824 = vunpack.c.l.b16 %v256
  %v825 = vunpack.c.l.b16 %v257
  %v826 = vunpack.c.l.b16 %v258
  %v827 = vunpack.c.l.b16 %v259
  %v828 = vunpack.c.l.b16 %v260
  %v829 = vunpack.c.l.b16 %v261
  %v830 = vunpack.c.l.b16 %v262
  %v831 = vunpack.c.l.b16 %v263
  %v832 = vunpack.c.l.b16 %v264
  %v833 = vunpack.c.l.b16 %v265
  %v834 = vunpack.c.l.b16 %v266
  %v835 = vunpack.c.l.b16 %v267
  %v836 = vunpack.c.l.b16 %v268
  %v837 = vunpack.c.l.b16 %v269
  %v838 = vunpack.c.l.b16 %v270
  %v839 = vunpack.c.l.b16 %v271
  %v840 = vunpack.c.l.b16 %v272
  %v841 = vunpack.c.l.b16 %v273
  %v842 = vunpack.c.l.b16 %v274
  %v843 = vunpack.c.l.b16 %v275
  %v844 = vunpack.c.l.b16 %v276
  %v845 = vunpack.c.l.b16 %v277
  %v846 = vunpack.c.l.b16 %v278
  %v847 = vunpack.c.l.b16 %v279
  %v848 = vunpack.c.l.b16 %v280
  %v849 = vunpack.c.l.b16 %v281
  %v850 = vunpack.c.l.b16 %v282
  %v851 = vunpack.c.l.b16 %v283
  %v852 = vunpack.c.l.b16 %v284
  %v853 = vunpack.c.l.b16 %v285
  %v854 = vunpack.c.l.b16 %v286
  %v855 = vunpack.c.l.b16 %v287
  %v856 = vunpack.c.l.b16 %v288
  %v857 = vunpack.c.l.b16 %v289
  %v858 = vunpack.c.l.b16 %v290
  %v859 = vunpack.c.l.b16 %v291
  %v860 = vunpack.c.l.b16 %v292
  %v861 = vunpack.c.l.b16 %v293
  %v862 = vunpack.c.l.b16 %v294
  %v863 = vunpack.c.l.b16 %v295
  %v864 = vunpack.c.l.b16 %v296
  %v865 = vunpack.c.l.b16 %v297
  %v866 = vunpack.c.l.b16 %v298
  %v867 = vunpack.c.l.b16 %v299
  %v868 = vunpack.c.l.b16 %v300
  %v869 = vunpack.c.l.b16 %v301
  %v870 = vunpack.c.l.b16 %v302
  %v871 = vunpack.c.l.b16 %v303
  %v872 = vunpack.c.l.b16 %v304
  %v873 = vunpack.c.l.b16 %v305
  %v874 = vunpack.c.l.b16 %v306
  %v875 = vunpack.c.l.b16 %v307
  %v876 = vunpack.c.l.b16 %v308
  %v877 = vunpack.c.l.b16 %v309
  %v878 = vunpack.c.l.b16 %v310
  %v879 = vunpack.c.l.b16 %v311
  %v880 = vunpack.c.l.b16 %v312
  %v881 = vunpack.c.l.b16 %v313
  %v882 = vunpack.c.l.b16 %v314
  %v883 = vunpack.c.l.b16 %v315
  %v884 = vunpack.c.l.b16 %v316
  %v885 = vunpack.c.l.b16 %v317
  %v886 = vunpack.c.l.b16 %v318
  %v887 = vunpack.c.l.b16 %v319
  %v888 = vunpack.c.l.b16 %v320
  %v889 = vunpack.c.l.b16 %v321
  %v890 = vpack.c.b16 %v635, %v634
  %v891 = vpack.c.b16 %v637, %v636
  %v892 = vpack.c.b16 %v639, %v638
  %v893 = vpack.c.b16 %v641, %v640
  %v894 = vpack.c.b16 %v643, %v642
  %v895 = vpack.c.b16 %v645, %v644
  %v896 = vpack.c.b16 %v647, %v646
  %v897 = vpack.c.b16 %v649, %v648
  %v898 = vpack.c.b16 %v651, %v650
  %v899 = vpack.c.b16 %v653, %v652
  %v900 = vpack.c.b16 %v655, %v654
  %v901 = vpack.c.b16 %v657, %v656
  %v902 = vpack.c.b16 %v659, %v658
  %v903 = vpack.c.b16 %v661, %v660
  %v904 = vpack.c.b16 %v663, %v662
  %v905 = vpack.c.b16 %v665, %v664
  %v906 = vpack.c.b16 %v667, %v666
  %v907 = vpack.c.b16 %v669, %v668
  %v908 = vpack.c.b16 %v671, %v670
  %v909 = vpack.c.b16 %v673, %v672
  %v910 = vpack.c.b16 %v675, %v674
  %v911 = vpack.c.b16 %v677, %v676
  %v912 = vpack.c.b16 %v679, %v678
  %v913 = vpack.c.b16 %v681, %v680
  %v914 = vpack.c.b16 %v683, %v682
  %v915 = vpack.c.b16 %v685, %v684
  %v916 = vpack.c.b16 %v687, %v686
  %v917 = vpack.c.b16 %v689, %v688
  %v918 = vpack.c.b16 %v691, %v690
  %v919 = vpack.c.b16 %v693, %v692
  %v920 = vpack.c.b16 %v695, %v694
  %v921 = vpack.c.b16 %v697, %v696
  %v922 = vpack.c.b16 %v699, %v698
  %v923 = vpack.c.b16 %v701, %v700
  %v924 = vpack.c.b16 %v703, %v702
  %v925 = vpack.c.b16 %v705, %v704
  %v926 = vpack.c.b16 %v707, %v706
  %v927 = vpack.c.b16 %v709, %v708
  %v928 = vpack.c.b16 %v711, %v710
  %v929 = vpack.c.b16 %v713, %v712
  %v930 = vpack.c.b16 %v715, %v714
  %v931 = vpack.c.b16 %v717, %v716
  %v932 = vpack.c.b16 %v719, %v718
  %v933 = vpack.c.b16 %v721, %v720
  %v934 = vpack.c.b16 %v723, %v722
  %v935 = vpack.c.b16 %v725, %v724
  %v936 = vpack.c.b16 %v727, %v726
  %v937 = vpack.c.b16 %v729, %v728
  %v938 = vpack.c.b16 %v731, %v730
  %v939 = vpack.c.b16 %v733, %v732
  %v940 = vpack.c.b16 %v735, %v734
  %v941 = vpack.c.b16 %v737, %v736
  %v942 = vpack.c.b16 %v739, %v738
  %v943 = vpack.c.b16 %v741, %v740
  %v944 = vpack.c.b16 %v743, %v742
  %v945 = vpack.c.b16 %v745, %v744
  %v946 = vpack.c.b16 %v747, %v746
  %v947 = vpack.c.b16 %v749, %v748
  %v948 = vpack.c.b16 %v751, %v750
  %v949 = vpack.c.b16 %v753, %v752
  %v950 = vpack.c.b16 %v755, %v754
  %v951 = vpack.c.b16 %v757, %v756
  %v952 = vpack.c.b16 %v759, %v758
  %v953 = vpack.c.b16 %v761, %v760
  %v954 = vpack.c.b16 %v763, %v762
  %v955 = vpack.c.b16 %v765, %v764
  %v956 = vpack.c.b16 %v767, %v766
  %v957 = vpack.c.b16 %v769, %v768
  %v958 = vpack.c.b16 %v771, %v770
  %v959 = vpack.c.b16 %v773, %v772
  %v960 = vpack.c.b16 %v775, %v774
  %v961 = vpack.c.b16 %v777, %v776
  %v962 = vpack.c.b16 %v779, %v778
  %v963 = vpack.c.b16 %v781, %v780
  %v964 = vpack.c.b16 %v783, %v782
  %v965 = vpack.c.b16 %v785, %v784
  %v966 = vpack.c.b16 %v787, %v786
  %v967 = vpack.c.b16 %v789, %v788
  %v968 = vpack.c.b16 %v791, %v790
  %v969 = vpack.c.b16 %v793, %v792
  %v970 = vpack.c.b16 %v795, %v794
  %v971 = vpack.c.b16 %v797, %v796
  %v972 = vpack.c.b16 %v799, %v798
  %v973 = vpack.c.b16 %v801, %v800
  %v974 = vpack.c.b16 %v803, %v802
  %v975 = vpack.c.b16 %v805, %v804
  %v976 = vpack.c.b16 %v807, %v806
  %v977 = vpack.c.b16 %v809, %v808
  %v978 = vpack.c.b16 %v811, %v810
  %v979 = vpack.c.b16 %v813, %v812
  %v980 = vpack.c.b16 %v815, %v814
  %v981 = vpack.c.b16 %v817, %v816
  %v982 = vpack.c.b16 %v819, %v818
  %v983 = vpack.c.b16 %v821, %v820
  %v984 = vpack.c.b16 %v823, %v822
  %v985 = vpack.c.b16 %v825, %v824
  %v986 = vpack.c.b16 %v827, %v826
  %v987 = vpack.c.b16 %v829, %v828
  %v988 = vpack.c.b16 %v831, %v830
  %v989 = vpack.c.b16 %v833, %v832
  %v990 = vpack.c.b16 %v835, %v834
  %v991 = vpack.c.b16 %v837, %v836
  %v992 = vpack.c.b16 %v839, %v838
  %v993 = vpack.c.b16 %v841, %v840
  %v994 = vpack.c.b16 %v843, %v842
  %v995 = vpack.c.b16 %v845, %v844
  %v996 = vpack.c.b16 %v847, %v846
  %v997 = vpack.c.b16 %v849, %v848
  %v998 = vpack.c.b16 %v851, %v850
  %v999 = vpack.c.b16 %v853, %v852
  %v1000 = vpack.c.b16 %v855, %v854
  %v1001 = vpack.c.b16 %v857, %v856
  %v1002 = vpack.c.b16 %v859, %v858
  %v1003 = vpack.c.b16 %v861, %v860
  %v1004 = vpack.c.b16 %v863, %v862
  %v1005 = vpack.c.b16 %v865, %v864
  %v1006 = vpack.c.b16 %v867, %v866
  %v1007 = vpack.c.b16 %v869, %v868
  %v1008 = vpack.c.b16 %v871, %v870
  %v1009 = vpack.c.b16 %v873, %v872
  %v1010 = vpack.c.b16 %v875, %v874
  %v1011 = vpack.c.b16 %v877, %v876
  %v1012 = vpack.c.b16 %v879, %v878
  %v1013 = vpack.c.b16 %v881, %v880
  %v1014 = vpack.c.b16 %v883, %v882
  %v1015 = vpack.c.b16 %v885, %v884
  %v1016 = vpack.c.b16 %v887, %v886
  %v1017 = vpack.c.b16 %v889, %v888
  %1146 = vmatprep.subr.bf16.mxu0 0
  %1147 = vmatpush1.bf16.msra.mxu0 %v890
  %1148 = vmatprep.subr.bf16.mxu0 0
  %1149 = vmatpush1.bf16.msra.mxu0 %v891
  %1150 = vmatprep.subr.bf16.mxu0 0
  %1151 = vmatpush1.bf16.msra.mxu0 %v892
  %1152 = vmatprep.subr.bf16.mxu0 0
  %1153 = vmatpush1.bf16.msra.mxu0 %v893
  %1154 = vmatprep.subr.bf16.mxu0 0
  %1155 = vmatpush1.bf16.msra.mxu0 %v894
  %1156 = vmatprep.subr.bf16.mxu0 0
  %1157 = vmatpush1.bf16.msra.mxu0 %v895
  %1158 = vmatprep.subr.bf16.mxu0 0
  %1159 = vmatpush1.bf16.msra.mxu0 %v896
  %1160 = vmatprep.subr.bf16.mxu0 0
  %1161 = vmatpush1.bf16.msra.mxu0 %v897
  %1162 = vmatprep.subr.bf16.mxu0 0
  %1163 = vmatpush1.bf16.msra.mxu0 %v898
  %1164 = vmatprep.subr.bf16.mxu0 0
  %1165 = vmatpush1.bf16.msra.mxu0 %v899
  %1166 = vmatprep.subr.bf16.mxu0 0
  %1167 = vmatpush1.bf16.msra.mxu0 %v900
  %1168 = vmatprep.subr.bf16.mxu0 0
  %1169 = vmatpush1.bf16.msra.mxu0 %v901
  %1170 = vmatprep.subr.bf16.mxu0 0
  %1171 = vmatpush1.bf16.msra.mxu0 %v902
  %1172 = vmatprep.subr.bf16.mxu0 0
  %1173 = vmatpush1.bf16.msra.mxu0 %v903
  %1174 = vmatprep.subr.bf16.mxu0 0
  %1175 = vmatpush1.bf16.msra.mxu0 %v904
  %1176 = vmatprep.subr.bf16.mxu0 0
  %1177 = vmatpush1.bf16.msra.mxu0 %v905
  %1178 = vmatprep.mubr.bf16.mxu0 %v347
  %1179 = vmatmul.mubr.bf16.gmra.mrb[0].mxu0 %v346
  %v1180 = vpop.f32.mrb[0].mxu0
  %v1181 = vadd.f32 0.0, %v1180
  %v1182 = vpop.f32.mrb[0].mxu0
  %v1183 = vpop.f32.mrb[0].mxu0
  %v1184 = vpop.f32.mrb[0].mxu0
  %1185 = vdwg.mxu0
  %1186 = vmatprep.subr.bf16.mxu0 0
  %1187 = vmatpush1.bf16.msra.mxu0 %v906
  %1188 = vmatprep.subr.bf16.mxu0 0
  %1189 = vmatpush1.bf16.msra.mxu0 %v907
  %1190 = vmatprep.subr.bf16.mxu0 0
  %1191 = vmatpush1.bf16.msra.mxu0 %v908
  %1192 = vmatprep.subr.bf16.mxu0 0
  %1193 = vmatpush1.bf16.msra.mxu0 %v909
  %1194 = vmatprep.subr.bf16.mxu0 0
  %1195 = vmatpush1.bf16.msra.mxu0 %v910
  %1196 = vmatprep.subr.bf16.mxu0 0
  %1197 = vmatpush1.bf16.msra.mxu0 %v911
  %1198 = vmatprep.subr.bf16.mxu0 0
  %1199 = vmatpush1.bf16.msra.mxu0 %v912
  %1200 = vmatprep.subr.bf16.mxu0 0
  %1201 = vmatpush1.bf16.msra.mxu0 %v913
  %1202 = vmatprep.subr.bf16.mxu0 0
  %1203 = vmatpush1.bf16.msra.mxu0 %v914
  %1204 = vmatprep.subr.bf16.mxu0 0
  %1205 = vmatpush1.bf16.msra.mxu0 %v915
  %1206 = vmatprep.subr.bf16.mxu0 0
  %1207 = vmatpush1.bf16.msra.mxu0 %v916
  %1208 = vmatprep.subr.bf16.mxu0 0
  %1209 = vmatpush1.bf16.msra.mxu0 %v917
  %1210 = vmatprep.subr.bf16.mxu0 0
  %1211 = vmatpush1.bf16.msra.mxu0 %v918
  %1212 = vmatprep.subr.bf16.mxu0 0
  %1213 = vmatpush1.bf16.msra.mxu0 %v919
  %1214 = vmatprep.subr.bf16.mxu0 0
  %1215 = vmatpush1.bf16.msra.mxu0 %v920
  %1216 = vmatprep.subr.bf16.mxu0 0
  %1217 = vmatpush1.bf16.msra.mxu0 %v921
  %1218 = vmatprep.mubr.bf16.mxu0 %v349
  %1219 = vmatmul.mubr.bf16.gmra.mrb[0].mxu0 %v348
  %v1220 = vpop.f32.mrb[0].mxu0
  %v1221 = vadd.f32 %v1181, %v1220
  %v1222 = vpop.f32.mrb[0].mxu0
  %v1223 = vpop.f32.mrb[0].mxu0
  %v1224 = vpop.f32.mrb[0].mxu0
  %1225 = vdwg.mxu0
  %1226 = vmatprep.subr.bf16.mxu0 0
  %1227 = vmatpush1.bf16.msra.mxu0 %v922
  %1228 = vmatprep.subr.bf16.mxu0 0
  %1229 = vmatpush1.bf16.msra.mxu0 %v923
  %1230 = vmatprep.subr.bf16.mxu0 0
  %1231 = vmatpush1.bf16.msra.mxu0 %v924
  %1232 = vmatprep.subr.bf16.mxu0 0
  %1233 = vmatpush1.bf16.msra.mxu0 %v925
  %1234 = vmatprep.subr.bf16.mxu0 0
  %1235 = vmatpush1.bf16.msra.mxu0 %v926
  %1236 = vmatprep.subr.bf16.mxu0 0
  %1237 = vmatpush1.bf16.msra.mxu0 %v927
  %1238 = vmatprep.subr.bf16.mxu0 0
  %1239 = vmatpush1.bf16.msra.mxu0 %v928
  %1240 = vmatprep.subr.bf16.mxu0 0
  %1241 = vmatpush1.bf16.msra.mxu0 %v929
  %1242 = vmatprep.subr.bf16.mxu0 0
  %1243 = vmatpush1.bf16.msra.mxu0 %v930
  %1244 = vmatprep.subr.bf16.mxu0 0
  %1245 = vmatpush1.bf16.msra.mxu0 %v931
  %1246 = vmatprep.subr.bf16.mxu0 0
  %1247 = vmatpush1.bf16.msra.mxu0 %v932
  %1248 = vmatprep.subr.bf16.mxu0 0
  %1249 = vmatpush1.bf16.msra.mxu0 %v933
  %1250 = vmatprep.subr.bf16.mxu0 0
  %1251 = vmatpush1.bf16.msra.mxu0 %v934
  %1252 = vmatprep.subr.bf16.mxu0 0
  %1253 = vmatpush1.bf16.msra.mxu0 %v935
  %1254 = vmatprep.subr.bf16.mxu0 0
  %1255 = vmatpush1.bf16.msra.mxu0 %v936
  %1256 = vmatprep.subr.bf16.mxu0 0
  %1257 = vmatpush1.bf16.msra.mxu0 %v937
  %1258 = vmatprep.mubr.bf16.mxu0 %v351
  %1259 = vmatmul.mubr.bf16.gmra.mrb[0].mxu0 %v350
  %v1260 = vpop.f32.mrb[0].mxu0
  %v1261 = vadd.f32 %v1221, %v1260
  %v1262 = vpop.f32.mrb[0].mxu0
  %v1263 = vpop.f32.mrb[0].mxu0
  %v1264 = vpop.f32.mrb[0].mxu0
  %1265 = vdwg.mxu0
  %1266 = vmatprep.subr.bf16.mxu0 0
  %1267 = vmatpush1.bf16.msra.mxu0 %v938
  %1268 = vmatprep.subr.bf16.mxu0 0
  %1269 = vmatpush1.bf16.msra.mxu0 %v939
  %1270 = vmatprep.subr.bf16.mxu0 0
  %1271 = vmatpush1.bf16.msra.mxu0 %v940
  %1272 = vmatprep.subr.bf16.mxu0 0
  %1273 = vmatpush1.bf16.msra.mxu0 %v941
  %1274 = vmatprep.subr.bf16.mxu0 0
  %1275 = vmatpush1.bf16.msra.mxu0 %v942
  %1276 = vmatprep.subr.bf16.mxu0 0
  %1277 = vmatpush1.bf16.msra.mxu0 %v943
  %1278 = vmatprep.subr.bf16.mxu0 0
  %1279 = vmatpush1.bf16.msra.mxu0 %v944
  %1280 = vmatprep.subr.bf16.mxu0 0
  %1281 = vmatpush1.bf16.msra.mxu0 %v945
  %1282 = vmatprep.subr.bf16.mxu0 0
  %1283 = vmatpush1.bf16.msra.mxu0 %v946
  %1284 = vmatprep.subr.bf16.mxu0 0
  %1285 = vmatpush1.bf16.msra.mxu0 %v947
  %1286 = vmatprep.subr.bf16.mxu0 0
  %1287 = vmatpush1.bf16.msra.mxu0 %v948
  %1288 = vmatprep.subr.bf16.mxu0 0
  %1289 = vmatpush1.bf16.msra.mxu0 %v949
  %1290 = vmatprep.subr.bf16.mxu0 0
  %1291 = vmatpush1.bf16.msra.mxu0 %v950
  %1292 = vmatprep.subr.bf16.mxu0 0
  %1293 = vmatpush1.bf16.msra.mxu0 %v951
  %1294 = vmatprep.subr.bf16.mxu0 0
  %1295 = vmatpush1.bf16.msra.mxu0 %v952
  %1296 = vmatprep.subr.bf16.mxu0 0
  %1297 = vmatpush1.bf16.msra.mxu0 %v953
  %1298 = vmatprep.mubr.bf16.mxu0 %v353
  %1299 = vmatmul.mubr.bf16.gmra.mrb[0].mxu0 %v352
  %v1300 = vpop.f32.mrb[0].mxu0
  %v1301 = vadd.f32 %v1261, %v1300
  %v1302 = vpop.f32.mrb[0].mxu0
  %v1303 = vpop.f32.mrb[0].mxu0
  %v1304 = vpop.f32.mrb[0].mxu0
  %1305 = vdwg.mxu0
  %1306 = vmatprep.subr.bf16.mxu0 0
  %1307 = vmatpush1.bf16.msra.mxu0 %v954
  %1308 = vmatprep.subr.bf16.mxu0 0
  %1309 = vmatpush1.bf16.msra.mxu0 %v955
  %1310 = vmatprep.subr.bf16.mxu0 0
  %1311 = vmatpush1.bf16.msra.mxu0 %v956
  %1312 = vmatprep.subr.bf16.mxu0 0
  %1313 = vmatpush1.bf16.msra.mxu0 %v957
  %1314 = vmatprep.subr.bf16.mxu0 0
  %1315 = vmatpush1.bf16.msra.mxu0 %v958
  %1316 = vmatprep.subr.bf16.mxu0 0
  %1317 = vmatpush1.bf16.msra.mxu0 %v959
  %1318 = vmatprep.subr.bf16.mxu0 0
  %1319 = vmatpush1.bf16.msra.mxu0 %v960
  %1320 = vmatprep.subr.bf16.mxu0 0
  %1321 = vmatpush1.bf16.msra.mxu0 %v961
  %1322 = vmatprep.subr.bf16.mxu0 0
  %1323 = vmatpush1.bf16.msra.mxu0 %v962
  %1324 = vmatprep.subr.bf16.mxu0 0
  %1325 = vmatpush1.bf16.msra.mxu0 %v963
  %1326 = vmatprep.subr.bf16.mxu0 0
  %1327 = vmatpush1.bf16.msra.mxu0 %v964
  %1328 = vmatprep.subr.bf16.mxu0 0
  %1329 = vmatpush1.bf16.msra.mxu0 %v965
  %1330 = vmatprep.subr.bf16.mxu0 0
  %1331 = vmatpush1.bf16.msra.mxu0 %v966
  %1332 = vmatprep.subr.bf16.mxu0 0
  %1333 = vmatpush1.bf16.msra.mxu0 %v967
  %1334 = vmatprep.subr.bf16.mxu0 0
  %1335 = vmatpush1.bf16.msra.mxu0 %v968
  %1336 = vmatprep.subr.bf16.mxu0 0
  %1337 = vmatpush1.bf16.msra.mxu0 %v969
  %1338 = vmatprep.mubr.bf16.mxu0 %v355
  %1339 = vmatmul.mubr.bf16.gmra.mrb[0].mxu0 %v354
  %v1340 = vpop.f32.mrb[0].mxu0
  %v1341 = vadd.f32 %v1301, %v1340
  %v1342 = vpop.f32.mrb[0].mxu0
  %v1343 = vpop.f32.mrb[0].mxu0
  %v1344 = vpop.f32.mrb[0].mxu0
  %1345 = vdwg.mxu0
  %1346 = vmatprep.subr.bf16.mxu0 0
  %1347 = vmatpush1.bf16.msra.mxu0 %v970
  %1348 = vmatprep.subr.bf16.mxu0 0
  %1349 = vmatpush1.bf16.msra.mxu0 %v971
  %1350 = vmatprep.subr.bf16.mxu0 0
  %1351 = vmatpush1.bf16.msra.mxu0 %v972
  %1352 = vmatprep.subr.bf16.mxu0 0
  %1353 = vmatpush1.bf16.msra.mxu0 %v973
  %1354 = vmatprep.subr.bf16.mxu0 0
  %1355 = vmatpush1.bf16.msra.mxu0 %v974
  %1356 = vmatprep.subr.bf16.mxu0 0
  %1357 = vmatpush1.bf16.msra.mxu0 %v975
  %1358 = vmatprep.subr.bf16.mxu0 0
  %1359 = vmatpush1.bf16.msra.mxu0 %v976
  %1360 = vmatprep.subr.bf16.mxu0 0
  %1361 = vmatpush1.bf16.msra.mxu0 %v977
  %1362 = vmatprep.subr.bf16.mxu0 0
  %1363 = vmatpush1.bf16.msra.mxu0 %v978
  %1364 = vmatprep.subr.bf16.mxu0 0
  %1365 = vmatpush1.bf16.msra.mxu0 %v979
  %1366 = vmatprep.subr.bf16.mxu0 0
  %1367 = vmatpush1.bf16.msra.mxu0 %v980
  %1368 = vmatprep.subr.bf16.mxu0 0
  %1369 = vmatpush1.bf16.msra.mxu0 %v981
  %1370 = vmatprep.subr.bf16.mxu0 0
  %1371 = vmatpush1.bf16.msra.mxu0 %v982
  %1372 = vmatprep.subr.bf16.mxu0 0
  %1373 = vmatpush1.bf16.msra.mxu0 %v983
  %1374 = vmatprep.subr.bf16.mxu0 0
  %1375 = vmatpush1.bf16.msra.mxu0 %v984
  %1376 = vmatprep.subr.bf16.mxu0 0
  %1377 = vmatpush1.bf16.msra.mxu0 %v985
  %1378 = vmatprep.mubr.bf16.mxu0 %v357
  %1379 = vmatmul.mubr.bf16.gmra.mrb[0].mxu0 %v356
  %v1380 = vpop.f32.mrb[0].mxu0
  %v1381 = vadd.f32 %v1341, %v1380
  %v1382 = vpop.f32.mrb[0].mxu0
  %v1383 = vpop.f32.mrb[0].mxu0
  %v1384 = vpop.f32.mrb[0].mxu0
  %1385 = vdwg.mxu0
  %1386 = vmatprep.subr.bf16.mxu0 0
  %1387 = vmatpush1.bf16.msra.mxu0 %v986
  %1388 = vmatprep.subr.bf16.mxu0 0
  %1389 = vmatpush1.bf16.msra.mxu0 %v987
  %1390 = vmatprep.subr.bf16.mxu0 0
  %1391 = vmatpush1.bf16.msra.mxu0 %v988
  %1392 = vmatprep.subr.bf16.mxu0 0
  %1393 = vmatpush1.bf16.msra.mxu0 %v989
  %1394 = vmatprep.subr.bf16.mxu0 0
  %1395 = vmatpush1.bf16.msra.mxu0 %v990
  %1396 = vmatprep.subr.bf16.mxu0 0
  %1397 = vmatpush1.bf16.msra.mxu0 %v991
  %1398 = vmatprep.subr.bf16.mxu0 0
  %1399 = vmatpush1.bf16.msra.mxu0 %v992
  %1400 = vmatprep.subr.bf16.mxu0 0
  %1401 = vmatpush1.bf16.msra.mxu0 %v993
  %1402 = vmatprep.subr.bf16.mxu0 0
  %1403 = vmatpush1.bf16.msra.mxu0 %v994
  %1404 = vmatprep.subr.bf16.mxu0 0
  %1405 = vmatpush1.bf16.msra.mxu0 %v995
  %1406 = vmatprep.subr.bf16.mxu0 0
  %1407 = vmatpush1.bf16.msra.mxu0 %v996
  %1408 = vmatprep.subr.bf16.mxu0 0
  %1409 = vmatpush1.bf16.msra.mxu0 %v997
  %1410 = vmatprep.subr.bf16.mxu0 0
  %1411 = vmatpush1.bf16.msra.mxu0 %v998
  %1412 = vmatprep.subr.bf16.mxu0 0
  %1413 = vmatpush1.bf16.msra.mxu0 %v999
  %1414 = vmatprep.subr.bf16.mxu0 0
  %1415 = vmatpush1.bf16.msra.mxu0 %v1000
  %1416 = vmatprep.subr.bf16.mxu0 0
  %1417 = vmatpush1.bf16.msra.mxu0 %v1001
  %1418 = vmatprep.mubr.bf16.mxu0 %v359
  %1419 = vmatmul.mubr.bf16.gmra.mrb[0].mxu0 %v358
  %v1420 = vpop.f32.mrb[0].mxu0
  %v1421 = vadd.f32 %v1381, %v1420
  %v1422 = vpop.f32.mrb[0].mxu0
  %v1423 = vpop.f32.mrb[0].mxu0
  %v1424 = vpop.f32.mrb[0].mxu0
  %1425 = vdwg.mxu0
  %1426 = vmatprep.subr.bf16.mxu0 0
  %1427 = vmatpush1.bf16.msra.mxu0 %v1002
  %1428 = vmatprep.subr.bf16.mxu0 0
  %1429 = vmatpush1.bf16.msra.mxu0 %v1003
  %1430 = vmatprep.subr.bf16.mxu0 0
  %1431 = vmatpush1.bf16.msra.mxu0 %v1004
  %1432 = vmatprep.subr.bf16.mxu0 0
  %1433 = vmatpush1.bf16.msra.mxu0 %v1005
  %1434 = vmatprep.subr.bf16.mxu0 0
  %1435 = vmatpush1.bf16.msra.mxu0 %v1006
  %1436 = vmatprep.subr.bf16.mxu0 0
  %1437 = vmatpush1.bf16.msra.mxu0 %v1007
  %1438 = vmatprep.subr.bf16.mxu0 0
  %1439 = vmatpush1.bf16.msra.mxu0 %v1008
  %1440 = vmatprep.subr.bf16.mxu0 0
  %1441 = vmatpush1.bf16.msra.mxu0 %v1009
  %1442 = vmatprep.subr.bf16.mxu0 0
  %1443 = vmatpush1.bf16.msra.mxu0 %v1010
  %1444 = vmatprep.subr.bf16.mxu0 0
  %1445 = vmatpush1.bf16.msra.mxu0 %v1011
  %1446 = vmatprep.subr.bf16.mxu0 0
  %1447 = vmatpush1.bf16.msra.mxu0 %v1012
  %1448 = vmatprep.subr.bf16.mxu0 0
  %1449 = vmatpush1.bf16.msra.mxu0 %v1013
  %1450 = vmatprep.subr.bf16.mxu0 0
  %1451 = vmatpush1.bf16.msra.mxu0 %v1014
  %1452 = vmatprep.subr.bf16.mxu0 0
  %1453 = vmatpush1.bf16.msra.mxu0 %v1015
  %1454 = vmatprep.subr.bf16.mxu0 0
  %1455 = vmatpush1.bf16.msra.mxu0 %v1016
  %1456 = vmatprep.subr.bf16.mxu0 0
  %1457 = vmatpush1.bf16.msra.mxu0 %v1017
  %1458 = vmatprep.mubr.bf16.mxu0 %v361
  %1459 = vmatmul.mubr.bf16.gmra.mrb[0].mxu0 %v360
  %v1460 = vpop.f32.mrb[0].mxu0
  %v1461 = vadd.f32 %v1421, %v1460
  %v1462 = vpop.f32.mrb[0].mxu0
  %v1463 = vpop.f32.mrb[0].mxu0
  %v1464 = vpop.f32.mrb[0].mxu0
  %1465 = vdwg.mxu0
  %v1466 = vld [vmem:[%s7] sm:$0xf]
  %v1467 = vld [vmem:[%s7 + $0x4] sm:$0xf]
  %v1468 = vld [vmem:[%s7 + $0x8] sm:$0xf]
  %v1469 = vld [vmem:[%s7 + $0xc] sm:$0xf]
  %v1470 = vld [vmem:[%s7 + $0x10] sm:$0xf]
  %v1471 = vld [vmem:[%s7 + $0x14] sm:$0xf]
  %v1472 = vld [vmem:[%s7 + $0x18] sm:$0xf]
  %v1473 = vld [vmem:[%s7 + $0x1c] sm:$0xf]
  %v1474 = vld [vmem:[%s7 + $0x20] sm:$0xf]
  %v1475 = vld [vmem:[%s7 + $0x24] sm:$0xf]
  %v1476 = vld [vmem:[%s7 + $0x28] sm:$0xf]
  %v1477 = vld [vmem:[%s7 + $0x2c] sm:$0xf]
  %v1478 = vld [vmem:[%s7 + $0x30] sm:$0xf]
  %v1479 = vld [vmem:[%s7 + $0x34] sm:$0xf]
  %v1480 = vld [vmem:[%s7 + $0x38] sm:$0xf]
  %v1481 = vld [vmem:[%s7 + $0x3c] sm:$0xf]
  %v1482 = vld [vmem:[%s7 + $0x40] sm:$0xf]
  %v1483 = vld [vmem:[%s7 + $0x44] sm:$0xf]
  %v1484 = vld [vmem:[%s7 + $0x48] sm:$0xf]
  %v1485 = vld [vmem:[%s7 + $0x4c] sm:$0xf]
  %v1486 = vld [vmem:[%s7 + $0x50] sm:$0xf]
  %v1487 = vld [vmem:[%s7 + $0x54] sm:$0xf]
  %v1488 = vld [vmem:[%s7 + $0x58] sm:$0xf]
  %v1489 = vld [vmem:[%s7 + $0x5c] sm:$0xf]
  %v1490 = vld [vmem:[%s7 + $0x60] sm:$0xf]
  %v1491 = vld [vmem:[%s7 + $0x64] sm:$0xf]
  %v1492 = vld [vmem:[%s7 + $0x68] sm:$0xf]
  %v1493 = vld [vmem:[%s7 + $0x6c] sm:$0xf]
  %v1494 = vld [vmem:[%s7 + $0x70] sm:$0xf]
  %v1495 = vld [vmem:[%s7 + $0x74] sm:$0xf]
  %v1496 = vld [vmem:[%s7 + $0x78] sm:$0xf]
  %v1497 = vld [vmem:[%s7 + $0x7c] sm:$0xf]
  %v1498 = vld [vmem:[%s7 + $0x80] sm:$0xf]
  %v1499 = vld [vmem:[%s7 + $0x84] sm:$0xf]
  %v1500 = vld [vmem:[%s7 + $0x88] sm:$0xf]
  %v1501 = vld [vmem:[%s7 + $0x8c] sm:$0xf]
  %v1502 = vld [vmem:[%s7 + $0x90] sm:$0xf]
  %v1503 = vld [vmem:[%s7 + $0x94] sm:$0xf]
  %v1504 = vld [vmem:[%s7 + $0x98] sm:$0xf]
  %v1505 = vld [vmem:[%s7 + $0x9c] sm:$0xf]
  %v1506 = vld [vmem:[%s7 + $0xa0] sm:$0xf]
  %v1507 = vld [vmem:[%s7 + $0xa4] sm:$0xf]
  %v1508 = vld [vmem:[%s7 + $0xa8] sm:$0xf]
  %v1509 = vld [vmem:[%s7 + $0xac] sm:$0xf]
  %v1510 = vld [vmem:[%s7 + $0xb0] sm:$0xf]
  %v1511 = vld [vmem:[%s7 + $0xb4] sm:$0xf]
  %v1512 = vld [vmem:[%s7 + $0xb8] sm:$0xf]
  %v1513 = vld [vmem:[%s7 + $0xbc] sm:$0xf]
  %v1514 = vld [vmem:[%s7 + $0xc0] sm:$0xf]
  %v1515 = vld [vmem:[%s7 + $0xc4] sm:$0xf]
  %v1516 = vld [vmem:[%s7 + $0xc8] sm:$0xf]
  %v1517 = vld [vmem:[%s7 + $0xcc] sm:$0xf]
  %v1518 = vld [vmem:[%s7 + $0xd0] sm:$0xf]
  %v1519 = vld [vmem:[%s7 + $0xd4] sm:$0xf]
  %v1520 = vld [vmem:[%s7 + $0xd8] sm:$0xf]
  %v1521 = vld [vmem:[%s7 + $0xdc] sm:$0xf]
  %v1522 = vld [vmem:[%s7 + $0xe0] sm:$0xf]
  %v1523 = vld [vmem:[%s7 + $0xe4] sm:$0xf]
  %v1524 = vld [vmem:[%s7 + $0xe8] sm:$0xf]
  %v1525 = vld [vmem:[%s7 + $0xec] sm:$0xf]
  %v1526 = vld [vmem:[%s7 + $0xf0] sm:$0xf]
  %v1527 = vld [vmem:[%s7 + $0xf4] sm:$0xf]
  %v1528 = vld [vmem:[%s7 + $0xf8] sm:$0xf]
  %v1529 = vld [vmem:[%s7 + $0xfc] sm:$0xf]
  %v1530 = vld [vmem:[%s7 + $0x100] sm:$0xf]
  %v1531 = vld [vmem:[%s7 + $0x104] sm:$0xf]
  %v1532 = vld [vmem:[%s7 + $0x108] sm:$0xf]
  %v1533 = vld [vmem:[%s7 + $0x10c] sm:$0xf]
  %v1534 = vld [vmem:[%s7 + $0x110] sm:$0xf]
  %v1535 = vld [vmem:[%s7 + $0x114] sm:$0xf]
  %v1536 = vld [vmem:[%s7 + $0x118] sm:$0xf]
  %v1537 = vld [vmem:[%s7 + $0x11c] sm:$0xf]
  %v1538 = vld [vmem:[%s7 + $0x120] sm:$0xf]
  %v1539 = vld [vmem:[%s7 + $0x124] sm:$0xf]
  %v1540 = vld [vmem:[%s7 + $0x128] sm:$0xf]
  %v1541 = vld [vmem:[%s7 + $0x12c] sm:$0xf]
  %v1542 = vld [vmem:[%s7 + $0x130] sm:$0xf]
  %v1543 = vld [vmem:[%s7 + $0x134] sm:$0xf]
  %v1544 = vld [vmem:[%s7 + $0x138] sm:$0xf]
  %v1545 = vld [vmem:[%s7 + $0x13c] sm:$0xf]
  %v1546 = vld [vmem:[%s7 + $0x140] sm:$0xf]
  %v1547 = vld [vmem:[%s7 + $0x144] sm:$0xf]
  %v1548 = vld [vmem:[%s7 + $0x148] sm:$0xf]
  %v1549 = vld [vmem:[%s7 + $0x14c] sm:$0xf]
  %v1550 = vld [vmem:[%s7 + $0x150] sm:$0xf]
  %v1551 = vld [vmem:[%s7 + $0x154] sm:$0xf]
  %v1552 = vld [vmem:[%s7 + $0x158] sm:$0xf]
  %v1553 = vld [vmem:[%s7 + $0x15c] sm:$0xf]
  %v1554 = vld [vmem:[%s7 + $0x160] sm:$0xf]
  %v1555 = vld [vmem:[%s7 + $0x164] sm:$0xf]
  %v1556 = vld [vmem:[%s7 + $0x168] sm:$0xf]
  %v1557 = vld [vmem:[%s7 + $0x16c] sm:$0xf]
  %v1558 = vld [vmem:[%s7 + $0x170] sm:$0xf]
  %v1559 = vld [vmem:[%s7 + $0x174] sm:$0xf]
  %v1560 = vld [vmem:[%s7 + $0x178] sm:$0xf]
  %v1561 = vld [vmem:[%s7 + $0x17c] sm:$0xf]
  %v1562 = vld [vmem:[%s7 + $0x180] sm:$0xf]
  %v1563 = vld [vmem:[%s7 + $0x184] sm:$0xf]
  %v1564 = vld [vmem:[%s7 + $0x188] sm:$0xf]
  %v1565 = vld [vmem:[%s7 + $0x18c] sm:$0xf]
  %v1566 = vld [vmem:[%s7 + $0x190] sm:$0xf]
  %v1567 = vld [vmem:[%s7 + $0x194] sm:$0xf]
  %v1568 = vld [vmem:[%s7 + $0x198] sm:$0xf]
  %v1569 = vld [vmem:[%s7 + $0x19c] sm:$0xf]
  %v1570 = vld [vmem:[%s7 + $0x1a0] sm:$0xf]
  %v1571 = vld [vmem:[%s7 + $0x1a4] sm:$0xf]
  %v1572 = vld [vmem:[%s7 + $0x1a8] sm:$0xf]
  %v1573 = vld [vmem:[%s7 + $0x1ac] sm:$0xf]
  %v1574 = vld [vmem:[%s7 + $0x1b0] sm:$0xf]
  %v1575 = vld [vmem:[%s7 + $0x1b4] sm:$0xf]
  %v1576 = vld [vmem:[%s7 + $0x1b8] sm:$0xf]
  %v1577 = vld [vmem:[%s7 + $0x1bc] sm:$0xf]
  %v1578 = vld [vmem:[%s7 + $0x1c0] sm:$0xf]
  %v1579 = vld [vmem:[%s7 + $0x1c4] sm:$0xf]
  %v1580 = vld [vmem:[%s7 + $0x1c8] sm:$0xf]
  %v1581 = vld [vmem:[%s7 + $0x1cc] sm:$0xf]
  %v1582 = vld [vmem:[%s7 + $0x1d0] sm:$0xf]
  %v1583 = vld [vmem:[%s7 + $0x1d4] sm:$0xf]
  %v1584 = vld [vmem:[%s7 + $0x1d8] sm:$0xf]
  %v1585 = vld [vmem:[%s7 + $0x1dc] sm:$0xf]
  %v1586 = vld [vmem:[%s7 + $0x1e0] sm:$0xf]
  %v1587 = vld [vmem:[%s7 + $0x1e4] sm:$0xf]
  %v1588 = vld [vmem:[%s7 + $0x1e8] sm:$0xf]
  %v1589 = vld [vmem:[%s7 + $0x1ec] sm:$0xf]
  %v1590 = vld [vmem:[%s7 + $0x1f0] sm:$0xf]
  %v1591 = vld [vmem:[%s7 + $0x1f4] sm:$0xf]
  %v1592 = vld [vmem:[%s7 + $0x1f8] sm:$0xf]
  %v1593 = vld [vmem:[%s7 + $0x1fc] sm:$0xf]
  %v1594 = vld [vmem:[%s7 + $0x200] sm:$0xf]
  %v1595 = vld [vmem:[%s7 + $0x204] sm:$0xf]
  %v1596 = vld [vmem:[%s7 + $0x208] sm:$0xf]
  %v1597 = vld [vmem:[%s7 + $0x20c] sm:$0xf]
  %v1598 = vld [vmem:[%s7 + $0x210] sm:$0xf]
  %v1599 = vld [vmem:[%s7 + $0x214] sm:$0xf]
  %v1600 = vld [vmem:[%s7 + $0x218] sm:$0xf]
  %v1601 = vld [vmem:[%s7 + $0x21c] sm:$0xf]
  %v1602 = vld [vmem:[%s7 + $0x220] sm:$0xf]
  %v1603 = vld [vmem:[%s7 + $0x224] sm:$0xf]
  %v1604 = vld [vmem:[%s7 + $0x228] sm:$0xf]
  %v1605 = vld [vmem:[%s7 + $0x22c] sm:$0xf]
  %v1606 = vld [vmem:[%s7 + $0x230] sm:$0xf]
  %v1607 = vld [vmem:[%s7 + $0x234] sm:$0xf]
  %v1608 = vld [vmem:[%s7 + $0x238] sm:$0xf]
  %v1609 = vld [vmem:[%s7 + $0x23c] sm:$0xf]
  %v1610 = vld [vmem:[%s7 + $0x240] sm:$0xf]
  %v1611 = vld [vmem:[%s7 + $0x244] sm:$0xf]
  %v1612 = vld [vmem:[%s7 + $0x248] sm:$0xf]
  %v1613 = vld [vmem:[%s7 + $0x24c] sm:$0xf]
  %v1614 = vld [vmem:[%s7 + $0x250] sm:$0xf]
  %v1615 = vld [vmem:[%s7 + $0x254] sm:$0xf]
  %v1616 = vld [vmem:[%s7 + $0x258] sm:$0xf]
  %v1617 = vld [vmem:[%s7 + $0x25c] sm:$0xf]
  %v1618 = vld [vmem:[%s7 + $0x260] sm:$0xf]
  %v1619 = vld [vmem:[%s7 + $0x264] sm:$0xf]
  %v1620 = vld [vmem:[%s7 + $0x268] sm:$0xf]
  %v1621 = vld [vmem:[%s7 + $0x26c] sm:$0xf]
  %v1622 = vld [vmem:[%s7 + $0x270] sm:$0xf]
  %v1623 = vld [vmem:[%s7 + $0x274] sm:$0xf]
  %v1624 = vld [vmem:[%s7 + $0x278] sm:$0xf]
  %v1625 = vld [vmem:[%s7 + $0x27c] sm:$0xf]
  %v1626 = vld [vmem:[%s7 + $0x280] sm:$0xf]
  %v1627 = vld [vmem:[%s7 + $0x284] sm:$0xf]
  %v1628 = vld [vmem:[%s7 + $0x288] sm:$0xf]
  %v1629 = vld [vmem:[%s7 + $0x28c] sm:$0xf]
  %v1630 = vld [vmem:[%s7 + $0x290] sm:$0xf]
  %v1631 = vld [vmem:[%s7 + $0x294] sm:$0xf]
  %v1632 = vld [vmem:[%s7 + $0x298] sm:$0xf]
  %v1633 = vld [vmem:[%s7 + $0x29c] sm:$0xf]
  %v1634 = vld [vmem:[%s7 + $0x2a0] sm:$0xf]
  %v1635 = vld [vmem:[%s7 + $0x2a4] sm:$0xf]
  %v1636 = vld [vmem:[%s7 + $0x2a8] sm:$0xf]
  %v1637 = vld [vmem:[%s7 + $0x2ac] sm:$0xf]
  %v1638 = vld [vmem:[%s7 + $0x2b0] sm:$0xf]
  %v1639 = vld [vmem:[%s7 + $0x2b4] sm:$0xf]
  %v1640 = vld [vmem:[%s7 + $0x2b8] sm:$0xf]
  %v1641 = vld [vmem:[%s7 + $0x2bc] sm:$0xf]
  %v1642 = vld [vmem:[%s7 + $0x2c0] sm:$0xf]
  %v1643 = vld [vmem:[%s7 + $0x2c4] sm:$0xf]
  %v1644 = vld [vmem:[%s7 + $0x2c8] sm:$0xf]
  %v1645 = vld [vmem:[%s7 + $0x2cc] sm:$0xf]
  %v1646 = vld [vmem:[%s7 + $0x2d0] sm:$0xf]
  %v1647 = vld [vmem:[%s7 + $0x2d4] sm:$0xf]
  %v1648 = vld [vmem:[%s7 + $0x2d8] sm:$0xf]
  %v1649 = vld [vmem:[%s7 + $0x2dc] sm:$0xf]
  %v1650 = vld [vmem:[%s7 + $0x2e0] sm:$0xf]
  %v1651 = vld [vmem:[%s7 + $0x2e4] sm:$0xf]
  %v1652 = vld [vmem:[%s7 + $0x2e8] sm:$0xf]
  %v1653 = vld [vmem:[%s7 + $0x2ec] sm:$0xf]
  %v1654 = vld [vmem:[%s7 + $0x2f0] sm:$0xf]
  %v1655 = vld [vmem:[%s7 + $0x2f4] sm:$0xf]
  %v1656 = vld [vmem:[%s7 + $0x2f8] sm:$0xf]
  %v1657 = vld [vmem:[%s7 + $0x2fc] sm:$0xf]
  %v1658 = vld [vmem:[%s7 + $0x300] sm:$0xf]
  %v1659 = vld [vmem:[%s7 + $0x304] sm:$0xf]
  %v1660 = vld [vmem:[%s7 + $0x308] sm:$0xf]
  %v1661 = vld [vmem:[%s7 + $0x30c] sm:$0xf]
  %v1662 = vld [vmem:[%s7 + $0x310] sm:$0xf]
  %v1663 = vld [vmem:[%s7 + $0x314] sm:$0xf]
  %v1664 = vld [vmem:[%s7 + $0x318] sm:$0xf]
  %v1665 = vld [vmem:[%s7 + $0x31c] sm:$0xf]
  %v1666 = vld [vmem:[%s7 + $0x320] sm:$0xf]
  %v1667 = vld [vmem:[%s7 + $0x324] sm:$0xf]
  %v1668 = vld [vmem:[%s7 + $0x328] sm:$0xf]
  %v1669 = vld [vmem:[%s7 + $0x32c] sm:$0xf]
  %v1670 = vld [vmem:[%s7 + $0x330] sm:$0xf]
  %v1671 = vld [vmem:[%s7 + $0x334] sm:$0xf]
  %v1672 = vld [vmem:[%s7 + $0x338] sm:$0xf]
  %v1673 = vld [vmem:[%s7 + $0x33c] sm:$0xf]
  %v1681 = vunpack.c.l.b16 %v59
  %v1682 = vunpack.c.h.b16 %v59
  %v1683 = vunpack.c.l.b16 %v60
  %v1684 = vunpack.c.h.b16 %v60
  %v1685 = vunpack.c.l.b16 %v61
  %v1686 = vunpack.c.h.b16 %v61
  %v1687 = vunpack.c.l.b16 %v62
  %v1688 = vunpack.c.h.b16 %v62
  %v1689 = vunpack.c.l.b16 %v63
  %v1690 = vunpack.c.h.b16 %v63
  %v1691 = vunpack.c.l.b16 %v64
  %v1692 = vunpack.c.h.b16 %v64
  %v1693 = vunpack.c.l.b16 %v65
  %v1694 = vpack.c.b16 %v1681, %v1681
  %v1695 = vpack.c.b16 %v1682, %v1682
  %v1696 = vpack.c.b16 %v1683, %v1683
  %v1697 = vpack.c.b16 %v1684, %v1684
  %v1698 = vpack.c.b16 %v1685, %v1685
  %v1699 = vpack.c.b16 %v1686, %v1686
  %v1700 = vpack.c.b16 %v1687, %v1687
  %v1701 = vpack.c.b16 %v1688, %v1688
  %v1702 = vpack.c.b16 %v1689, %v1689
  %v1703 = vpack.c.b16 %v1690, %v1690
  %v1704 = vpack.c.b16 %v1691, %v1691
  %v1705 = vpack.c.b16 %v1692, %v1692
  %v1706 = vpack.c.b16 %v1693, %v1693
  %v1928 = vunpack.c.l.b16 %v1466
  %v1929 = vunpack.c.l.b16 %v1467
  %v1930 = vunpack.c.l.b16 %v1468
  %v1931 = vunpack.c.l.b16 %v1469
  %v1932 = vunpack.c.l.b16 %v1470
  %v1933 = vunpack.c.l.b16 %v1471
  %v1934 = vunpack.c.l.b16 %v1472
  %v1935 = vunpack.c.l.b16 %v1473
  %v1936 = vunpack.c.l.b16 %v1474
  %v1937 = vunpack.c.l.b16 %v1475
  %v1938 = vunpack.c.l.b16 %v1476
  %v1939 = vunpack.c.l.b16 %v1477
  %v1940 = vunpack.c.l.b16 %v1478
  %v1941 = vunpack.c.l.b16 %v1479
  %v1942 = vunpack.c.l.b16 %v1480
  %v1943 = vunpack.c.l.b16 %v1481
  %v1944 = vunpack.c.l.b16 %v1482
  %v1945 = vunpack.c.l.b16 %v1483
  %v1946 = vunpack.c.l.b16 %v1484
  %v1947 = vunpack.c.l.b16 %v1485
  %v1948 = vunpack.c.l.b16 %v1486
  %v1949 = vunpack.c.l.b16 %v1487
  %v1950 = vunpack.c.l.b16 %v1488
  %v1951 = vunpack.c.l.b16 %v1489
  %v1952 = vunpack.c.l.b16 %v1490
  %v1953 = vunpack.c.l.b16 %v1491
  %v1954 = vunpack.c.l.b16 %v1492
  %v1955 = vunpack.c.l.b16 %v1493
  %v1956 = vunpack.c.l.b16 %v1494
  %v1957 = vunpack.c.l.b16 %v1495
  %v1958 = vunpack.c.l.b16 %v1496
  %v1959 = vunpack.c.l.b16 %v1497
  %v1960 = vunpack.c.l.b16 %v1498
  %v1961 = vunpack.c.l.b16 %v1499
  %v1962 = vunpack.c.l.b16 %v1500
  %v1963 = vunpack.c.l.b16 %v1501
  %v1964 = vunpack.c.l.b16 %v1502
  %v1965 = vunpack.c.l.b16 %v1503
  %v1966 = vunpack.c.l.b16 %v1504
  %v1967 = vunpack.c.l.b16 %v1505
  %v1968 = vunpack.c.l.b16 %v1506
  %v1969 = vunpack.c.l.b16 %v1507
  %v1970 = vunpack.c.l.b16 %v1508
  %v1971 = vunpack.c.l.b16 %v1509
  %v1972 = vunpack.c.l.b16 %v1510
  %v1973 = vunpack.c.l.b16 %v1511
  %v1974 = vunpack.c.l.b16 %v1512
  %v1975 = vunpack.c.l.b16 %v1513
  %v1976 = vunpack.c.l.b16 %v1514
  %v1977 = vunpack.c.l.b16 %v1515
  %v1978 = vunpack.c.l.b16 %v1516
  %v1979 = vunpack.c.l.b16 %v1517
  %v1980 = vunpack.c.l.b16 %v1518
  %v1981 = vunpack.c.l.b16 %v1519
  %v1982 = vunpack.c.l.b16 %v1520
  %v1983 = vunpack.c.l.b16 %v1521
  %v1984 = vunpack.c.l.b16 %v1522
  %v1985 = vunpack.c.l.b16 %v1523
  %v1986 = vunpack.c.l.b16 %v1524
  %v1987 = vunpack.c.l.b16 %v1525
  %v1988 = vunpack.c.l.b16 %v1526
  %v1989 = vunpack.c.l.b16 %v1527
  %v1990 = vunpack.c.l.b16 %v1528
  %v1991 = vunpack.c.l.b16 %v1529
  %v1992 = vunpack.c.l.b16 %v1530
  %v1993 = vunpack.c.l.b16 %v1531
  %v1994 = vunpack.c.l.b16 %v1532
  %v1995 = vunpack.c.l.b16 %v1533
  %v1996 = vunpack.c.l.b16 %v1534
  %v1997 = vunpack.c.l.b16 %v1535
  %v1998 = vunpack.c.l.b16 %v1536
  %v1999 = vunpack.c.l.b16 %v1537
  %v2000 = vunpack.c.l.b16 %v1538
  %v2001 = vunpack.c.l.b16 %v1539
  %v2002 = vunpack.c.l.b16 %v1540
  %v2003 = vunpack.c.l.b16 %v1541
  %v2004 = vunpack.c.l.b16 %v1542
  %v2005 = vunpack.c.l.b16 %v1543
  %v2006 = vunpack.c.l.b16 %v1544
  %v2007 = vunpack.c.l.b16 %v1545
  %v2008 = vunpack.c.l.b16 %v1546
  %v2009 = vunpack.c.l.b16 %v1547
  %v2010 = vunpack.c.l.b16 %v1548
  %v2011 = vunpack.c.l.b16 %v1549
  %v2012 = vunpack.c.l.b16 %v1550
  %v2013 = vunpack.c.l.b16 %v1551
  %v2014 = vunpack.c.l.b16 %v1552
  %v2015 = vunpack.c.l.b16 %v1553
  %v2016 = vunpack.c.l.b16 %v1554
  %v2017 = vunpack.c.l.b16 %v1555
  %v2018 = vunpack.c.l.b16 %v1556
  %v2019 = vunpack.c.l.b16 %v1557
  %v2020 = vunpack.c.l.b16 %v1558
  %v2021 = vunpack.c.l.b16 %v1559
  %v2022 = vunpack.c.l.b16 %v1560
  %v2023 = vunpack.c.l.b16 %v1561
  %v2024 = vunpack.c.l.b16 %v1562
  %v2025 = vunpack.c.l.b16 %v1563
  %v2026 = vunpack.c.l.b16 %v1564
  %v2027 = vunpack.c.l.b16 %v1565
  %v2028 = vunpack.c.l.b16 %v1566
  %v2029 = vunpack.c.l.b16 %v1567
  %v2030 = vunpack.c.l.b16 %v1568
  %v2031 = vunpack.c.l.b16 %v1569
  %v2032 = vunpack.c.l.b16 %v1570
  %v2033 = vunpack.c.l.b16 %v1571
  %v2034 = vunpack.c.l.b16 %v1572
  %v2035 = vunpack.c.l.b16 %v1573
  %v2036 = vunpack.c.l.b16 %v1574
  %v2037 = vunpack.c.l.b16 %v1575
  %v2038 = vunpack.c.l.b16 %v1576
  %v2039 = vunpack.c.l.b16 %v1577
  %v2040 = vunpack.c.l.b16 %v1578
  %v2041 = vunpack.c.l.b16 %v1579
  %v2042 = vunpack.c.l.b16 %v1580
  %v2043 = vunpack.c.l.b16 %v1581
  %v2044 = vunpack.c.l.b16 %v1582
  %v2045 = vunpack.c.l.b16 %v1583
  %v2046 = vunpack.c.l.b16 %v1584
  %v2047 = vunpack.c.l.b16 %v1585
  %v2048 = vunpack.c.l.b16 %v1586
  %v2049 = vunpack.c.l.b16 %v1587
  %v2050 = vunpack.c.l.b16 %v1588
  %v2051 = vunpack.c.l.b16 %v1589
  %v2052 = vunpack.c.l.b16 %v1590
  %v2053 = vunpack.c.l.b16 %v1591
  %v2054 = vunpack.c.l.b16 %v1592
  %v2055 = vunpack.c.l.b16 %v1593
  %v2056 = vunpack.c.l.b16 %v1594
  %v2057 = vunpack.c.l.b16 %v1595
  %v2058 = vunpack.c.l.b16 %v1596
  %v2059 = vunpack.c.l.b16 %v1597
  %v2060 = vunpack.c.l.b16 %v1598
  %v2061 = vunpack.c.l.b16 %v1599
  %v2062 = vunpack.c.l.b16 %v1600
  %v2063 = vunpack.c.l.b16 %v1601
  %v2064 = vunpack.c.l.b16 %v1602
  %v2065 = vunpack.c.l.b16 %v1603
  %v2066 = vunpack.c.l.b16 %v1604
  %v2067 = vunpack.c.l.b16 %v1605
  %v2068 = vunpack.c.l.b16 %v1606
  %v2069 = vunpack.c.l.b16 %v1607
  %v2070 = vunpack.c.l.b16 %v1608
  %v2071 = vunpack.c.l.b16 %v1609
  %v2072 = vunpack.c.l.b16 %v1610
  %v2073 = vunpack.c.l.b16 %v1611
  %v2074 = vunpack.c.l.b16 %v1612
  %v2075 = vunpack.c.l.b16 %v1613
  %v2076 = vunpack.c.l.b16 %v1614
  %v2077 = vunpack.c.l.b16 %v1615
  %v2078 = vunpack.c.l.b16 %v1616
  %v2079 = vunpack.c.l.b16 %v1617
  %v2080 = vunpack.c.l.b16 %v1618
  %v2081 = vunpack.c.l.b16 %v1619
  %v2082 = vunpack.c.l.b16 %v1620
  %v2083 = vunpack.c.l.b16 %v1621
  %v2084 = vunpack.c.l.b16 %v1622
  %v2085 = vunpack.c.l.b16 %v1623
  %v2086 = vunpack.c.l.b16 %v1624
  %v2087 = vunpack.c.l.b16 %v1625
  %v2088 = vunpack.c.l.b16 %v1626
  %v2089 = vunpack.c.l.b16 %v1627
  %v2090 = vunpack.c.l.b16 %v1628
  %v2091 = vunpack.c.l.b16 %v1629
  %v2092 = vunpack.c.l.b16 %v1630
  %v2093 = vunpack.c.l.b16 %v1631
  %v2094 = vunpack.c.l.b16 %v1632
  %v2095 = vunpack.c.l.b16 %v1633
  %v2096 = vunpack.c.l.b16 %v1634
  %v2097 = vunpack.c.l.b16 %v1635
  %v2098 = vunpack.c.l.b16 %v1636
  %v2099 = vunpack.c.l.b16 %v1637
  %v2100 = vunpack.c.l.b16 %v1638
  %v2101 = vunpack.c.l.b16 %v1639
  %v2102 = vunpack.c.l.b16 %v1640
  %v2103 = vunpack.c.l.b16 %v1641
  %v2104 = vunpack.c.l.b16 %v1642
  %v2105 = vunpack.c.l.b16 %v1643
  %v2106 = vunpack.c.l.b16 %v1644
  %v2107 = vunpack.c.l.b16 %v1645
  %v2108 = vunpack.c.l.b16 %v1646
  %v2109 = vunpack.c.l.b16 %v1647
  %v2110 = vunpack.c.l.b16 %v1648
  %v2111 = vunpack.c.l.b16 %v1649
  %v2112 = vunpack.c.l.b16 %v1650
  %v2113 = vunpack.c.l.b16 %v1651
  %v2114 = vunpack.c.l.b16 %v1652
  %v2115 = vunpack.c.l.b16 %v1653
  %v2116 = vunpack.c.l.b16 %v1654
  %v2117 = vunpack.c.l.b16 %v1655
  %v2118 = vunpack.c.l.b16 %v1656
  %v2119 = vunpack.c.l.b16 %v1657
  %v2120 = vunpack.c.l.b16 %v1658
  %v2121 = vunpack.c.l.b16 %v1659
  %v2122 = vunpack.c.l.b16 %v1660
  %v2123 = vunpack.c.l.b16 %v1661
  %v2124 = vunpack.c.l.b16 %v1662
  %v2125 = vunpack.c.l.b16 %v1663
  %v2126 = vunpack.c.l.b16 %v1664
  %v2127 = vunpack.c.l.b16 %v1665
  %v2128 = vunpack.c.l.b16 %v1666
  %v2129 = vunpack.c.l.b16 %v1667
  %v2130 = vunpack.c.l.b16 %v1668
  %v2131 = vunpack.c.l.b16 %v1669
  %v2132 = vunpack.c.l.b16 %v1670
  %v2133 = vunpack.c.l.b16 %v1671
  %v2134 = vunpack.c.l.b16 %v1672
  %v2135 = vunpack.c.l.b16 %v1673
  %v2136 = vpack.c.b16 %v1929, %v1928
  %v2137 = vpack.c.b16 %v1931, %v1930
  %v2138 = vpack.c.b16 %v1933, %v1932
  %v2139 = vpack.c.b16 %v1935, %v1934
  %v2140 = vpack.c.b16 %v1937, %v1936
  %v2141 = vpack.c.b16 %v1939, %v1938
  %v2142 = vpack.c.b16 %v1941, %v1940
  %v2143 = vpack.c.b16 %v1943, %v1942
  %v2144 = vpack.c.b16 %v1945, %v1944
  %v2145 = vpack.c.b16 %v1947, %v1946
  %v2146 = vpack.c.b16 %v1949, %v1948
  %v2147 = vpack.c.b16 %v1951, %v1950
  %v2148 = vpack.c.b16 %v1953, %v1952
  %v2149 = vpack.c.b16 %v1955, %v1954
  %v2150 = vpack.c.b16 %v1957, %v1956
  %v2151 = vpack.c.b16 %v1959, %v1958
  %v2152 = vpack.c.b16 %v1961, %v1960
  %v2153 = vpack.c.b16 %v1963, %v1962
  %v2154 = vpack.c.b16 %v1965, %v1964
  %v2155 = vpack.c.b16 %v1967, %v1966
  %v2156 = vpack.c.b16 %v1969, %v1968
  %v2157 = vpack.c.b16 %v1971, %v1970
  %v2158 = vpack.c.b16 %v1973, %v1972
  %v2159 = vpack.c.b16 %v1975, %v1974
  %v2160 = vpack.c.b16 %v1977, %v1976
  %v2161 = vpack.c.b16 %v1979, %v1978
  %v2162 = vpack.c.b16 %v1981, %v1980
  %v2163 = vpack.c.b16 %v1983, %v1982
  %v2164 = vpack.c.b16 %v1985, %v1984
  %v2165 = vpack.c.b16 %v1987, %v1986
  %v2166 = vpack.c.b16 %v1989, %v1988
  %v2167 = vpack.c.b16 %v1991, %v1990
  %v2168 = vpack.c.b16 %v1993, %v1992
  %v2169 = vpack.c.b16 %v1995, %v1994
  %v2170 = vpack.c.b16 %v1997, %v1996
  %v2171 = vpack.c.b16 %v1999, %v1998
  %v2172 = vpack.c.b16 %v2001, %v2000
  %v2173 = vpack.c.b16 %v2003, %v2002
  %v2174 = vpack.c.b16 %v2005, %v2004
  %v2175 = vpack.c.b16 %v2007, %v2006
  %v2176 = vpack.c.b16 %v2009, %v2008
  %v2177 = vpack.c.b16 %v2011, %v2010
  %v2178 = vpack.c.b16 %v2013, %v2012
  %v2179 = vpack.c.b16 %v2015, %v2014
  %v2180 = vpack.c.b16 %v2017, %v2016
  %v2181 = vpack.c.b16 %v2019, %v2018
  %v2182 = vpack.c.b16 %v2021, %v2020
  %v2183 = vpack.c.b16 %v2023, %v2022
  %v2184 = vpack.c.b16 %v2025, %v2024
  %v2185 = vpack.c.b16 %v2027, %v2026
  %v2186 = vpack.c.b16 %v2029, %v2028
  %v2187 = vpack.c.b16 %v2031, %v2030
  %v2188 = vpack.c.b16 %v2033, %v2032
  %v2189 = vpack.c.b16 %v2035, %v2034
  %v2190 = vpack.c.b16 %v2037, %v2036
  %v2191 = vpack.c.b16 %v2039, %v2038
  %v2192 = vpack.c.b16 %v2041, %v2040
  %v2193 = vpack.c.b16 %v2043, %v2042
  %v2194 = vpack.c.b16 %v2045, %v2044
  %v2195 = vpack.c.b16 %v2047, %v2046
  %v2196 = vpack.c.b16 %v2049, %v2048
  %v2197 = vpack.c.b16 %v2051, %v2050
  %v2198 = vpack.c.b16 %v2053, %v2052
  %v2199 = vpack.c.b16 %v2055, %v2054
  %v2200 = vpack.c.b16 %v2057, %v2056
  %v2201 = vpack.c.b16 %v2059, %v2058
  %v2202 = vpack.c.b16 %v2061, %v2060
  %v2203 = vpack.c.b16 %v2063, %v2062
  %v2204 = vpack.c.b16 %v2065, %v2064
  %v2205 = vpack.c.b16 %v2067, %v2066
  %v2206 = vpack.c.b16 %v2069, %v2068
  %v2207 = vpack.c.b16 %v2071, %v2070
  %v2208 = vpack.c.b16 %v2073, %v2072
  %v2209 = vpack.c.b16 %v2075, %v2074
  %v2210 = vpack.c.b16 %v2077, %v2076
  %v2211 = vpack.c.b16 %v2079, %v2078
  %v2212 = vpack.c.b16 %v2081, %v2080
  %v2213 = vpack.c.b16 %v2083, %v2082
  %v2214 = vpack.c.b16 %v2085, %v2084
  %v2215 = vpack.c.b16 %v2087, %v2086
  %v2216 = vpack.c.b16 %v2089, %v2088
  %v2217 = vpack.c.b16 %v2091, %v2090
  %v2218 = vpack.c.b16 %v2093, %v2092
  %v2219 = vpack.c.b16 %v2095, %v2094
  %v2220 = vpack.c.b16 %v2097, %v2096
  %v2221 = vpack.c.b16 %v2099, %v2098
  %v2222 = vpack.c.b16 %v2101, %v2100
  %v2223 = vpack.c.b16 %v2103, %v2102
  %v2224 = vpack.c.b16 %v2105, %v2104
  %v2225 = vpack.c.b16 %v2107, %v2106
  %v2226 = vpack.c.b16 %v2109, %v2108
  %v2227 = vpack.c.b16 %v2111, %v2110
  %v2228 = vpack.c.b16 %v2113, %v2112
  %v2229 = vpack.c.b16 %v2115, %v2114
  %v2230 = vpack.c.b16 %v2117, %v2116
  %v2231 = vpack.c.b16 %v2119, %v2118
  %v2232 = vpack.c.b16 %v2121, %v2120
  %v2233 = vpack.c.b16 %v2123, %v2122
  %v2234 = vpack.c.b16 %v2125, %v2124
  %v2235 = vpack.c.b16 %v2127, %v2126
  %v2236 = vpack.c.b16 %v2129, %v2128
  %v2237 = vpack.c.b16 %v2131, %v2130
  %v2238 = vpack.c.b16 %v2133, %v2132
  %v2239 = vpack.c.b16 %v2135, %v2134
  %2344 = vmatprep.subr.bf16.mxu0 0
  %2345 = vmatpush1.bf16.msra.mxu0 %v2136
  %2346 = vmatprep.subr.bf16.mxu0 0
  %2347 = vmatpush1.bf16.msra.mxu0 %v2137
  %2348 = vmatprep.subr.bf16.mxu0 0
  %2349 = vmatpush1.bf16.msra.mxu0 %v2138
  %2350 = vmatprep.subr.bf16.mxu0 0
  %2351 = vmatpush1.bf16.msra.mxu0 %v2139
  %2352 = vmatprep.subr.bf16.mxu0 0
  %2353 = vmatpush1.bf16.msra.mxu0 %v2140
  %2354 = vmatprep.subr.bf16.mxu0 0
  %2355 = vmatpush1.bf16.msra.mxu0 %v2141
  %2356 = vmatprep.subr.bf16.mxu0 0
  %2357 = vmatpush1.bf16.msra.mxu0 %v2142
  %2358 = vmatprep.subr.bf16.mxu0 0
  %2359 = vmatpush1.bf16.msra.mxu0 %v2143
  %2360 = vmatprep.subr.bf16.mxu0 0
  %2361 = vmatpush1.bf16.msra.mxu0 %v2144
  %2362 = vmatprep.subr.bf16.mxu0 0
  %2363 = vmatpush1.bf16.msra.mxu0 %v2145
  %2364 = vmatprep.subr.bf16.mxu0 0
  %2365 = vmatpush1.bf16.msra.mxu0 %v2146
  %2366 = vmatprep.subr.bf16.mxu0 0
  %2367 = vmatpush1.bf16.msra.mxu0 %v2147
  %2368 = vmatprep.subr.bf16.mxu0 0
  %2369 = vmatpush1.bf16.msra.mxu0 %v2148
  %2370 = vmatprep.subr.bf16.mxu0 0
  %2371 = vmatpush1.bf16.msra.mxu0 %v2149
  %2372 = vmatprep.subr.bf16.mxu0 0
  %2373 = vmatpush1.bf16.msra.mxu0 %v2150
  %2374 = vmatprep.subr.bf16.mxu0 0
  %2375 = vmatpush1.bf16.msra.mxu0 %v2151
  %2376 = vmatprep.mubr.bf16.mxu0 %v1695
  %2377 = vmatmul.mubr.bf16.gmra.mrb[0].mxu0 %v1694
  %v2378 = vpop.f32.mrb[0].mxu0
  %v2379 = vadd.f32 0.0, %v2378
  %v2380 = vpop.f32.mrb[0].mxu0
  %v2381 = vpop.f32.mrb[0].mxu0
  %v2382 = vpop.f32.mrb[0].mxu0
  %2383 = vdwg.mxu0
  %2384 = vmatprep.subr.bf16.mxu0 0
  %2385 = vmatpush1.bf16.msra.mxu0 %v2152
  %2386 = vmatprep.subr.bf16.mxu0 0
  %2387 = vmatpush1.bf16.msra.mxu0 %v2153
  %2388 = vmatprep.subr.bf16.mxu0 0
  %2389 = vmatpush1.bf16.msra.mxu0 %v2154
  %2390 = vmatprep.subr.bf16.mxu0 0
  %2391 = vmatpush1.bf16.msra.mxu0 %v2155
  %2392 = vmatprep.subr.bf16.mxu0 0
  %2393 = vmatpush1.bf16.msra.mxu0 %v2156
  %2394 = vmatprep.subr.bf16.mxu0 0
  %2395 = vmatpush1.bf16.msra.mxu0 %v2157
  %2396 = vmatprep.subr.bf16.mxu0 0
  %2397 = vmatpush1.bf16.msra.mxu0 %v2158
  %2398 = vmatprep.subr.bf16.mxu0 0
  %2399 = vmatpush1.bf16.msra.mxu0 %v2159
  %2400 = vmatprep.subr.bf16.mxu0 0
  %2401 = vmatpush1.bf16.msra.mxu0 %v2160
  %2402 = vmatprep.subr.bf16.mxu0 0
  %2403 = vmatpush1.bf16.msra.mxu0 %v2161
  %2404 = vmatprep.subr.bf16.mxu0 0
  %2405 = vmatpush1.bf16.msra.mxu0 %v2162
  %2406 = vmatprep.subr.bf16.mxu0 0
  %2407 = vmatpush1.bf16.msra.mxu0 %v2163
  %2408 = vmatprep.subr.bf16.mxu0 0
  %2409 = vmatpush1.bf16.msra.mxu0 %v2164
  %2410 = vmatprep.subr.bf16.mxu0 0
  %2411 = vmatpush1.bf16.msra.mxu0 %v2165
  %2412 = vmatprep.subr.bf16.mxu0 0
  %2413 = vmatpush1.bf16.msra.mxu0 %v2166
  %2414 = vmatprep.subr.bf16.mxu0 0
  %2415 = vmatpush1.bf16.msra.mxu0 %v2167
  %2416 = vmatprep.mubr.bf16.mxu0 %v1697
  %2417 = vmatmul.mubr.bf16.gmra.mrb[0].mxu0 %v1696
  %v2418 = vpop.f32.mrb[0].mxu0
  %v2419 = vadd.f32 %v2379, %v2418
  %v2420 = vpop.f32.mrb[0].mxu0
  %v2421 = vpop.f32.mrb[0].mxu0
  %v2422 = vpop.f32.mrb[0].mxu0
  %2423 = vdwg.mxu0
  %2424 = vmatprep.subr.bf16.mxu0 0
  %2425 = vmatpush1.bf16.msra.mxu0 %v2168
  %2426 = vmatprep.subr.bf16.mxu0 0
  %2427 = vmatpush1.bf16.msra.mxu0 %v2169
  %2428 = vmatprep.subr.bf16.mxu0 0
  %2429 = vmatpush1.bf16.msra.mxu0 %v2170
  %2430 = vmatprep.subr.bf16.mxu0 0
  %2431 = vmatpush1.bf16.msra.mxu0 %v2171
  %2432 = vmatprep.subr.bf16.mxu0 0
  %2433 = vmatpush1.bf16.msra.mxu0 %v2172
  %2434 = vmatprep.subr.bf16.mxu0 0
  %2435 = vmatpush1.bf16.msra.mxu0 %v2173
  %2436 = vmatprep.subr.bf16.mxu0 0
  %2437 = vmatpush1.bf16.msra.mxu0 %v2174
  %2438 = vmatprep.subr.bf16.mxu0 0
  %2439 = vmatpush1.bf16.msra.mxu0 %v2175
  %2440 = vmatprep.subr.bf16.mxu0 0
  %2441 = vmatpush1.bf16.msra.mxu0 %v2176
  %2442 = vmatprep.subr.bf16.mxu0 0
  %2443 = vmatpush1.bf16.msra.mxu0 %v2177
  %2444 = vmatprep.subr.bf16.mxu0 0
  %2445 = vmatpush1.bf16.msra.mxu0 %v2178
  %2446 = vmatprep.subr.bf16.mxu0 0
  %2447 = vmatpush1.bf16.msra.mxu0 %v2179
  %2448 = vmatprep.subr.bf16.mxu0 0
  %2449 = vmatpush1.bf16.msra.mxu0 %v2180
  %2450 = vmatprep.subr.bf16.mxu0 0
  %2451 = vmatpush1.bf16.msra.mxu0 %v2181
  %2452 = vmatprep.subr.bf16.mxu0 0
  %2453 = vmatpush1.bf16.msra.mxu0 %v2182
  %2454 = vmatprep.subr.bf16.mxu0 0
  %2455 = vmatpush1.bf16.msra.mxu0 %v2183
  %2456 = vmatprep.mubr.bf16.mxu0 %v1699
  %2457 = vmatmul.mubr.bf16.gmra.mrb[0].mxu0 %v1698
  %v2458 = vpop.f32.mrb[0].mxu0
  %v2459 = vadd.f32 %v2419, %v2458
  %v2460 = vpop.f32.mrb[0].mxu0
  %v2461 = vpop.f32.mrb[0].mxu0
  %v2462 = vpop.f32.mrb[0].mxu0
  %2463 = vdwg.mxu0
  %2464 = vmatprep.subr.bf16.mxu0 0
  %2465 = vmatpush1.bf16.msra.mxu0 %v2184
  %2466 = vmatprep.subr.bf16.mxu0 0
  %2467 = vmatpush1.bf16.msra.mxu0 %v2185
  %2468 = vmatprep.subr.bf16.mxu0 0
  %2469 = vmatpush1.bf16.msra.mxu0 %v2186
  %2470 = vmatprep.subr.bf16.mxu0 0
  %2471 = vmatpush1.bf16.msra.mxu0 %v2187
  %2472 = vmatprep.subr.bf16.mxu0 0
  %2473 = vmatpush1.bf16.msra.mxu0 %v2188
  %2474 = vmatprep.subr.bf16.mxu0 0
  %2475 = vmatpush1.bf16.msra.mxu0 %v2189
  %2476 = vmatprep.subr.bf16.mxu0 0
  %2477 = vmatpush1.bf16.msra.mxu0 %v2190
  %2478 = vmatprep.subr.bf16.mxu0 0
  %2479 = vmatpush1.bf16.msra.mxu0 %v2191
  %2480 = vmatprep.subr.bf16.mxu0 0
  %2481 = vmatpush1.bf16.msra.mxu0 %v2192
  %2482 = vmatprep.subr.bf16.mxu0 0
  %2483 = vmatpush1.bf16.msra.mxu0 %v2193
  %2484 = vmatprep.subr.bf16.mxu0 0
  %2485 = vmatpush1.bf16.msra.mxu0 %v2194
  %2486 = vmatprep.subr.bf16.mxu0 0
  %2487 = vmatpush1.bf16.msra.mxu0 %v2195
  %2488 = vmatprep.subr.bf16.mxu0 0
  %2489 = vmatpush1.bf16.msra.mxu0 %v2196
  %2490 = vmatprep.subr.bf16.mxu0 0
  %2491 = vmatpush1.bf16.msra.mxu0 %v2197
  %2492 = vmatprep.subr.bf16.mxu0 0
  %2493 = vmatpush1.bf16.msra.mxu0 %v2198
  %2494 = vmatprep.subr.bf16.mxu0 0
  %2495 = vmatpush1.bf16.msra.mxu0 %v2199
  %2496 = vmatprep.mubr.bf16.mxu0 %v1701
  %2497 = vmatmul.mubr.bf16.gmra.mrb[0].mxu0 %v1700
  %v2498 = vpop.f32.mrb[0].mxu0
  %v2499 = vadd.f32 %v2459, %v2498
  %v2500 = vpop.f32.mrb[0].mxu0
  %v2501 = vpop.f32.mrb[0].mxu0
  %v2502 = vpop.f32.mrb[0].mxu0
  %2503 = vdwg.mxu0
  %2504 = vmatprep.subr.bf16.mxu0 0
  %2505 = vmatpush1.bf16.msra.mxu0 %v2200
  %2506 = vmatprep.subr.bf16.mxu0 0
  %2507 = vmatpush1.bf16.msra.mxu0 %v2201
  %2508 = vmatprep.subr.bf16.mxu0 0
  %2509 = vmatpush1.bf16.msra.mxu0 %v2202
  %2510 = vmatprep.subr.bf16.mxu0 0
  %2511 = vmatpush1.bf16.msra.mxu0 %v2203
  %2512 = vmatprep.subr.bf16.mxu0 0
  %2513 = vmatpush1.bf16.msra.mxu0 %v2204
  %2514 = vmatprep.subr.bf16.mxu0 0
  %2515 = vmatpush1.bf16.msra.mxu0 %v2205
  %2516 = vmatprep.subr.bf16.mxu0 0
  %2517 = vmatpush1.bf16.msra.mxu0 %v2206
  %2518 = vmatprep.subr.bf16.mxu0 0
  %2519 = vmatpush1.bf16.msra.mxu0 %v2207
  %2520 = vmatprep.subr.bf16.mxu0 0
  %2521 = vmatpush1.bf16.msra.mxu0 %v2208
  %2522 = vmatprep.subr.bf16.mxu0 0
  %2523 = vmatpush1.bf16.msra.mxu0 %v2209
  %2524 = vmatprep.subr.bf16.mxu0 0
  %2525 = vmatpush1.bf16.msra.mxu0 %v2210
  %2526 = vmatprep.subr.bf16.mxu0 0
  %2527 = vmatpush1.bf16.msra.mxu0 %v2211
  %2528 = vmatprep.subr.bf16.mxu0 0
  %2529 = vmatpush1.bf16.msra.mxu0 %v2212
  %2530 = vmatprep.subr.bf16.mxu0 0
  %2531 = vmatpush1.bf16.msra.mxu0 %v2213
  %2532 = vmatprep.subr.bf16.mxu0 0
  %2533 = vmatpush1.bf16.msra.mxu0 %v2214
  %2534 = vmatprep.subr.bf16.mxu0 0
  %2535 = vmatpush1.bf16.msra.mxu0 %v2215
  %2536 = vmatprep.mubr.bf16.mxu0 %v1703
  %2537 = vmatmul.mubr.bf16.gmra.mrb[0].mxu0 %v1702
  %v2538 = vpop.f32.mrb[0].mxu0
  %v2539 = vadd.f32 %v2499, %v2538
  %v2540 = vpop.f32.mrb[0].mxu0
  %v2541 = vpop.f32.mrb[0].mxu0
  %v2542 = vpop.f32.mrb[0].mxu0
  %2543 = vdwg.mxu0
  %2544 = vmatprep.subr.bf16.mxu0 0
  %2545 = vmatpush1.bf16.msra.mxu0 %v2216
  %2546 = vmatprep.subr.bf16.mxu0 0
  %2547 = vmatpush1.bf16.msra.mxu0 %v2217
  %2548 = vmatprep.subr.bf16.mxu0 0
  %2549 = vmatpush1.bf16.msra.mxu0 %v2218
  %2550 = vmatprep.subr.bf16.mxu0 0
  %2551 = vmatpush1.bf16.msra.mxu0 %v2219
  %2552 = vmatprep.subr.bf16.mxu0 0
  %2553 = vmatpush1.bf16.msra.mxu0 %v2220
  %2554 = vmatprep.subr.bf16.mxu0 0
  %2555 = vmatpush1.bf16.msra.mxu0 %v2221
  %2556 = vmatprep.subr.bf16.mxu0 0
  %2557 = vmatpush1.bf16.msra.mxu0 %v2222
  %2558 = vmatprep.subr.bf16.mxu0 0
  %2559 = vmatpush1.bf16.msra.mxu0 %v2223
  %2560 = vmatprep.subr.bf16.mxu0 0
  %2561 = vmatpush1.bf16.msra.mxu0 %v2224
  %2562 = vmatprep.subr.bf16.mxu0 0
  %2563 = vmatpush1.bf16.msra.mxu0 %v2225
  %2564 = vmatprep.subr.bf16.mxu0 0
  %2565 = vmatpush1.bf16.msra.mxu0 %v2226
  %2566 = vmatprep.subr.bf16.mxu0 0
  %2567 = vmatpush1.bf16.msra.mxu0 %v2227
  %2568 = vmatprep.subr.bf16.mxu0 0
  %2569 = vmatpush1.bf16.msra.mxu0 %v2228
  %2570 = vmatprep.subr.bf16.mxu0 0
  %2571 = vmatpush1.bf16.msra.mxu0 %v2229
  %2572 = vmatprep.subr.bf16.mxu0 0
  %2573 = vmatpush1.bf16.msra.mxu0 %v2230
  %2574 = vmatprep.subr.bf16.mxu0 0
  %2575 = vmatpush1.bf16.msra.mxu0 %v2231
  %2576 = vmatprep.mubr.bf16.mxu0 %v1705
  %2577 = vmatmul.mubr.bf16.gmra.mrb[0].mxu0 %v1704
  %v2578 = vpop.f32.mrb[0].mxu0
  %v2579 = vadd.f32 %v2539, %v2578
  %v2580 = vpop.f32.mrb[0].mxu0
  %v2581 = vpop.f32.mrb[0].mxu0
  %v2582 = vpop.f32.mrb[0].mxu0
  %2583 = vdwg.mxu0
  %2584 = vmatprep.subr.bf16.mxu0 0
  %2585 = vmatpush1.bf16.msra.mxu0 %v2232
  %2586 = vmatprep.subr.bf16.mxu0 0
  %2587 = vmatpush1.bf16.msra.mxu0 %v2233
  %2588 = vmatprep.subr.bf16.mxu0 0
  %2589 = vmatpush1.bf16.msra.mxu0 %v2234
  %2590 = vmatprep.subr.bf16.mxu0 0
  %2591 = vmatpush1.bf16.msra.mxu0 %v2235
  %2592 = vmatprep.subr.bf16.mxu0 0
  %2593 = vmatpush1.bf16.msra.mxu0 %v2236
  %2594 = vmatprep.subr.bf16.mxu0 0
  %2595 = vmatpush1.bf16.msra.mxu0 %v2237
  %2596 = vmatprep.subr.bf16.mxu0 0
  %2597 = vmatpush1.bf16.msra.mxu0 %v2238
  %2598 = vmatprep.subr.bf16.mxu0 0
  %2599 = vmatpush1.bf16.msra.mxu0 %v2239
  %2600 = vmatprep.subr.bf16.mxu0 0
  %2601 = vmatpush1.bf16.msra.mxu0 0
  %2602 = vmatprep.subr.bf16.mxu0 0
  %2603 = vmatpush1.bf16.msra.mxu0 0
  %2604 = vmatprep.subr.bf16.mxu0 0
  %2605 = vmatpush1.bf16.msra.mxu0 0
  %2606 = vmatprep.subr.bf16.mxu0 0
  %2607 = vmatpush1.bf16.msra.mxu0 0
  %2608 = vmatprep.subr.bf16.mxu0 0
  %2609 = vmatpush1.bf16.msra.mxu0 0
  %2610 = vmatprep.subr.bf16.mxu0 0
  %2611 = vmatpush1.bf16.msra.mxu0 0
  %2612 = vmatprep.subr.bf16.mxu0 0
  %2613 = vmatpush1.bf16.msra.mxu0 0
  %2614 = vmatprep.subr.bf16.mxu0 0
  %2615 = vmatpush1.bf16.msra.mxu0 0
  %2616 = vmatprep.mubr.bf16.mxu0 0
  %2617 = vmatmul.mubr.bf16.gmra.mrb[0].mxu0 %v1706
  %v2618 = vpop.f32.mrb[0].mxu0
  %v2619 = vadd.f32 %v2579, %v2618
  %v2620 = vpop.f32.mrb[0].mxu0
  %v2621 = vpop.f32.mrb[0].mxu0
  %v2622 = vpop.f32.mrb[0].mxu0
  %2623 = vdwg.mxu0
  %v2632 = vunpack.c.l.b16 %v36
  %v2633 = vunpack.c.h.b16 %v36
  %v2634 = vunpack.c.l.b16 %v37
  %v2635 = vunpack.c.h.b16 %v37
  %v2636 = vunpack.c.l.b16 %v38
  %v2637 = vunpack.c.h.b16 %v38
  %v2638 = vunpack.c.l.b16 %v39
  %v2639 = vunpack.c.h.b16 %v39
  %v2640 = vunpack.c.l.b16 %v40
  %v2641 = vunpack.c.h.b16 %v40
  %v2642 = vunpack.c.l.b16 %v41
  %v2643 = vunpack.c.h.b16 %v41
  %v2644 = vunpack.c.l.b16 %v42
  %v2645 = vunpack.c.h.b16 %v42
  %v2646 = vunpack.c.l.b16 %v43
  %v2647 = vunpack.c.h.b16 %v43
  %v2648 = vpack.c.b16 %v2632, %v2632
  %v2649 = vpack.c.b16 %v2633, %v2633
  %v2650 = vpack.c.b16 %v2634, %v2634
  %v2651 = vpack.c.b16 %v2635, %v2635
  %v2652 = vpack.c.b16 %v2636, %v2636
  %v2653 = vpack.c.b16 %v2637, %v2637
  %v2654 = vpack.c.b16 %v2638, %v2638
  %v2655 = vpack.c.b16 %v2639, %v2639
  %v2656 = vpack.c.b16 %v2640, %v2640
  %v2657 = vpack.c.b16 %v2641, %v2641
  %v2658 = vpack.c.b16 %v2642, %v2642
  %v2659 = vpack.c.b16 %v2643, %v2643
  %v2660 = vpack.c.b16 %v2644, %v2644
  %v2661 = vpack.c.b16 %v2645, %v2645
  %v2662 = vpack.c.b16 %v2646, %v2646
  %v2663 = vpack.c.b16 %v2647, %v2647
  %2680 = vmatprep.subr.bf16.mxu0 0
  %2681 = vmatpush1.bf16.msra.mxu0 1065369472
  %2682 = vmatprep.subr.bf16.mxu0 0
  %2683 = vmatpush1.bf16.msra.mxu0 1065369472
  %2684 = vmatprep.subr.bf16.mxu0 0
  %2685 = vmatpush1.bf16.msra.mxu0 1065369472
  %2686 = vmatprep.subr.bf16.mxu0 0
  %2687 = vmatpush1.bf16.msra.mxu0 1065369472
  %2688 = vmatprep.subr.bf16.mxu0 0
  %2689 = vmatpush1.bf16.msra.mxu0 1065369472
  %2690 = vmatprep.subr.bf16.mxu0 0
  %2691 = vmatpush1.bf16.msra.mxu0 1065369472
  %2692 = vmatprep.subr.bf16.mxu0 0
  %2693 = vmatpush1.bf16.msra.mxu0 1065369472
  %2694 = vmatprep.subr.bf16.mxu0 0
  %2695 = vmatpush1.bf16.msra.mxu0 1065369472
  %2696 = vmatprep.subr.bf16.mxu0 0
  %2697 = vmatpush1.bf16.msra.mxu0 1065369472
  %2698 = vmatprep.subr.bf16.mxu0 0
  %2699 = vmatpush1.bf16.msra.mxu0 1065369472
  %2700 = vmatprep.subr.bf16.mxu0 0
  %2701 = vmatpush1.bf16.msra.mxu0 1065369472
  %2702 = vmatprep.subr.bf16.mxu0 0
  %2703 = vmatpush1.bf16.msra.mxu0 1065369472
  %2704 = vmatprep.subr.bf16.mxu0 0
  %2705 = vmatpush1.bf16.msra.mxu0 1065369472
  %2706 = vmatprep.subr.bf16.mxu0 0
  %2707 = vmatpush1.bf16.msra.mxu0 1065369472
  %2708 = vmatprep.subr.bf16.mxu0 0
  %2709 = vmatpush1.bf16.msra.mxu0 1065369472
  %2710 = vmatprep.subr.bf16.mxu0 0
  %2711 = vmatpush1.bf16.msra.mxu0 1065369472
  %2712 = vmatprep.mubr.bf16.mxu0 %v2649
  %2713 = vmatmul.mubr.bf16.gmra.mrb[0].mxu0 %v2648
  %v2714 = vpop.f32.mrb[0].mxu0
  %v2715 = vadd.f32 0.0, %v2714
  %v2716 = vpop.f32.mrb[0].mxu0
  %v2717 = vpop.f32.mrb[0].mxu0
  %v2718 = vpop.f32.mrb[0].mxu0
  %2719 = vdwg.mxu0
  %2720 = vmatprep.subr.bf16.mxu0 0
  %2721 = vmatpush1.bf16.msra.mxu0 1065369472
  %2722 = vmatprep.subr.bf16.mxu0 0
  %2723 = vmatpush1.bf16.msra.mxu0 1065369472
  %2724 = vmatprep.subr.bf16.mxu0 0
  %2725 = vmatpush1.bf16.msra.mxu0 1065369472
  %2726 = vmatprep.subr.bf16.mxu0 0
  %2727 = vmatpush1.bf16.msra.mxu0 1065369472
  %2728 = vmatprep.subr.bf16.mxu0 0
  %2729 = vmatpush1.bf16.msra.mxu0 1065369472
  %2730 = vmatprep.subr.bf16.mxu0 0
  %2731 = vmatpush1.bf16.msra.mxu0 1065369472
  %2732 = vmatprep.subr.bf16.mxu0 0
  %2733 = vmatpush1.bf16.msra.mxu0 1065369472
  %2734 = vmatprep.subr.bf16.mxu0 0
  %2735 = vmatpush1.bf16.msra.mxu0 1065369472
  %2736 = vmatprep.subr.bf16.mxu0 0
  %2737 = vmatpush1.bf16.msra.mxu0 1065369472
  %2738 = vmatprep.subr.bf16.mxu0 0
  %2739 = vmatpush1.bf16.msra.mxu0 1065369472
  %2740 = vmatprep.subr.bf16.mxu0 0
  %2741 = vmatpush1.bf16.msra.mxu0 1065369472
  %2742 = vmatprep.subr.bf16.mxu0 0
  %2743 = vmatpush1.bf16.msra.mxu0 1065369472
  %2744 = vmatprep.subr.bf16.mxu0 0
  %2745 = vmatpush1.bf16.msra.mxu0 1065369472
  %2746 = vmatprep.subr.bf16.mxu0 0
  %2747 = vmatpush1.bf16.msra.mxu0 1065369472
  %2748 = vmatprep.subr.bf16.mxu0 0
  %2749 = vmatpush1.bf16.msra.mxu0 1065369472
  %2750 = vmatprep.subr.bf16.mxu0 0
  %2751 = vmatpush1.bf16.msra.mxu0 1065369472
  %2752 = vmatprep.mubr.bf16.mxu0 %v2651
  %2753 = vmatmul.mubr.bf16.gmra.mrb[0].mxu0 %v2650
  %v2754 = vpop.f32.mrb[0].mxu0
  %v2755 = vadd.f32 %v2715, %v2754
  %v2756 = vpop.f32.mrb[0].mxu0
  %v2757 = vpop.f32.mrb[0].mxu0
  %v2758 = vpop.f32.mrb[0].mxu0
  %2759 = vdwg.mxu0
  %2760 = vmatprep.subr.bf16.mxu0 0
  %2761 = vmatpush1.bf16.msra.mxu0 1065369472
  %2762 = vmatprep.subr.bf16.mxu0 0
  %2763 = vmatpush1.bf16.msra.mxu0 1065369472
  %2764 = vmatprep.subr.bf16.mxu0 0
  %2765 = vmatpush1.bf16.msra.mxu0 1065369472
  %2766 = vmatprep.subr.bf16.mxu0 0
  %2767 = vmatpush1.bf16.msra.mxu0 1065369472
  %2768 = vmatprep.subr.bf16.mxu0 0
  %2769 = vmatpush1.bf16.msra.mxu0 1065369472
  %2770 = vmatprep.subr.bf16.mxu0 0
  %2771 = vmatpush1.bf16.msra.mxu0 1065369472
  %2772 = vmatprep.subr.bf16.mxu0 0
  %2773 = vmatpush1.bf16.msra.mxu0 1065369472
  %2774 = vmatprep.subr.bf16.mxu0 0
  %2775 = vmatpush1.bf16.msra.mxu0 1065369472
  %2776 = vmatprep.subr.bf16.mxu0 0
  %2777 = vmatpush1.bf16.msra.mxu0 1065369472
  %2778 = vmatprep.subr.bf16.mxu0 0
  %2779 = vmatpush1.bf16.msra.mxu0 1065369472
  %2780 = vmatprep.subr.bf16.mxu0 0
  %2781 = vmatpush1.bf16.msra.mxu0 1065369472
  %2782 = vmatprep.subr.bf16.mxu0 0
  %2783 = vmatpush1.bf16.msra.mxu0 1065369472
  %2784 = vmatprep.subr.bf16.mxu0 0
  %2785 = vmatpush1.bf16.msra.mxu0 1065369472
  %2786 = vmatprep.subr.bf16.mxu0 0
  %2787 = vmatpush1.bf16.msra.mxu0 1065369472
  %2788 = vmatprep.subr.bf16.mxu0 0
  %2789 = vmatpush1.bf16.msra.mxu0 1065369472
  %2790 = vmatprep.subr.bf16.mxu0 0
  %2791 = vmatpush1.bf16.msra.mxu0 1065369472
  %2792 = vmatprep.mubr.bf16.mxu0 %v2653
  %2793 = vmatmul.mubr.bf16.gmra.mrb[0].mxu0 %v2652
  %v2794 = vpop.f32.mrb[0].mxu0
  %v2795 = vadd.f32 %v2755, %v2794
  %v2796 = vpop.f32.mrb[0].mxu0
  %v2797 = vpop.f32.mrb[0].mxu0
  %v2798 = vpop.f32.mrb[0].mxu0
  %2799 = vdwg.mxu0
  %2800 = vmatprep.subr.bf16.mxu0 0
  %2801 = vmatpush1.bf16.msra.mxu0 1065369472
  %2802 = vmatprep.subr.bf16.mxu0 0
  %2803 = vmatpush1.bf16.msra.mxu0 1065369472
  %2804 = vmatprep.subr.bf16.mxu0 0
  %2805 = vmatpush1.bf16.msra.mxu0 1065369472
  %2806 = vmatprep.subr.bf16.mxu0 0
  %2807 = vmatpush1.bf16.msra.mxu0 1065369472
  %2808 = vmatprep.subr.bf16.mxu0 0
  %2809 = vmatpush1.bf16.msra.mxu0 1065369472
  %2810 = vmatprep.subr.bf16.mxu0 0
  %2811 = vmatpush1.bf16.msra.mxu0 1065369472
  %2812 = vmatprep.subr.bf16.mxu0 0
  %2813 = vmatpush1.bf16.msra.mxu0 1065369472
  %2814 = vmatprep.subr.bf16.mxu0 0
  %2815 = vmatpush1.bf16.msra.mxu0 1065369472
  %2816 = vmatprep.subr.bf16.mxu0 0
  %2817 = vmatpush1.bf16.msra.mxu0 1065369472
  %2818 = vmatprep.subr.bf16.mxu0 0
  %2819 = vmatpush1.bf16.msra.mxu0 1065369472
  %2820 = vmatprep.subr.bf16.mxu0 0
  %2821 = vmatpush1.bf16.msra.mxu0 1065369472
  %2822 = vmatprep.subr.bf16.mxu0 0
  %2823 = vmatpush1.bf16.msra.mxu0 1065369472
  %2824 = vmatprep.subr.bf16.mxu0 0
  %2825 = vmatpush1.bf16.msra.mxu0 1065369472
  %2826 = vmatprep.subr.bf16.mxu0 0
  %2827 = vmatpush1.bf16.msra.mxu0 1065369472
  %2828 = vmatprep.subr.bf16.mxu0 0
  %2829 = vmatpush1.bf16.msra.mxu0 1065369472
  %2830 = vmatprep.subr.bf16.mxu0 0
  %2831 = vmatpush1.bf16.msra.mxu0 1065369472
  %2832 = vmatprep.mubr.bf16.mxu0 %v2655
  %2833 = vmatmul.mubr.bf16.gmra.mrb[0].mxu0 %v2654
  %v2834 = vpop.f32.mrb[0].mxu0
  %v2835 = vadd.f32 %v2795, %v2834
  %v2836 = vpop.f32.mrb[0].mxu0
  %v2837 = vpop.f32.mrb[0].mxu0
  %v2838 = vpop.f32.mrb[0].mxu0
  %2839 = vdwg.mxu0
  %2840 = vmatprep.subr.bf16.mxu0 0
  %2841 = vmatpush1.bf16.msra.mxu0 1065369472
  %2842 = vmatprep.subr.bf16.mxu0 0
  %2843 = vmatpush1.bf16.msra.mxu0 1065369472
  %2844 = vmatprep.subr.bf16.mxu0 0
  %2845 = vmatpush1.bf16.msra.mxu0 1065369472
  %2846 = vmatprep.subr.bf16.mxu0 0
  %2847 = vmatpush1.bf16.msra.mxu0 1065369472
  %2848 = vmatprep.subr.bf16.mxu0 0
  %2849 = vmatpush1.bf16.msra.mxu0 1065369472
  %2850 = vmatprep.subr.bf16.mxu0 0
  %2851 = vmatpush1.bf16.msra.mxu0 1065369472
  %2852 = vmatprep.subr.bf16.mxu0 0
  %2853 = vmatpush1.bf16.msra.mxu0 1065369472
  %2854 = vmatprep.subr.bf16.mxu0 0
  %2855 = vmatpush1.bf16.msra.mxu0 1065369472
  %2856 = vmatprep.subr.bf16.mxu0 0
  %2857 = vmatpush1.bf16.msra.mxu0 1065369472
  %2858 = vmatprep.subr.bf16.mxu0 0
  %2859 = vmatpush1.bf16.msra.mxu0 1065369472
  %2860 = vmatprep.subr.bf16.mxu0 0
  %2861 = vmatpush1.bf16.msra.mxu0 1065369472
  %2862 = vmatprep.subr.bf16.mxu0 0
  %2863 = vmatpush1.bf16.msra.mxu0 1065369472
  %2864 = vmatprep.subr.bf16.mxu0 0
  %2865 = vmatpush1.bf16.msra.mxu0 1065369472
  %2866 = vmatprep.subr.bf16.mxu0 0
  %2867 = vmatpush1.bf16.msra.mxu0 1065369472
  %2868 = vmatprep.subr.bf16.mxu0 0
  %2869 = vmatpush1.bf16.msra.mxu0 1065369472
  %2870 = vmatprep.subr.bf16.mxu0 0
  %2871 = vmatpush1.bf16.msra.mxu0 1065369472
  %2872 = vmatprep.mubr.bf16.mxu0 %v2657
  %2873 = vmatmul.mubr.bf16.gmra.mrb[0].mxu0 %v2656
  %v2874 = vpop.f32.mrb[0].mxu0
  %v2875 = vadd.f32 %v2835, %v2874
  %v2876 = vpop.f32.mrb[0].mxu0
  %v2877 = vpop.f32.mrb[0].mxu0
  %v2878 = vpop.f32.mrb[0].mxu0
  %2879 = vdwg.mxu0
  %2880 = vmatprep.subr.bf16.mxu0 0
  %2881 = vmatpush1.bf16.msra.mxu0 1065369472
  %2882 = vmatprep.subr.bf16.mxu0 0
  %2883 = vmatpush1.bf16.msra.mxu0 1065369472
  %2884 = vmatprep.subr.bf16.mxu0 0
  %2885 = vmatpush1.bf16.msra.mxu0 1065369472
  %2886 = vmatprep.subr.bf16.mxu0 0
  %2887 = vmatpush1.bf16.msra.mxu0 1065369472
  %2888 = vmatprep.subr.bf16.mxu0 0
  %2889 = vmatpush1.bf16.msra.mxu0 1065369472
  %2890 = vmatprep.subr.bf16.mxu0 0
  %2891 = vmatpush1.bf16.msra.mxu0 1065369472
  %2892 = vmatprep.subr.bf16.mxu0 0
  %2893 = vmatpush1.bf16.msra.mxu0 1065369472
  %2894 = vmatprep.subr.bf16.mxu0 0
  %2895 = vmatpush1.bf16.msra.mxu0 1065369472
  %2896 = vmatprep.subr.bf16.mxu0 0
  %2897 = vmatpush1.bf16.msra.mxu0 1065369472
  %2898 = vmatprep.subr.bf16.mxu0 0
  %2899 = vmatpush1.bf16.msra.mxu0 1065369472
  %2900 = vmatprep.subr.bf16.mxu0 0
  %2901 = vmatpush1.bf16.msra.mxu0 1065369472
  %2902 = vmatprep.subr.bf16.mxu0 0
  %2903 = vmatpush1.bf16.msra.mxu0 1065369472
  %2904 = vmatprep.subr.bf16.mxu0 0
  %2905 = vmatpush1.bf16.msra.mxu0 1065369472
  %2906 = vmatprep.subr.bf16.mxu0 0
  %2907 = vmatpush1.bf16.msra.mxu0 1065369472
  %2908 = vmatprep.subr.bf16.mxu0 0
  %2909 = vmatpush1.bf16.msra.mxu0 1065369472
  %2910 = vmatprep.subr.bf16.mxu0 0
  %2911 = vmatpush1.bf16.msra.mxu0 1065369472
  %2912 = vmatprep.mubr.bf16.mxu0 %v2659
  %2913 = vmatmul.mubr.bf16.gmra.mrb[0].mxu0 %v2658
  %v2914 = vpop.f32.mrb[0].mxu0
  %v2915 = vadd.f32 %v2875, %v2914
  %v2916 = vpop.f32.mrb[0].mxu0
  %v2917 = vpop.f32.mrb[0].mxu0
  %v2918 = vpop.f32.mrb[0].mxu0
  %2919 = vdwg.mxu0
  %2920 = vmatprep.subr.bf16.mxu0 0
  %2921 = vmatpush1.bf16.msra.mxu0 1065369472
  %2922 = vmatprep.subr.bf16.mxu0 0
  %2923 = vmatpush1.bf16.msra.mxu0 1065369472
  %2924 = vmatprep.subr.bf16.mxu0 0
  %2925 = vmatpush1.bf16.msra.mxu0 1065369472
  %2926 = vmatprep.subr.bf16.mxu0 0
  %2927 = vmatpush1.bf16.msra.mxu0 1065369472
  %2928 = vmatprep.subr.bf16.mxu0 0
  %2929 = vmatpush1.bf16.msra.mxu0 1065369472
  %2930 = vmatprep.subr.bf16.mxu0 0
  %2931 = vmatpush1.bf16.msra.mxu0 1065369472
  %2932 = vmatprep.subr.bf16.mxu0 0
  %2933 = vmatpush1.bf16.msra.mxu0 1065369472
  %2934 = vmatprep.subr.bf16.mxu0 0
  %2935 = vmatpush1.bf16.msra.mxu0 1065369472
  %2936 = vmatprep.subr.bf16.mxu0 0
  %2937 = vmatpush1.bf16.msra.mxu0 1065369472
  %2938 = vmatprep.subr.bf16.mxu0 0
  %2939 = vmatpush1.bf16.msra.mxu0 1065369472
  %2940 = vmatprep.subr.bf16.mxu0 0
  %2941 = vmatpush1.bf16.msra.mxu0 1065369472
  %2942 = vmatprep.subr.bf16.mxu0 0
  %2943 = vmatpush1.bf16.msra.mxu0 1065369472
  %2944 = vmatprep.subr.bf16.mxu0 0
  %2945 = vmatpush1.bf16.msra.mxu0 1065369472
  %2946 = vmatprep.subr.bf16.mxu0 0
  %2947 = vmatpush1.bf16.msra.mxu0 1065369472
  %2948 = vmatprep.subr.bf16.mxu0 0
  %2949 = vmatpush1.bf16.msra.mxu0 1065369472
  %2950 = vmatprep.subr.bf16.mxu0 0
  %2951 = vmatpush1.bf16.msra.mxu0 1065369472
  %2952 = vmatprep.mubr.bf16.mxu0 %v2661
  %2953 = vmatmul.mubr.bf16.gmra.mrb[0].mxu0 %v2660
  %v2954 = vpop.f32.mrb[0].mxu0
  %v2955 = vadd.f32 %v2915, %v2954
  %v2956 = vpop.f32.mrb[0].mxu0
  %v2957 = vpop.f32.mrb[0].mxu0
  %v2958 = vpop.f32.mrb[0].mxu0
  %2959 = vdwg.mxu0
  %2960 = vmatprep.subr.bf16.mxu0 0
  %2961 = vmatpush1.bf16.msra.mxu0 1065369472
  %2962 = vmatprep.subr.bf16.mxu0 0
  %2963 = vmatpush1.bf16.msra.mxu0 1065369472
  %2964 = vmatprep.subr.bf16.mxu0 0
  %2965 = vmatpush1.bf16.msra.mxu0 1065369472
  %2966 = vmatprep.subr.bf16.mxu0 0
  %2967 = vmatpush1.bf16.msra.mxu0 1065369472
  %2968 = vmatprep.subr.bf16.mxu0 0
  %2969 = vmatpush1.bf16.msra.mxu0 1065369472
  %2970 = vmatprep.subr.bf16.mxu0 0
  %2971 = vmatpush1.bf16.msra.mxu0 1065369472
  %2972 = vmatprep.subr.bf16.mxu0 0
  %2973 = vmatpush1.bf16.msra.mxu0 1065369472
  %2974 = vmatprep.subr.bf16.mxu0 0
  %2975 = vmatpush1.bf16.msra.mxu0 1065369472
  %2976 = vmatprep.subr.bf16.mxu0 0
  %2977 = vmatpush1.bf16.msra.mxu0 1065369472
  %2978 = vmatprep.subr.bf16.mxu0 0
  %2979 = vmatpush1.bf16.msra.mxu0 1065369472
  %2980 = vmatprep.subr.bf16.mxu0 0
  %2981 = vmatpush1.bf16.msra.mxu0 1065369472
  %2982 = vmatprep.subr.bf16.mxu0 0
  %2983 = vmatpush1.bf16.msra.mxu0 1065369472
  %2984 = vmatprep.subr.bf16.mxu0 0
  %2985 = vmatpush1.bf16.msra.mxu0 1065369472
  %2986 = vmatprep.subr.bf16.mxu0 0
  %2987 = vmatpush1.bf16.msra.mxu0 1065369472
  %2988 = vmatprep.subr.bf16.mxu0 0
  %2989 = vmatpush1.bf16.msra.mxu0 1065369472
  %2990 = vmatprep.subr.bf16.mxu0 0
  %2991 = vmatpush1.bf16.msra.mxu0 1065369472
  %2992 = vmatprep.mubr.bf16.mxu0 %v2663
  %2993 = vmatmul.mubr.bf16.gmra.mrb[0].mxu0 %v2662
  %v2994 = vpop.f32.mrb[0].mxu0
  %v2995 = vadd.f32 %v2955, %v2994
  %v2996 = vpop.f32.mrb[0].mxu0
  %v2997 = vpop.f32.mrb[0].mxu0
  %v2998 = vpop.f32.mrb[0].mxu0
  %2999 = vdwg.mxu0
  %v3007 = vunpack.c.l.b16 %v44
  %v3008 = vunpack.c.h.b16 %v44
  %v3009 = vunpack.c.l.b16 %v45
  %v3010 = vunpack.c.h.b16 %v45
  %v3011 = vunpack.c.l.b16 %v46
  %v3012 = vunpack.c.h.b16 %v46
  %v3013 = vunpack.c.l.b16 %v47
  %v3014 = vunpack.c.h.b16 %v47
  %v3015 = vunpack.c.l.b16 %v48
  %v3016 = vunpack.c.h.b16 %v48
  %v3017 = vunpack.c.l.b16 %v49
  %v3018 = vunpack.c.h.b16 %v49
  %v3019 = vunpack.c.l.b16 %v50
  %v3020 = vpack.c.b16 %v3007, %v3007
  %v3021 = vpack.c.b16 %v3008, %v3008
  %v3022 = vpack.c.b16 %v3009, %v3009
  %v3023 = vpack.c.b16 %v3010, %v3010
  %v3024 = vpack.c.b16 %v3011, %v3011
  %v3025 = vpack.c.b16 %v3012, %v3012
  %v3026 = vpack.c.b16 %v3013, %v3013
  %v3027 = vpack.c.b16 %v3014, %v3014
  %v3028 = vpack.c.b16 %v3015, %v3015
  %v3029 = vpack.c.b16 %v3016, %v3016
  %v3030 = vpack.c.b16 %v3017, %v3017
  %v3031 = vpack.c.b16 %v3018, %v3018
  %v3032 = vpack.c.b16 %v3019, %v3019
  %3046 = vmatprep.subr.bf16.mxu0 0
  %3047 = vmatpush1.bf16.msra.mxu0 1065369472
  %3048 = vmatprep.subr.bf16.mxu0 0
  %3049 = vmatpush1.bf16.msra.mxu0 1065369472
  %3050 = vmatprep.subr.bf16.mxu0 0
  %3051 = vmatpush1.bf16.msra.mxu0 1065369472
  %3052 = vmatprep.subr.bf16.mxu0 0
  %3053 = vmatpush1.bf16.msra.mxu0 1065369472
  %3054 = vmatprep.subr.bf16.mxu0 0
  %3055 = vmatpush1.bf16.msra.mxu0 1065369472
  %3056 = vmatprep.subr.bf16.mxu0 0
  %3057 = vmatpush1.bf16.msra.mxu0 1065369472
  %3058 = vmatprep.subr.bf16.mxu0 0
  %3059 = vmatpush1.bf16.msra.mxu0 1065369472
  %3060 = vmatprep.subr.bf16.mxu0 0
  %3061 = vmatpush1.bf16.msra.mxu0 1065369472
  %3062 = vmatprep.subr.bf16.mxu0 0
  %3063 = vmatpush1.bf16.msra.mxu0 1065369472
  %3064 = vmatprep.subr.bf16.mxu0 0
  %3065 = vmatpush1.bf16.msra.mxu0 1065369472
  %3066 = vmatprep.subr.bf16.mxu0 0
  %3067 = vmatpush1.bf16.msra.mxu0 1065369472
  %3068 = vmatprep.subr.bf16.mxu0 0
  %3069 = vmatpush1.bf16.msra.mxu0 1065369472
  %3070 = vmatprep.subr.bf16.mxu0 0
  %3071 = vmatpush1.bf16.msra.mxu0 1065369472
  %3072 = vmatprep.subr.bf16.mxu0 0
  %3073 = vmatpush1.bf16.msra.mxu0 1065369472
  %3074 = vmatprep.subr.bf16.mxu0 0
  %3075 = vmatpush1.bf16.msra.mxu0 1065369472
  %3076 = vmatprep.subr.bf16.mxu0 0
  %3077 = vmatpush1.bf16.msra.mxu0 1065369472
  %3078 = vmatprep.mubr.bf16.mxu0 %v3021
  %3079 = vmatmul.mubr.bf16.gmra.mrb[0].mxu0 %v3020
  %v3080 = vpop.f32.mrb[0].mxu0
  %v3081 = vadd.f32 0.0, %v3080
  %v3082 = vpop.f32.mrb[0].mxu0
  %v3083 = vpop.f32.mrb[0].mxu0
  %v3084 = vpop.f32.mrb[0].mxu0
  %3085 = vdwg.mxu0
  %3086 = vmatprep.subr.bf16.mxu0 0
  %3087 = vmatpush1.bf16.msra.mxu0 1065369472
  %3088 = vmatprep.subr.bf16.mxu0 0
  %3089 = vmatpush1.bf16.msra.mxu0 1065369472
  %3090 = vmatprep.subr.bf16.mxu0 0
  %3091 = vmatpush1.bf16.msra.mxu0 1065369472
  %3092 = vmatprep.subr.bf16.mxu0 0
  %3093 = vmatpush1.bf16.msra.mxu0 1065369472
  %3094 = vmatprep.subr.bf16.mxu0 0
  %3095 = vmatpush1.bf16.msra.mxu0 1065369472
  %3096 = vmatprep.subr.bf16.mxu0 0
  %3097 = vmatpush1.bf16.msra.mxu0 1065369472
  %3098 = vmatprep.subr.bf16.mxu0 0
  %3099 = vmatpush1.bf16.msra.mxu0 1065369472
  %3100 = vmatprep.subr.bf16.mxu0 0
  %3101 = vmatpush1.bf16.msra.mxu0 1065369472
  %3102 = vmatprep.subr.bf16.mxu0 0
  %3103 = vmatpush1.bf16.msra.mxu0 1065369472
  %3104 = vmatprep.subr.bf16.mxu0 0
  %3105 = vmatpush1.bf16.msra.mxu0 1065369472
  %3106 = vmatprep.subr.bf16.mxu0 0
  %3107 = vmatpush1.bf16.msra.mxu0 1065369472
  %3108 = vmatprep.subr.bf16.mxu0 0
  %3109 = vmatpush1.bf16.msra.mxu0 1065369472
  %3110 = vmatprep.subr.bf16.mxu0 0
  %3111 = vmatpush1.bf16.msra.mxu0 1065369472
  %3112 = vmatprep.subr.bf16.mxu0 0
  %3113 = vmatpush1.bf16.msra.mxu0 1065369472
  %3114 = vmatprep.subr.bf16.mxu0 0
  %3115 = vmatpush1.bf16.msra.mxu0 1065369472
  %3116 = vmatprep.subr.bf16.mxu0 0
  %3117 = vmatpush1.bf16.msra.mxu0 1065369472
  %3118 = vmatprep.mubr.bf16.mxu0 %v3023
  %3119 = vmatmul.mubr.bf16.gmra.mrb[0].mxu0 %v3022
  %v3120 = vpop.f32.mrb[0].mxu0
  %v3121 = vadd.f32 %v3081, %v3120
  %v3122 = vpop.f32.mrb[0].mxu0
  %v3123 = vpop.f32.mrb[0].mxu0
  %v3124 = vpop.f32.mrb[0].mxu0
  %3125 = vdwg.mxu0
  %3126 = vmatprep.subr.bf16.mxu0 0
  %3127 = vmatpush1.bf16.msra.mxu0 1065369472
  %3128 = vmatprep.subr.bf16.mxu0 0
  %3129 = vmatpush1.bf16.msra.mxu0 1065369472
  %3130 = vmatprep.subr.bf16.mxu0 0
  %3131 = vmatpush1.bf16.msra.mxu0 1065369472
  %3132 = vmatprep.subr.bf16.mxu0 0
  %3133 = vmatpush1.bf16.msra.mxu0 1065369472
  %3134 = vmatprep.subr.bf16.mxu0 0
  %3135 = vmatpush1.bf16.msra.mxu0 1065369472
  %3136 = vmatprep.subr.bf16.mxu0 0
  %3137 = vmatpush1.bf16.msra.mxu0 1065369472
  %3138 = vmatprep.subr.bf16.mxu0 0
  %3139 = vmatpush1.bf16.msra.mxu0 1065369472
  %3140 = vmatprep.subr.bf16.mxu0 0
  %3141 = vmatpush1.bf16.msra.mxu0 1065369472
  %3142 = vmatprep.subr.bf16.mxu0 0
  %3143 = vmatpush1.bf16.msra.mxu0 1065369472
  %3144 = vmatprep.subr.bf16.mxu0 0
  %3145 = vmatpush1.bf16.msra.mxu0 1065369472
  %3146 = vmatprep.subr.bf16.mxu0 0
  %3147 = vmatpush1.bf16.msra.mxu0 1065369472
  %3148 = vmatprep.subr.bf16.mxu0 0
  %3149 = vmatpush1.bf16.msra.mxu0 1065369472
  %3150 = vmatprep.subr.bf16.mxu0 0
  %3151 = vmatpush1.bf16.msra.mxu0 1065369472
  %3152 = vmatprep.subr.bf16.mxu0 0
  %3153 = vmatpush1.bf16.msra.mxu0 1065369472
  %3154 = vmatprep.subr.bf16.mxu0 0
  %3155 = vmatpush1.bf16.msra.mxu0 1065369472
  %3156 = vmatprep.subr.bf16.mxu0 0
  %3157 = vmatpush1.bf16.msra.mxu0 1065369472
  %3158 = vmatprep.mubr.bf16.mxu0 %v3025
  %3159 = vmatmul.mubr.bf16.gmra.mrb[0].mxu0 %v3024
  %v3160 = vpop.f32.mrb[0].mxu0
  %v3161 = vadd.f32 %v3121, %v3160
  %v3162 = vpop.f32.mrb[0].mxu0
  %v3163 = vpop.f32.mrb[0].mxu0
  %v3164 = vpop.f32.mrb[0].mxu0
  %3165 = vdwg.mxu0
  %3166 = vmatprep.subr.bf16.mxu0 0
  %3167 = vmatpush1.bf16.msra.mxu0 1065369472
  %3168 = vmatprep.subr.bf16.mxu0 0
  %3169 = vmatpush1.bf16.msra.mxu0 1065369472
  %3170 = vmatprep.subr.bf16.mxu0 0
  %3171 = vmatpush1.bf16.msra.mxu0 1065369472
  %3172 = vmatprep.subr.bf16.mxu0 0
  %3173 = vmatpush1.bf16.msra.mxu0 1065369472
  %3174 = vmatprep.subr.bf16.mxu0 0
  %3175 = vmatpush1.bf16.msra.mxu0 1065369472
  %3176 = vmatprep.subr.bf16.mxu0 0
  %3177 = vmatpush1.bf16.msra.mxu0 1065369472
  %3178 = vmatprep.subr.bf16.mxu0 0
  %3179 = vmatpush1.bf16.msra.mxu0 1065369472
  %3180 = vmatprep.subr.bf16.mxu0 0
  %3181 = vmatpush1.bf16.msra.mxu0 1065369472
  %3182 = vmatprep.subr.bf16.mxu0 0
  %3183 = vmatpush1.bf16.msra.mxu0 1065369472
  %3184 = vmatprep.subr.bf16.mxu0 0
  %3185 = vmatpush1.bf16.msra.mxu0 1065369472
  %3186 = vmatprep.subr.bf16.mxu0 0
  %3187 = vmatpush1.bf16.msra.mxu0 1065369472
  %3188 = vmatprep.subr.bf16.mxu0 0
  %3189 = vmatpush1.bf16.msra.mxu0 1065369472
  %3190 = vmatprep.subr.bf16.mxu0 0
  %3191 = vmatpush1.bf16.msra.mxu0 1065369472
  %3192 = vmatprep.subr.bf16.mxu0 0
  %3193 = vmatpush1.bf16.msra.mxu0 1065369472
  %3194 = vmatprep.subr.bf16.mxu0 0
  %3195 = vmatpush1.bf16.msra.mxu0 1065369472
  %3196 = vmatprep.subr.bf16.mxu0 0
  %3197 = vmatpush1.bf16.msra.mxu0 1065369472
  %3198 = vmatprep.mubr.bf16.mxu0 %v3027
  %3199 = vmatmul.mubr.bf16.gmra.mrb[0].mxu0 %v3026
  %v3200 = vpop.f32.mrb[0].mxu0
  %v3201 = vadd.f32 %v3161, %v3200
  %v3202 = vpop.f32.mrb[0].mxu0
  %v3203 = vpop.f32.mrb[0].mxu0
  %v3204 = vpop.f32.mrb[0].mxu0
  %3205 = vdwg.mxu0
  %3206 = vmatprep.subr.bf16.mxu0 0
  %3207 = vmatpush1.bf16.msra.mxu0 1065369472
  %3208 = vmatprep.subr.bf16.mxu0 0
  %3209 = vmatpush1.bf16.msra.mxu0 1065369472
  %3210 = vmatprep.subr.bf16.mxu0 0
  %3211 = vmatpush1.bf16.msra.mxu0 1065369472
  %3212 = vmatprep.subr.bf16.mxu0 0
  %3213 = vmatpush1.bf16.msra.mxu0 1065369472
  %3214 = vmatprep.subr.bf16.mxu0 0
  %3215 = vmatpush1.bf16.msra.mxu0 1065369472
  %3216 = vmatprep.subr.bf16.mxu0 0
  %3217 = vmatpush1.bf16.msra.mxu0 1065369472
  %3218 = vmatprep.subr.bf16.mxu0 0
  %3219 = vmatpush1.bf16.msra.mxu0 1065369472
  %3220 = vmatprep.subr.bf16.mxu0 0
  %3221 = vmatpush1.bf16.msra.mxu0 1065369472
  %3222 = vmatprep.subr.bf16.mxu0 0
  %3223 = vmatpush1.bf16.msra.mxu0 1065369472
  %3224 = vmatprep.subr.bf16.mxu0 0
  %3225 = vmatpush1.bf16.msra.mxu0 1065369472
  %3226 = vmatprep.subr.bf16.mxu0 0
  %3227 = vmatpush1.bf16.msra.mxu0 1065369472
  %3228 = vmatprep.subr.bf16.mxu0 0
  %3229 = vmatpush1.bf16.msra.mxu0 1065369472
  %3230 = vmatprep.subr.bf16.mxu0 0
  %3231 = vmatpush1.bf16.msra.mxu0 1065369472
  %3232 = vmatprep.subr.bf16.mxu0 0
  %3233 = vmatpush1.bf16.msra.mxu0 1065369472
  %3234 = vmatprep.subr.bf16.mxu0 0
  %3235 = vmatpush1.bf16.msra.mxu0 1065369472
  %3236 = vmatprep.subr.bf16.mxu0 0
  %3237 = vmatpush1.bf16.msra.mxu0 1065369472
  %3238 = vmatprep.mubr.bf16.mxu0 %v3029
  %3239 = vmatmul.mubr.bf16.gmra.mrb[0].mxu0 %v3028
  %v3240 = vpop.f32.mrb[0].mxu0
  %v3241 = vadd.f32 %v3201, %v3240
  %v3242 = vpop.f32.mrb[0].mxu0
  %v3243 = vpop.f32.mrb[0].mxu0
  %v3244 = vpop.f32.mrb[0].mxu0
  %3245 = vdwg.mxu0
  %3246 = vmatprep.subr.bf16.mxu0 0
  %3247 = vmatpush1.bf16.msra.mxu0 1065369472
  %3248 = vmatprep.subr.bf16.mxu0 0
  %3249 = vmatpush1.bf16.msra.mxu0 1065369472
  %3250 = vmatprep.subr.bf16.mxu0 0
  %3251 = vmatpush1.bf16.msra.mxu0 1065369472
  %3252 = vmatprep.subr.bf16.mxu0 0
  %3253 = vmatpush1.bf16.msra.mxu0 1065369472
  %3254 = vmatprep.subr.bf16.mxu0 0
  %3255 = vmatpush1.bf16.msra.mxu0 1065369472
  %3256 = vmatprep.subr.bf16.mxu0 0
  %3257 = vmatpush1.bf16.msra.mxu0 1065369472
  %3258 = vmatprep.subr.bf16.mxu0 0
  %3259 = vmatpush1.bf16.msra.mxu0 1065369472
  %3260 = vmatprep.subr.bf16.mxu0 0
  %3261 = vmatpush1.bf16.msra.mxu0 1065369472
  %3262 = vmatprep.subr.bf16.mxu0 0
  %3263 = vmatpush1.bf16.msra.mxu0 1065369472
  %3264 = vmatprep.subr.bf16.mxu0 0
  %3265 = vmatpush1.bf16.msra.mxu0 1065369472
  %3266 = vmatprep.subr.bf16.mxu0 0
  %3267 = vmatpush1.bf16.msra.mxu0 1065369472
  %3268 = vmatprep.subr.bf16.mxu0 0
  %3269 = vmatpush1.bf16.msra.mxu0 1065369472
  %3270 = vmatprep.subr.bf16.mxu0 0
  %3271 = vmatpush1.bf16.msra.mxu0 1065369472
  %3272 = vmatprep.subr.bf16.mxu0 0
  %3273 = vmatpush1.bf16.msra.mxu0 1065369472
  %3274 = vmatprep.subr.bf16.mxu0 0
  %3275 = vmatpush1.bf16.msra.mxu0 1065369472
  %3276 = vmatprep.subr.bf16.mxu0 0
  %3277 = vmatpush1.bf16.msra.mxu0 1065369472
  %3278 = vmatprep.mubr.bf16.mxu0 %v3031
  %3279 = vmatmul.mubr.bf16.gmra.mrb[0].mxu0 %v3030
  %v3280 = vpop.f32.mrb[0].mxu0
  %v3281 = vadd.f32 %v3241, %v3280
  %v3282 = vpop.f32.mrb[0].mxu0
  %v3283 = vpop.f32.mrb[0].mxu0
  %v3284 = vpop.f32.mrb[0].mxu0
  %3285 = vdwg.mxu0
  %3286 = vmatprep.subr.bf16.mxu0 0
  %3287 = vmatpush1.bf16.msra.mxu0 1065369472
  %3288 = vmatprep.subr.bf16.mxu0 0
  %3289 = vmatpush1.bf16.msra.mxu0 1065369472
  %3290 = vmatprep.subr.bf16.mxu0 0
  %3291 = vmatpush1.bf16.msra.mxu0 1065369472
  %3292 = vmatprep.subr.bf16.mxu0 0
  %3293 = vmatpush1.bf16.msra.mxu0 1065369472
  %3294 = vmatprep.subr.bf16.mxu0 0
  %3295 = vmatpush1.bf16.msra.mxu0 1065369472
  %3296 = vmatprep.subr.bf16.mxu0 0
  %3297 = vmatpush1.bf16.msra.mxu0 1065369472
  %3298 = vmatprep.subr.bf16.mxu0 0
  %3299 = vmatpush1.bf16.msra.mxu0 1065369472
  %3300 = vmatprep.subr.bf16.mxu0 0
  %3301 = vmatpush1.bf16.msra.mxu0 1065369472
  %3302 = vmatprep.subr.bf16.mxu0 0
  %3303 = vmatpush1.bf16.msra.mxu0 0
  %3304 = vmatprep.subr.bf16.mxu0 0
  %3305 = vmatpush1.bf16.msra.mxu0 0
  %3306 = vmatprep.subr.bf16.mxu0 0
  %3307 = vmatpush1.bf16.msra.mxu0 0
  %3308 = vmatprep.subr.bf16.mxu0 0
  %3309 = vmatpush1.bf16.msra.mxu0 0
  %3310 = vmatprep.subr.bf16.mxu0 0
  %3311 = vmatpush1.bf16.msra.mxu0 0
  %3312 = vmatprep.subr.bf16.mxu0 0
  %3313 = vmatpush1.bf16.msra.mxu0 0
  %3314 = vmatprep.subr.bf16.mxu0 0
  %3315 = vmatpush1.bf16.msra.mxu0 0
  %3316 = vmatprep.subr.bf16.mxu0 0
  %3317 = vmatpush1.bf16.msra.mxu0 0
  %3318 = vmatprep.mubr.bf16.mxu0 0
  %3319 = vmatmul.mubr.bf16.gmra.mrb[0].mxu0 %v3032
  %v3320 = vpop.f32.mrb[0].mxu0
  %v3321 = vadd.f32 %v3281, %v3320
  %v3322 = vpop.f32.mrb[0].mxu0
  %v3323 = vpop.f32.mrb[0].mxu0
  %v3324 = vpop.f32.mrb[0].mxu0
  %3325 = vdwg.mxu0
  %v3326 = vmul.bf16 %v36, %v36
  %v3327 = vmul.bf16 %v37, %v37
  %v3328 = vmul.bf16 %v38, %v38
  %v3329 = vmul.bf16 %v39, %v39
  %v3330 = vmul.bf16 %v40, %v40
  %v3331 = vmul.bf16 %v41, %v41
  %v3332 = vmul.bf16 %v42, %v42
  %v3333 = vmul.bf16 %v43, %v43
  %v3342 = vunpack.c.l.b16 %v3326
  %v3343 = vunpack.c.h.b16 %v3326
  %v3344 = vunpack.c.l.b16 %v3327
  %v3345 = vunpack.c.h.b16 %v3327
  %v3346 = vunpack.c.l.b16 %v3328
  %v3347 = vunpack.c.h.b16 %v3328
  %v3348 = vunpack.c.l.b16 %v3329
  %v3349 = vunpack.c.h.b16 %v3329
  %v3350 = vunpack.c.l.b16 %v3330
  %v3351 = vunpack.c.h.b16 %v3330
  %v3352 = vunpack.c.l.b16 %v3331
  %v3353 = vunpack.c.h.b16 %v3331
  %v3354 = vunpack.c.l.b16 %v3332
  %v3355 = vunpack.c.h.b16 %v3332
  %v3356 = vunpack.c.l.b16 %v3333
  %v3357 = vunpack.c.h.b16 %v3333
  %v3358 = vpack.c.b16 %v3342, %v3342
  %v3359 = vpack.c.b16 %v3343, %v3343
  %v3360 = vpack.c.b16 %v3344, %v3344
  %v3361 = vpack.c.b16 %v3345, %v3345
  %v3362 = vpack.c.b16 %v3346, %v3346
  %v3363 = vpack.c.b16 %v3347, %v3347
  %v3364 = vpack.c.b16 %v3348, %v3348
  %v3365 = vpack.c.b16 %v3349, %v3349
  %v3366 = vpack.c.b16 %v3350, %v3350
  %v3367 = vpack.c.b16 %v3351, %v3351
  %v3368 = vpack.c.b16 %v3352, %v3352
  %v3369 = vpack.c.b16 %v3353, %v3353
  %v3370 = vpack.c.b16 %v3354, %v3354
  %v3371 = vpack.c.b16 %v3355, %v3355
  %v3372 = vpack.c.b16 %v3356, %v3356
  %v3373 = vpack.c.b16 %v3357, %v3357
  %3390 = vmatprep.subr.bf16.mxu0 0
  %3391 = vmatpush1.bf16.msra.mxu0 1065369472
  %3392 = vmatprep.subr.bf16.mxu0 0
  %3393 = vmatpush1.bf16.msra.mxu0 1065369472
  %3394 = vmatprep.subr.bf16.mxu0 0
  %3395 = vmatpush1.bf16.msra.mxu0 1065369472
  %3396 = vmatprep.subr.bf16.mxu0 0
  %3397 = vmatpush1.bf16.msra.mxu0 1065369472
  %3398 = vmatprep.subr.bf16.mxu0 0
  %3399 = vmatpush1.bf16.msra.mxu0 1065369472
  %3400 = vmatprep.subr.bf16.mxu0 0
  %3401 = vmatpush1.bf16.msra.mxu0 1065369472
  %3402 = vmatprep.subr.bf16.mxu0 0
  %3403 = vmatpush1.bf16.msra.mxu0 1065369472
  %3404 = vmatprep.subr.bf16.mxu0 0
  %3405 = vmatpush1.bf16.msra.mxu0 1065369472
  %3406 = vmatprep.subr.bf16.mxu0 0
  %3407 = vmatpush1.bf16.msra.mxu0 1065369472
  %3408 = vmatprep.subr.bf16.mxu0 0
  %3409 = vmatpush1.bf16.msra.mxu0 1065369472
  %3410 = vmatprep.subr.bf16.mxu0 0
  %3411 = vmatpush1.bf16.msra.mxu0 1065369472
  %3412 = vmatprep.subr.bf16.mxu0 0
  %3413 = vmatpush1.bf16.msra.mxu0 1065369472
  %3414 = vmatprep.subr.bf16.mxu0 0
  %3415 = vmatpush1.bf16.msra.mxu0 1065369472
  %3416 = vmatprep.subr.bf16.mxu0 0
  %3417 = vmatpush1.bf16.msra.mxu0 1065369472
  %3418 = vmatprep.subr.bf16.mxu0 0
  %3419 = vmatpush1.bf16.msra.mxu0 1065369472
  %3420 = vmatprep.subr.bf16.mxu0 0
  %3421 = vmatpush1.bf16.msra.mxu0 1065369472
  %3422 = vmatprep.mubr.bf16.mxu0 %v3359
  %3423 = vmatmul.mubr.bf16.gmra.mrb[0].mxu0 %v3358
  %v3424 = vpop.f32.mrb[0].mxu0
  %v3425 = vadd.f32 0.0, %v3424
  %v3426 = vpop.f32.mrb[0].mxu0
  %v3427 = vpop.f32.mrb[0].mxu0
  %v3428 = vpop.f32.mrb[0].mxu0
  %3429 = vdwg.mxu0
  %3430 = vmatprep.subr.bf16.mxu0 0
  %3431 = vmatpush1.bf16.msra.mxu0 1065369472
  %3432 = vmatprep.subr.bf16.mxu0 0
  %3433 = vmatpush1.bf16.msra.mxu0 1065369472
  %3434 = vmatprep.subr.bf16.mxu0 0
  %3435 = vmatpush1.bf16.msra.mxu0 1065369472
  %3436 = vmatprep.subr.bf16.mxu0 0
  %3437 = vmatpush1.bf16.msra.mxu0 1065369472
  %3438 = vmatprep.subr.bf16.mxu0 0
  %3439 = vmatpush1.bf16.msra.mxu0 1065369472
  %3440 = vmatprep.subr.bf16.mxu0 0
  %3441 = vmatpush1.bf16.msra.mxu0 1065369472
  %3442 = vmatprep.subr.bf16.mxu0 0
  %3443 = vmatpush1.bf16.msra.mxu0 1065369472
  %3444 = vmatprep.subr.bf16.mxu0 0
  %3445 = vmatpush1.bf16.msra.mxu0 1065369472
  %3446 = vmatprep.subr.bf16.mxu0 0
  %3447 = vmatpush1.bf16.msra.mxu0 1065369472
  %3448 = vmatprep.subr.bf16.mxu0 0
  %3449 = vmatpush1.bf16.msra.mxu0 1065369472
  %3450 = vmatprep.subr.bf16.mxu0 0
  %3451 = vmatpush1.bf16.msra.mxu0 1065369472
  %3452 = vmatprep.subr.bf16.mxu0 0
  %3453 = vmatpush1.bf16.msra.mxu0 1065369472
  %3454 = vmatprep.subr.bf16.mxu0 0
  %3455 = vmatpush1.bf16.msra.mxu0 1065369472
  %3456 = vmatprep.subr.bf16.mxu0 0
  %3457 = vmatpush1.bf16.msra.mxu0 1065369472
  %3458 = vmatprep.subr.bf16.mxu0 0
  %3459 = vmatpush1.bf16.msra.mxu0 1065369472
  %3460 = vmatprep.subr.bf16.mxu0 0
  %3461 = vmatpush1.bf16.msra.mxu0 1065369472
  %3462 = vmatprep.mubr.bf16.mxu0 %v3361
  %3463 = vmatmul.mubr.bf16.gmra.mrb[0].mxu0 %v3360
  %v3464 = vpop.f32.mrb[0].mxu0
  %v3465 = vadd.f32 %v3425, %v3464
  %v3466 = vpop.f32.mrb[0].mxu0
  %v3467 = vpop.f32.mrb[0].mxu0
  %v3468 = vpop.f32.mrb[0].mxu0
  %3469 = vdwg.mxu0
  %3470 = vmatprep.subr.bf16.mxu0 0
  %3471 = vmatpush1.bf16.msra.mxu0 1065369472
  %3472 = vmatprep.subr.bf16.mxu0 0
  %3473 = vmatpush1.bf16.msra.mxu0 1065369472
  %3474 = vmatprep.subr.bf16.mxu0 0
  %3475 = vmatpush1.bf16.msra.mxu0 1065369472
  %3476 = vmatprep.subr.bf16.mxu0 0
  %3477 = vmatpush1.bf16.msra.mxu0 1065369472
  %3478 = vmatprep.subr.bf16.mxu0 0
  %3479 = vmatpush1.bf16.msra.mxu0 1065369472
  %3480 = vmatprep.subr.bf16.mxu0 0
  %3481 = vmatpush1.bf16.msra.mxu0 1065369472
  %3482 = vmatprep.subr.bf16.mxu0 0
  %3483 = vmatpush1.bf16.msra.mxu0 1065369472
  %3484 = vmatprep.subr.bf16.mxu0 0
  %3485 = vmatpush1.bf16.msra.mxu0 1065369472
  %3486 = vmatprep.subr.bf16.mxu0 0
  %3487 = vmatpush1.bf16.msra.mxu0 1065369472
  %3488 = vmatprep.subr.bf16.mxu0 0
  %3489 = vmatpush1.bf16.msra.mxu0 1065369472
  %3490 = vmatprep.subr.bf16.mxu0 0
  %3491 = vmatpush1.bf16.msra.mxu0 1065369472
  %3492 = vmatprep.subr.bf16.mxu0 0
  %3493 = vmatpush1.bf16.msra.mxu0 1065369472
  %3494 = vmatprep.subr.bf16.mxu0 0
  %3495 = vmatpush1.bf16.msra.mxu0 1065369472
  %3496 = vmatprep.subr.bf16.mxu0 0
  %3497 = vmatpush1.bf16.msra.mxu0 1065369472
  %3498 = vmatprep.subr.bf16.mxu0 0
  %3499 = vmatpush1.bf16.msra.mxu0 1065369472
  %3500 = vmatprep.subr.bf16.mxu0 0
  %3501 = vmatpush1.bf16.msra.mxu0 1065369472
  %3502 = vmatprep.mubr.bf16.mxu0 %v3363
  %3503 = vmatmul.mubr.bf16.gmra.mrb[0].mxu0 %v3362
  %v3504 = vpop.f32.mrb[0].mxu0
  %v3505 = vadd.f32 %v3465, %v3504
  %v3506 = vpop.f32.mrb[0].mxu0
  %v3507 = vpop.f32.mrb[0].mxu0
  %v3508 = vpop.f32.mrb[0].mxu0
  %3509 = vdwg.mxu0
  %3510 = vmatprep.subr.bf16.mxu0 0
  %3511 = vmatpush1.bf16.msra.mxu0 1065369472
  %3512 = vmatprep.subr.bf16.mxu0 0
  %3513 = vmatpush1.bf16.msra.mxu0 1065369472
  %3514 = vmatprep.subr.bf16.mxu0 0
  %3515 = vmatpush1.bf16.msra.mxu0 1065369472
  %3516 = vmatprep.subr.bf16.mxu0 0
  %3517 = vmatpush1.bf16.msra.mxu0 1065369472
  %3518 = vmatprep.subr.bf16.mxu0 0
  %3519 = vmatpush1.bf16.msra.mxu0 1065369472
  %3520 = vmatprep.subr.bf16.mxu0 0
  %3521 = vmatpush1.bf16.msra.mxu0 1065369472
  %3522 = vmatprep.subr.bf16.mxu0 0
  %3523 = vmatpush1.bf16.msra.mxu0 1065369472
  %3524 = vmatprep.subr.bf16.mxu0 0
  %3525 = vmatpush1.bf16.msra.mxu0 1065369472
  %3526 = vmatprep.subr.bf16.mxu0 0
  %3527 = vmatpush1.bf16.msra.mxu0 1065369472
  %3528 = vmatprep.subr.bf16.mxu0 0
  %3529 = vmatpush1.bf16.msra.mxu0 1065369472
  %3530 = vmatprep.subr.bf16.mxu0 0
  %3531 = vmatpush1.bf16.msra.mxu0 1065369472
  %3532 = vmatprep.subr.bf16.mxu0 0
  %3533 = vmatpush1.bf16.msra.mxu0 1065369472
  %3534 = vmatprep.subr.bf16.mxu0 0
  %3535 = vmatpush1.bf16.msra.mxu0 1065369472
  %3536 = vmatprep.subr.bf16.mxu0 0
  %3537 = vmatpush1.bf16.msra.mxu0 1065369472
  %3538 = vmatprep.subr.bf16.mxu0 0
  %3539 = vmatpush1.bf16.msra.mxu0 1065369472
  %3540 = vmatprep.subr.bf16.mxu0 0
  %3541 = vmatpush1.bf16.msra.mxu0 1065369472
  %3542 = vmatprep.mubr.bf16.mxu0 %v3365
  %3543 = vmatmul.mubr.bf16.gmra.mrb[0].mxu0 %v3364
  %v3544 = vpop.f32.mrb[0].mxu0
  %v3545 = vadd.f32 %v3505, %v3544
  %v3546 = vpop.f32.mrb[0].mxu0
  %v3547 = vpop.f32.mrb[0].mxu0
  %v3548 = vpop.f32.mrb[0].mxu0
  %3549 = vdwg.mxu0
  %3550 = vmatprep.subr.bf16.mxu0 0
  %3551 = vmatpush1.bf16.msra.mxu0 1065369472
  %3552 = vmatprep.subr.bf16.mxu0 0
  %3553 = vmatpush1.bf16.msra.mxu0 1065369472
  %3554 = vmatprep.subr.bf16.mxu0 0
  %3555 = vmatpush1.bf16.msra.mxu0 1065369472
  %3556 = vmatprep.subr.bf16.mxu0 0
  %3557 = vmatpush1.bf16.msra.mxu0 1065369472
  %3558 = vmatprep.subr.bf16.mxu0 0
  %3559 = vmatpush1.bf16.msra.mxu0 1065369472
  %3560 = vmatprep.subr.bf16.mxu0 0
  %3561 = vmatpush1.bf16.msra.mxu0 1065369472
  %3562 = vmatprep.subr.bf16.mxu0 0
  %3563 = vmatpush1.bf16.msra.mxu0 1065369472
  %3564 = vmatprep.subr.bf16.mxu0 0
  %3565 = vmatpush1.bf16.msra.mxu0 1065369472
  %3566 = vmatprep.subr.bf16.mxu0 0
  %3567 = vmatpush1.bf16.msra.mxu0 1065369472
  %3568 = vmatprep.subr.bf16.mxu0 0
  %3569 = vmatpush1.bf16.msra.mxu0 1065369472
  %3570 = vmatprep.subr.bf16.mxu0 0
  %3571 = vmatpush1.bf16.msra.mxu0 1065369472
  %3572 = vmatprep.subr.bf16.mxu0 0
  %3573 = vmatpush1.bf16.msra.mxu0 1065369472
  %3574 = vmatprep.subr.bf16.mxu0 0
  %3575 = vmatpush1.bf16.msra.mxu0 1065369472
  %3576 = vmatprep.subr.bf16.mxu0 0
  %3577 = vmatpush1.bf16.msra.mxu0 1065369472
  %3578 = vmatprep.subr.bf16.mxu0 0
  %3579 = vmatpush1.bf16.msra.mxu0 1065369472
  %3580 = vmatprep.subr.bf16.mxu0 0
  %3581 = vmatpush1.bf16.msra.mxu0 1065369472
  %3582 = vmatprep.mubr.bf16.mxu0 %v3367
  %3583 = vmatmul.mubr.bf16.gmra.mrb[0].mxu0 %v3366
  %v3584 = vpop.f32.mrb[0].mxu0
  %v3585 = vadd.f32 %v3545, %v3584
  %v3586 = vpop.f32.mrb[0].mxu0
  %v3587 = vpop.f32.mrb[0].mxu0
  %v3588 = vpop.f32.mrb[0].mxu0
  %3589 = vdwg.mxu0
  %3590 = vmatprep.subr.bf16.mxu0 0
  %3591 = vmatpush1.bf16.msra.mxu0 1065369472
  %3592 = vmatprep.subr.bf16.mxu0 0
  %3593 = vmatpush1.bf16.msra.mxu0 1065369472
  %3594 = vmatprep.subr.bf16.mxu0 0
  %3595 = vmatpush1.bf16.msra.mxu0 1065369472
  %3596 = vmatprep.subr.bf16.mxu0 0
  %3597 = vmatpush1.bf16.msra.mxu0 1065369472
  %3598 = vmatprep.subr.bf16.mxu0 0
  %3599 = vmatpush1.bf16.msra.mxu0 1065369472
  %3600 = vmatprep.subr.bf16.mxu0 0
  %3601 = vmatpush1.bf16.msra.mxu0 1065369472
  %3602 = vmatprep.subr.bf16.mxu0 0
  %3603 = vmatpush1.bf16.msra.mxu0 1065369472
  %3604 = vmatprep.subr.bf16.mxu0 0
  %3605 = vmatpush1.bf16.msra.mxu0 1065369472
  %3606 = vmatprep.subr.bf16.mxu0 0
  %3607 = vmatpush1.bf16.msra.mxu0 1065369472
  %3608 = vmatprep.subr.bf16.mxu0 0
  %3609 = vmatpush1.bf16.msra.mxu0 1065369472
  %3610 = vmatprep.subr.bf16.mxu0 0
  %3611 = vmatpush1.bf16.msra.mxu0 1065369472
  %3612 = vmatprep.subr.bf16.mxu0 0
  %3613 = vmatpush1.bf16.msra.mxu0 1065369472
  %3614 = vmatprep.subr.bf16.mxu0 0
  %3615 = vmatpush1.bf16.msra.mxu0 1065369472
  %3616 = vmatprep.subr.bf16.mxu0 0
  %3617 = vmatpush1.bf16.msra.mxu0 1065369472
  %3618 = vmatprep.subr.bf16.mxu0 0
  %3619 = vmatpush1.bf16.msra.mxu0 1065369472
  %3620 = vmatprep.subr.bf16.mxu0 0
  %3621 = vmatpush1.bf16.msra.mxu0 1065369472
  %3622 = vmatprep.mubr.bf16.mxu0 %v3369
  %3623 = vmatmul.mubr.bf16.gmra.mrb[0].mxu0 %v3368
  %v3624 = vpop.f32.mrb[0].mxu0
  %v3625 = vadd.f32 %v3585, %v3624
  %v3626 = vpop.f32.mrb[0].mxu0
  %v3627 = vpop.f32.mrb[0].mxu0
  %v3628 = vpop.f32.mrb[0].mxu0
  %3629 = vdwg.mxu0
  %3630 = vmatprep.subr.bf16.mxu0 0
  %3631 = vmatpush1.bf16.msra.mxu0 1065369472
  %3632 = vmatprep.subr.bf16.mxu0 0
  %3633 = vmatpush1.bf16.msra.mxu0 1065369472
  %3634 = vmatprep.subr.bf16.mxu0 0
  %3635 = vmatpush1.bf16.msra.mxu0 1065369472
  %3636 = vmatprep.subr.bf16.mxu0 0
  %3637 = vmatpush1.bf16.msra.mxu0 1065369472
  %3638 = vmatprep.subr.bf16.mxu0 0
  %3639 = vmatpush1.bf16.msra.mxu0 1065369472
  %3640 = vmatprep.subr.bf16.mxu0 0
  %3641 = vmatpush1.bf16.msra.mxu0 1065369472
  %3642 = vmatprep.subr.bf16.mxu0 0
  %3643 = vmatpush1.bf16.msra.mxu0 1065369472
  %3644 = vmatprep.subr.bf16.mxu0 0
  %3645 = vmatpush1.bf16.msra.mxu0 1065369472
  %3646 = vmatprep.subr.bf16.mxu0 0
  %3647 = vmatpush1.bf16.msra.mxu0 1065369472
  %3648 = vmatprep.subr.bf16.mxu0 0
  %3649 = vmatpush1.bf16.msra.mxu0 1065369472
  %3650 = vmatprep.subr.bf16.mxu0 0
  %3651 = vmatpush1.bf16.msra.mxu0 1065369472
  %3652 = vmatprep.subr.bf16.mxu0 0
  %3653 = vmatpush1.bf16.msra.mxu0 1065369472
  %3654 = vmatprep.subr.bf16.mxu0 0
  %3655 = vmatpush1.bf16.msra.mxu0 1065369472
  %3656 = vmatprep.subr.bf16.mxu0 0
  %3657 = vmatpush1.bf16.msra.mxu0 1065369472
  %3658 = vmatprep.subr.bf16.mxu0 0
  %3659 = vmatpush1.bf16.msra.mxu0 1065369472
  %3660 = vmatprep.subr.bf16.mxu0 0
  %3661 = vmatpush1.bf16.msra.mxu0 1065369472
  %3662 = vmatprep.mubr.bf16.mxu0 %v3371
  %3663 = vmatmul.mubr.bf16.gmra.mrb[0].mxu0 %v3370
  %v3664 = vpop.f32.mrb[0].mxu0
  %v3665 = vadd.f32 %v3625, %v3664
  %v3666 = vpop.f32.mrb[0].mxu0
  %v3667 = vpop.f32.mrb[0].mxu0
  %v3668 = vpop.f32.mrb[0].mxu0
  %3669 = vdwg.mxu0
  %3670 = vmatprep.subr.bf16.mxu0 0
  %3671 = vmatpush1.bf16.msra.mxu0 1065369472
  %3672 = vmatprep.subr.bf16.mxu0 0
  %3673 = vmatpush1.bf16.msra.mxu0 1065369472
  %3674 = vmatprep.subr.bf16.mxu0 0
  %3675 = vmatpush1.bf16.msra.mxu0 1065369472
  %3676 = vmatprep.subr.bf16.mxu0 0
  %3677 = vmatpush1.bf16.msra.mxu0 1065369472
  %3678 = vmatprep.subr.bf16.mxu0 0
  %3679 = vmatpush1.bf16.msra.mxu0 1065369472
  %3680 = vmatprep.subr.bf16.mxu0 0
  %3681 = vmatpush1.bf16.msra.mxu0 1065369472
  %3682 = vmatprep.subr.bf16.mxu0 0
  %3683 = vmatpush1.bf16.msra.mxu0 1065369472
  %3684 = vmatprep.subr.bf16.mxu0 0
  %3685 = vmatpush1.bf16.msra.mxu0 1065369472
  %3686 = vmatprep.subr.bf16.mxu0 0
  %3687 = vmatpush1.bf16.msra.mxu0 1065369472
  %3688 = vmatprep.subr.bf16.mxu0 0
  %3689 = vmatpush1.bf16.msra.mxu0 1065369472
  %3690 = vmatprep.subr.bf16.mxu0 0
  %3691 = vmatpush1.bf16.msra.mxu0 1065369472
  %3692 = vmatprep.subr.bf16.mxu0 0
  %3693 = vmatpush1.bf16.msra.mxu0 1065369472
  %3694 = vmatprep.subr.bf16.mxu0 0
  %3695 = vmatpush1.bf16.msra.mxu0 1065369472
  %3696 = vmatprep.subr.bf16.mxu0 0
  %3697 = vmatpush1.bf16.msra.mxu0 1065369472
  %3698 = vmatprep.subr.bf16.mxu0 0
  %3699 = vmatpush1.bf16.msra.mxu0 1065369472
  %3700 = vmatprep.subr.bf16.mxu0 0
  %3701 = vmatpush1.bf16.msra.mxu0 1065369472
  %3702 = vmatprep.mubr.bf16.mxu0 %v3373
  %3703 = vmatmul.mubr.bf16.gmra.mrb[0].mxu0 %v3372
  %v3704 = vpop.f32.mrb[0].mxu0
  %v3705 = vadd.f32 %v3665, %v3704
  %v3706 = vpop.f32.mrb[0].mxu0
  %v3707 = vpop.f32.mrb[0].mxu0
  %v3708 = vpop.f32.mrb[0].mxu0
  %3709 = vdwg.mxu0
  %v3710 = vmul.bf16 %v44, %v44
  %v3711 = vmul.bf16 %v45, %v45
  %v3712 = vmul.bf16 %v46, %v46
  %v3713 = vmul.bf16 %v47, %v47
  %v3714 = vmul.bf16 %v48, %v48
  %v3715 = vmul.bf16 %v49, %v49
  %v3716 = vmul.bf16 %v50, %v50
  %v3724 = vunpack.c.l.b16 %v3710
  %v3725 = vunpack.c.h.b16 %v3710
  %v3726 = vunpack.c.l.b16 %v3711
  %v3727 = vunpack.c.h.b16 %v3711
  %v3728 = vunpack.c.l.b16 %v3712
  %v3729 = vunpack.c.h.b16 %v3712
  %v3730 = vunpack.c.l.b16 %v3713
  %v3731 = vunpack.c.h.b16 %v3713
  %v3732 = vunpack.c.l.b16 %v3714
  %v3733 = vunpack.c.h.b16 %v3714
  %v3734 = vunpack.c.l.b16 %v3715
  %v3735 = vunpack.c.h.b16 %v3715
  %v3736 = vunpack.c.l.b16 %v3716
  %v3737 = vpack.c.b16 %v3724, %v3724
  %v3738 = vpack.c.b16 %v3725, %v3725
  %v3739 = vpack.c.b16 %v3726, %v3726
  %v3740 = vpack.c.b16 %v3727, %v3727
  %v3741 = vpack.c.b16 %v3728, %v3728
  %v3742 = vpack.c.b16 %v3729, %v3729
  %v3743 = vpack.c.b16 %v3730, %v3730
  %v3744 = vpack.c.b16 %v3731, %v3731
  %v3745 = vpack.c.b16 %v3732, %v3732
  %v3746 = vpack.c.b16 %v3733, %v3733
  %v3747 = vpack.c.b16 %v3734, %v3734
  %v3748 = vpack.c.b16 %v3735, %v3735
  %v3749 = vpack.c.b16 %v3736, %v3736
  %3763 = vmatprep.subr.bf16.mxu0 0
  %3764 = vmatpush1.bf16.msra.mxu0 1065369472
  %3765 = vmatprep.subr.bf16.mxu0 0
  %3766 = vmatpush1.bf16.msra.mxu0 1065369472
  %3767 = vmatprep.subr.bf16.mxu0 0
  %3768 = vmatpush1.bf16.msra.mxu0 1065369472
  %3769 = vmatprep.subr.bf16.mxu0 0
  %3770 = vmatpush1.bf16.msra.mxu0 1065369472
  %3771 = vmatprep.subr.bf16.mxu0 0
  %3772 = vmatpush1.bf16.msra.mxu0 1065369472
  %3773 = vmatprep.subr.bf16.mxu0 0
  %3774 = vmatpush1.bf16.msra.mxu0 1065369472
  %3775 = vmatprep.subr.bf16.mxu0 0
  %3776 = vmatpush1.bf16.msra.mxu0 1065369472
  %3777 = vmatprep.subr.bf16.mxu0 0
  %3778 = vmatpush1.bf16.msra.mxu0 1065369472
  %3779 = vmatprep.subr.bf16.mxu0 0
  %3780 = vmatpush1.bf16.msra.mxu0 1065369472
  %3781 = vmatprep.subr.bf16.mxu0 0
  %3782 = vmatpush1.bf16.msra.mxu0 1065369472
  %3783 = vmatprep.subr.bf16.mxu0 0
  %3784 = vmatpush1.bf16.msra.mxu0 1065369472
  %3785 = vmatprep.subr.bf16.mxu0 0
  %3786 = vmatpush1.bf16.msra.mxu0 1065369472
  %3787 = vmatprep.subr.bf16.mxu0 0
  %3788 = vmatpush1.bf16.msra.mxu0 1065369472
  %3789 = vmatprep.subr.bf16.mxu0 0
  %3790 = vmatpush1.bf16.msra.mxu0 1065369472
  %3791 = vmatprep.subr.bf16.mxu0 0
  %3792 = vmatpush1.bf16.msra.mxu0 1065369472
  %3793 = vmatprep.subr.bf16.mxu0 0
  %3794 = vmatpush1.bf16.msra.mxu0 1065369472
  %3795 = vmatprep.mubr.bf16.mxu0 %v3738
  %3796 = vmatmul.mubr.bf16.gmra.mrb[0].mxu0 %v3737
  %v3797 = vpop.f32.mrb[0].mxu0
  %v3798 = vadd.f32 0.0, %v3797
  %v3799 = vpop.f32.mrb[0].mxu0
  %v3800 = vpop.f32.mrb[0].mxu0
  %v3801 = vpop.f32.mrb[0].mxu0
  %3802 = vdwg.mxu0
  %3803 = vmatprep.subr.bf16.mxu0 0
  %3804 = vmatpush1.bf16.msra.mxu0 1065369472
  %3805 = vmatprep.subr.bf16.mxu0 0
  %3806 = vmatpush1.bf16.msra.mxu0 1065369472
  %3807 = vmatprep.subr.bf16.mxu0 0
  %3808 = vmatpush1.bf16.msra.mxu0 1065369472
  %3809 = vmatprep.subr.bf16.mxu0 0
  %3810 = vmatpush1.bf16.msra.mxu0 1065369472
  %3811 = vmatprep.subr.bf16.mxu0 0
  %3812 = vmatpush1.bf16.msra.mxu0 1065369472
  %3813 = vmatprep.subr.bf16.mxu0 0
  %3814 = vmatpush1.bf16.msra.mxu0 1065369472
  %3815 = vmatprep.subr.bf16.mxu0 0
  %3816 = vmatpush1.bf16.msra.mxu0 1065369472
  %3817 = vmatprep.subr.bf16.mxu0 0
  %3818 = vmatpush1.bf16.msra.mxu0 1065369472
  %3819 = vmatprep.subr.bf16.mxu0 0
  %3820 = vmatpush1.bf16.msra.mxu0 1065369472
  %3821 = vmatprep.subr.bf16.mxu0 0
  %3822 = vmatpush1.bf16.msra.mxu0 1065369472
  %3823 = vmatprep.subr.bf16.mxu0 0
  %3824 = vmatpush1.bf16.msra.mxu0 1065369472
  %3825 = vmatprep.subr.bf16.mxu0 0
  %3826 = vmatpush1.bf16.msra.mxu0 1065369472
  %3827 = vmatprep.subr.bf16.mxu0 0
  %3828 = vmatpush1.bf16.msra.mxu0 1065369472
  %3829 = vmatprep.subr.bf16.mxu0 0
  %3830 = vmatpush1.bf16.msra.mxu0 1065369472
  %3831 = vmatprep.subr.bf16.mxu0 0
  %3832 = vmatpush1.bf16.msra.mxu0 1065369472
  %3833 = vmatprep.subr.bf16.mxu0 0
  %3834 = vmatpush1.bf16.msra.mxu0 1065369472
  %3835 = vmatprep.mubr.bf16.mxu0 %v3740
  %3836 = vmatmul.mubr.bf16.gmra.mrb[0].mxu0 %v3739
  %v3837 = vpop.f32.mrb[0].mxu0
  %v3838 = vadd.f32 %v3798, %v3837
  %v3839 = vpop.f32.mrb[0].mxu0
  %v3840 = vpop.f32.mrb[0].mxu0
  %v3841 = vpop.f32.mrb[0].mxu0
  %3842 = vdwg.mxu0
  %3843 = vmatprep.subr.bf16.mxu0 0
  %3844 = vmatpush1.bf16.msra.mxu0 1065369472
  %3845 = vmatprep.subr.bf16.mxu0 0
  %3846 = vmatpush1.bf16.msra.mxu0 1065369472
  %3847 = vmatprep.subr.bf16.mxu0 0
  %3848 = vmatpush1.bf16.msra.mxu0 1065369472
  %3849 = vmatprep.subr.bf16.mxu0 0
  %3850 = vmatpush1.bf16.msra.mxu0 1065369472
  %3851 = vmatprep.subr.bf16.mxu0 0
  %3852 = vmatpush1.bf16.msra.mxu0 1065369472
  %3853 = vmatprep.subr.bf16.mxu0 0
  %3854 = vmatpush1.bf16.msra.mxu0 1065369472
  %3855 = vmatprep.subr.bf16.mxu0 0
  %3856 = vmatpush1.bf16.msra.mxu0 1065369472
  %3857 = vmatprep.subr.bf16.mxu0 0
  %3858 = vmatpush1.bf16.msra.mxu0 1065369472
  %3859 = vmatprep.subr.bf16.mxu0 0
  %3860 = vmatpush1.bf16.msra.mxu0 1065369472
  %3861 = vmatprep.subr.bf16.mxu0 0
  %3862 = vmatpush1.bf16.msra.mxu0 1065369472
  %3863 = vmatprep.subr.bf16.mxu0 0
  %3864 = vmatpush1.bf16.msra.mxu0 1065369472
  %3865 = vmatprep.subr.bf16.mxu0 0
  %3866 = vmatpush1.bf16.msra.mxu0 1065369472
  %3867 = vmatprep.subr.bf16.mxu0 0
  %3868 = vmatpush1.bf16.msra.mxu0 1065369472
  %3869 = vmatprep.subr.bf16.mxu0 0
  %3870 = vmatpush1.bf16.msra.mxu0 1065369472
  %3871 = vmatprep.subr.bf16.mxu0 0
  %3872 = vmatpush1.bf16.msra.mxu0 1065369472
  %3873 = vmatprep.subr.bf16.mxu0 0
  %3874 = vmatpush1.bf16.msra.mxu0 1065369472
  %3875 = vmatprep.mubr.bf16.mxu0 %v3742
  %3876 = vmatmul.mubr.bf16.gmra.mrb[0].mxu0 %v3741
  %v3877 = vpop.f32.mrb[0].mxu0
  %v3878 = vadd.f32 %v3838, %v3877
  %v3879 = vpop.f32.mrb[0].mxu0
  %v3880 = vpop.f32.mrb[0].mxu0
  %v3881 = vpop.f32.mrb[0].mxu0
  %3882 = vdwg.mxu0
  %3883 = vmatprep.subr.bf16.mxu0 0
  %3884 = vmatpush1.bf16.msra.mxu0 1065369472
  %3885 = vmatprep.subr.bf16.mxu0 0
  %3886 = vmatpush1.bf16.msra.mxu0 1065369472
  %3887 = vmatprep.subr.bf16.mxu0 0
  %3888 = vmatpush1.bf16.msra.mxu0 1065369472
  %3889 = vmatprep.subr.bf16.mxu0 0
  %3890 = vmatpush1.bf16.msra.mxu0 1065369472
  %3891 = vmatprep.subr.bf16.mxu0 0
  %3892 = vmatpush1.bf16.msra.mxu0 1065369472
  %3893 = vmatprep.subr.bf16.mxu0 0
  %3894 = vmatpush1.bf16.msra.mxu0 1065369472
  %3895 = vmatprep.subr.bf16.mxu0 0
  %3896 = vmatpush1.bf16.msra.mxu0 1065369472
  %3897 = vmatprep.subr.bf16.mxu0 0
  %3898 = vmatpush1.bf16.msra.mxu0 1065369472
  %3899 = vmatprep.subr.bf16.mxu0 0
  %3900 = vmatpush1.bf16.msra.mxu0 1065369472
  %3901 = vmatprep.subr.bf16.mxu0 0
  %3902 = vmatpush1.bf16.msra.mxu0 1065369472
  %3903 = vmatprep.subr.bf16.mxu0 0
  %3904 = vmatpush1.bf16.msra.mxu0 1065369472
  %3905 = vmatprep.subr.bf16.mxu0 0
  %3906 = vmatpush1.bf16.msra.mxu0 1065369472
  %3907 = vmatprep.subr.bf16.mxu0 0
  %3908 = vmatpush1.bf16.msra.mxu0 1065369472
  %3909 = vmatprep.subr.bf16.mxu0 0
  %3910 = vmatpush1.bf16.msra.mxu0 1065369472
  %3911 = vmatprep.subr.bf16.mxu0 0
  %3912 = vmatpush1.bf16.msra.mxu0 1065369472
  %3913 = vmatprep.subr.bf16.mxu0 0
  %3914 = vmatpush1.bf16.msra.mxu0 1065369472
  %3915 = vmatprep.mubr.bf16.mxu0 %v3744
  %3916 = vmatmul.mubr.bf16.gmra.mrb[0].mxu0 %v3743
  %v3917 = vpop.f32.mrb[0].mxu0
  %v3918 = vadd.f32 %v3878, %v3917
  %v3919 = vpop.f32.mrb[0].mxu0
  %v3920 = vpop.f32.mrb[0].mxu0
  %v3921 = vpop.f32.mrb[0].mxu0
  %3922 = vdwg.mxu0
  %3923 = vmatprep.subr.bf16.mxu0 0
  %3924 = vmatpush1.bf16.msra.mxu0 1065369472
  %3925 = vmatprep.subr.bf16.mxu0 0
  %3926 = vmatpush1.bf16.msra.mxu0 1065369472
  %3927 = vmatprep.subr.bf16.mxu0 0
  %3928 = vmatpush1.bf16.msra.mxu0 1065369472
  %3929 = vmatprep.subr.bf16.mxu0 0
  %3930 = vmatpush1.bf16.msra.mxu0 1065369472
  %3931 = vmatprep.subr.bf16.mxu0 0
  %3932 = vmatpush1.bf16.msra.mxu0 1065369472
  %3933 = vmatprep.subr.bf16.mxu0 0
  %3934 = vmatpush1.bf16.msra.mxu0 1065369472
  %3935 = vmatprep.subr.bf16.mxu0 0
  %3936 = vmatpush1.bf16.msra.mxu0 1065369472
  %3937 = vmatprep.subr.bf16.mxu0 0
  %3938 = vmatpush1.bf16.msra.mxu0 1065369472
  %3939 = vmatprep.subr.bf16.mxu0 0
  %3940 = vmatpush1.bf16.msra.mxu0 1065369472
  %3941 = vmatprep.subr.bf16.mxu0 0
  %3942 = vmatpush1.bf16.msra.mxu0 1065369472
  %3943 = vmatprep.subr.bf16.mxu0 0
  %3944 = vmatpush1.bf16.msra.mxu0 1065369472
  %3945 = vmatprep.subr.bf16.mxu0 0
  %3946 = vmatpush1.bf16.msra.mxu0 1065369472
  %3947 = vmatprep.subr.bf16.mxu0 0
  %3948 = vmatpush1.bf16.msra.mxu0 1065369472
  %3949 = vmatprep.subr.bf16.mxu0 0
  %3950 = vmatpush1.bf16.msra.mxu0 1065369472
  %3951 = vmatprep.subr.bf16.mxu0 0
  %3952 = vmatpush1.bf16.msra.mxu0 1065369472
  %3953 = vmatprep.subr.bf16.mxu0 0
  %3954 = vmatpush1.bf16.msra.mxu0 1065369472
  %3955 = vmatprep.mubr.bf16.mxu0 %v3746
  %3956 = vmatmul.mubr.bf16.gmra.mrb[0].mxu0 %v3745
  %v3957 = vpop.f32.mrb[0].mxu0
  %v3958 = vadd.f32 %v3918, %v3957
  %v3959 = vpop.f32.mrb[0].mxu0
  %v3960 = vpop.f32.mrb[0].mxu0
  %v3961 = vpop.f32.mrb[0].mxu0
  %3962 = vdwg.mxu0
  %3963 = vmatprep.subr.bf16.mxu0 0
  %3964 = vmatpush1.bf16.msra.mxu0 1065369472
  %3965 = vmatprep.subr.bf16.mxu0 0
  %3966 = vmatpush1.bf16.msra.mxu0 1065369472
  %3967 = vmatprep.subr.bf16.mxu0 0
  %3968 = vmatpush1.bf16.msra.mxu0 1065369472
  %3969 = vmatprep.subr.bf16.mxu0 0
  %3970 = vmatpush1.bf16.msra.mxu0 1065369472
  %3971 = vmatprep.subr.bf16.mxu0 0
  %3972 = vmatpush1.bf16.msra.mxu0 1065369472
  %3973 = vmatprep.subr.bf16.mxu0 0
  %3974 = vmatpush1.bf16.msra.mxu0 1065369472
  %3975 = vmatprep.subr.bf16.mxu0 0
  %3976 = vmatpush1.bf16.msra.mxu0 1065369472
  %3977 = vmatprep.subr.bf16.mxu0 0
  %3978 = vmatpush1.bf16.msra.mxu0 1065369472
  %3979 = vmatprep.subr.bf16.mxu0 0
  %3980 = vmatpush1.bf16.msra.mxu0 1065369472
  %3981 = vmatprep.subr.bf16.mxu0 0
  %3982 = vmatpush1.bf16.msra.mxu0 1065369472
  %3983 = vmatprep.subr.bf16.mxu0 0
  %3984 = vmatpush1.bf16.msra.mxu0 1065369472
  %3985 = vmatprep.subr.bf16.mxu0 0
  %3986 = vmatpush1.bf16.msra.mxu0 1065369472
  %3987 = vmatprep.subr.bf16.mxu0 0
  %3988 = vmatpush1.bf16.msra.mxu0 1065369472
  %3989 = vmatprep.subr.bf16.mxu0 0
  %3990 = vmatpush1.bf16.msra.mxu0 1065369472
  %3991 = vmatprep.subr.bf16.mxu0 0
  %3992 = vmatpush1.bf16.msra.mxu0 1065369472
  %3993 = vmatprep.subr.bf16.mxu0 0
  %3994 = vmatpush1.bf16.msra.mxu0 1065369472
  %3995 = vmatprep.mubr.bf16.mxu0 %v3748
  %3996 = vmatmul.mubr.bf16.gmra.mrb[0].mxu0 %v3747
  %v3997 = vpop.f32.mrb[0].mxu0
  %v3998 = vadd.f32 %v3958, %v3997
  %v3999 = vpop.f32.mrb[0].mxu0
  %v4000 = vpop.f32.mrb[0].mxu0
  %v4001 = vpop.f32.mrb[0].mxu0
  %4002 = vdwg.mxu0
  %4003 = vmatprep.subr.bf16.mxu0 0
  %4004 = vmatpush1.bf16.msra.mxu0 1065369472
  %4005 = vmatprep.subr.bf16.mxu0 0
  %4006 = vmatpush1.bf16.msra.mxu0 1065369472
  %4007 = vmatprep.subr.bf16.mxu0 0
  %4008 = vmatpush1.bf16.msra.mxu0 1065369472
  %4009 = vmatprep.subr.bf16.mxu0 0
  %4010 = vmatpush1.bf16.msra.mxu0 1065369472
  %4011 = vmatprep.subr.bf16.mxu0 0
  %4012 = vmatpush1.bf16.msra.mxu0 1065369472
  %4013 = vmatprep.subr.bf16.mxu0 0
  %4014 = vmatpush1.bf16.msra.mxu0 1065369472
  %4015 = vmatprep.subr.bf16.mxu0 0
  %4016 = vmatpush1.bf16.msra.mxu0 1065369472
  %4017 = vmatprep.subr.bf16.mxu0 0
  %4018 = vmatpush1.bf16.msra.mxu0 1065369472
  %4019 = vmatprep.subr.bf16.mxu0 0
  %4020 = vmatpush1.bf16.msra.mxu0 0
  %4021 = vmatprep.subr.bf16.mxu0 0
  %4022 = vmatpush1.bf16.msra.mxu0 0
  %4023 = vmatprep.subr.bf16.mxu0 0
  %4024 = vmatpush1.bf16.msra.mxu0 0
  %4025 = vmatprep.subr.bf16.mxu0 0
  %4026 = vmatpush1.bf16.msra.mxu0 0
  %4027 = vmatprep.subr.bf16.mxu0 0
  %4028 = vmatpush1.bf16.msra.mxu0 0
  %4029 = vmatprep.subr.bf16.mxu0 0
  %4030 = vmatpush1.bf16.msra.mxu0 0
  %4031 = vmatprep.subr.bf16.mxu0 0
  %4032 = vmatpush1.bf16.msra.mxu0 0
  %4033 = vmatprep.subr.bf16.mxu0 0
  %4034 = vmatpush1.bf16.msra.mxu0 0
  %4035 = vmatprep.mubr.bf16.mxu0 0
  %4036 = vmatmul.mubr.bf16.gmra.mrb[0].mxu0 %v3749
  %v4037 = vpop.f32.mrb[0].mxu0
  %v4038 = vadd.f32 %v3998, %v4037
  %v4039 = vpop.f32.mrb[0].mxu0
  %v4040 = vpop.f32.mrb[0].mxu0
  %v4041 = vpop.f32.mrb[0].mxu0
  %4042 = vdwg.mxu0
  %vm4043 = vcmask 1043456
  %v4046 = vsel %vm4043, %v2648, 4286644096
  %v4049 = vsel %vm4043, %v2649, 4286644096
  %v4052 = vsel %vm4043, %v2650, 4286644096
  %v4055 = vsel %vm4043, %v2651, 4286644096
  %v4058 = vsel %vm4043, %v2652, 4286644096
  %v4060 = vmax.bf16 %v4046, %v4058
  %v4062 = vsel %vm4043, %v2653, 4286644096
  %v4064 = vmax.bf16 %v4049, %v4062
  %v4066 = vsel %vm4043, %v2654, 4286644096
  %v4068 = vmax.bf16 %v4052, %v4066
  %v4070 = vsel %vm4043, %v2655, 4286644096
  %v4072 = vmax.bf16 %v4055, %v4070
  %v4074 = vsel %vm4043, %v2656, 4286644096
  %v4076 = vmax.bf16 %v4060, %v4074
  %v4078 = vsel %vm4043, %v2657, 4286644096
  %v4080 = vmax.bf16 %v4064, %v4078
  %v4082 = vsel %vm4043, %v2658, 4286644096
  %v4084 = vmax.bf16 %v4068, %v4082
  %v4086 = vsel %vm4043, %v2659, 4286644096
  %v4088 = vmax.bf16 %v4072, %v4086
  %v4090 = vsel %vm4043, %v2660, 4286644096
  %v4092 = vmax.bf16 %v4076, %v4090
  %v4094 = vsel %vm4043, %v2661, 4286644096
  %v4096 = vmax.bf16 %v4080, %v4094
  %v4098 = vsel %vm4043, %v2662, 4286644096
  %v4100 = vmax.bf16 %v4084, %v4098
  %v4102 = vsel %vm4043, %v2663, 4286644096
  %v4104 = vmax.bf16 %v4088, %v4102
  %v4105 = vmax.bf16 %v4092, %v4096
  %v4106 = vmax.bf16 %v4100, %v4104
  %v4107 = vmax.bf16 %v4105, %v4106
  %4108 = vmax.xlane.bf16.xlu0 %v4107
  %v4109 = vpop.xlane.xlu0 %4108
  %v4110 = vunpack.c.l.bf16 %v4109
  %v4112 = vsel %vm4043, %v2648, 2139127680
  %v4114 = vsel %vm4043, %v2649, 2139127680
  %v4116 = vsel %vm4043, %v2650, 2139127680
  %v4118 = vsel %vm4043, %v2651, 2139127680
  %v4120 = vsel %vm4043, %v2652, 2139127680
  %v4122 = vmin.bf16 %v4112, %v4120
  %v4123 = vsel %vm4043, %v2653, 2139127680
  %v4125 = vmin.bf16 %v4114, %v4123
  %v4126 = vsel %vm4043, %v2654, 2139127680
  %v4128 = vmin.bf16 %v4116, %v4126
  %v4129 = vsel %vm4043, %v2655, 2139127680
  %v4131 = vmin.bf16 %v4118, %v4129
  %v4132 = vsel %vm4043, %v2656, 2139127680
  %v4134 = vmin.bf16 %v4122, %v4132
  %v4135 = vsel %vm4043, %v2657, 2139127680
  %v4137 = vmin.bf16 %v4125, %v4135
  %v4138 = vsel %vm4043, %v2658, 2139127680
  %v4140 = vmin.bf16 %v4128, %v4138
  %v4141 = vsel %vm4043, %v2659, 2139127680
  %v4143 = vmin.bf16 %v4131, %v4141
  %v4144 = vsel %vm4043, %v2660, 2139127680
  %v4146 = vmin.bf16 %v4134, %v4144
  %v4147 = vsel %vm4043, %v2661, 2139127680
  %v4149 = vmin.bf16 %v4137, %v4147
  %v4150 = vsel %vm4043, %v2662, 2139127680
  %v4152 = vmin.bf16 %v4140, %v4150
  %v4153 = vsel %vm4043, %v2663, 2139127680
  %v4155 = vmin.bf16 %v4143, %v4153
  %v4156 = vmin.bf16 %v4146, %v4149
  %v4157 = vmin.bf16 %v4152, %v4155
  %v4158 = vmin.bf16 %v4156, %v4157
  %4159 = vmin.xlane.bf16.xlu0 %v4158
  %v4160 = vpop.xlane.xlu0 %4159
  %v4161 = vunpack.c.l.bf16 %v4160
  %v4162 = vlaneseq
  %v4163 = vand.u32 %v4162, 127
  %vm4164 = vcmp.lt.s32.totalorder %v4163, 97
  %v4166 = vsel %vm4043, %v3020, 4286644096
  %v4169 = vsel %vm4043, %v3021, 4286644096
  %v4172 = vsel %vm4043, %v3022, 4286644096
  %v4175 = vsel %vm4043, %v3023, 4286644096
  %v4178 = vsel %vm4043, %v3024, 4286644096
  %v4180 = vmax.bf16 %v4166, %v4178
  %v4182 = vsel %vm4043, %v3025, 4286644096
  %v4184 = vmax.bf16 %v4169, %v4182
  %v4186 = vsel %vm4043, %v3026, 4286644096
  %v4188 = vmax.bf16 %v4172, %v4186
  %v4190 = vsel %vm4043, %v3027, 4286644096
  %v4192 = vmax.bf16 %v4175, %v4190
  %v4194 = vsel %vm4043, %v3028, 4286644096
  %v4196 = vmax.bf16 %v4180, %v4194
  %v4198 = vsel %vm4043, %v3029, 4286644096
  %v4200 = vmax.bf16 %v4184, %v4198
  %v4202 = vsel %vm4043, %v3030, 4286644096
  %v4204 = vmax.bf16 %v4188, %v4202
  %v4206 = vsel %vm4043, %v3031, 4286644096
  %v4208 = vmax.bf16 %v4192, %v4206
  %v4209 = vmax.bf16 %v4196, %v4200
  %v4210 = vmax.bf16 %v4204, %v4208
  %v4211 = vmax.bf16 %v4209, %v4210
  %4212 = vmax.xlane.bf16.xlu0 %v4211
  %v4213 = vpop.xlane.xlu0 %4212
  %vm4214 = vmpackc.low %vm4164, %vm4164
  %v4215 = vsel %vm4214, %v50, 4286644096
  %v4217 = vsel %vm4043, %v4215, 4286644096
  %4219 = vmax.xlane.bf16.xlu0 %v4217
  %v4220 = vpop.xlane.xlu0 %4219
  %v4221 = vmax.bf16 %v4213, %v4220
  %v4222 = vunpack.c.l.bf16 %v4221
  %v4223 = vsel %vm4043, %v3020, 2139127680
  %v4225 = vsel %vm4043, %v3021, 2139127680
  %v4227 = vsel %vm4043, %v3022, 2139127680
  %v4229 = vsel %vm4043, %v3023, 2139127680
  %v4231 = vsel %vm4043, %v3024, 2139127680
  %v4233 = vmin.bf16 %v4223, %v4231
  %v4234 = vsel %vm4043, %v3025, 2139127680
  %v4236 = vmin.bf16 %v4225, %v4234
  %v4237 = vsel %vm4043, %v3026, 2139127680
  %v4239 = vmin.bf16 %v4227, %v4237
  %v4240 = vsel %vm4043, %v3027, 2139127680
  %v4242 = vmin.bf16 %v4229, %v4240
  %v4243 = vsel %vm4043, %v3028, 2139127680
  %v4245 = vmin.bf16 %v4233, %v4243
  %v4246 = vsel %vm4043, %v3029, 2139127680
  %v4248 = vmin.bf16 %v4236, %v4246
  %v4249 = vsel %vm4043, %v3030, 2139127680
  %v4251 = vmin.bf16 %v4239, %v4249
  %v4252 = vsel %vm4043, %v3031, 2139127680
  %v4254 = vmin.bf16 %v4242, %v4252
  %v4255 = vmin.bf16 %v4245, %v4248
  %v4256 = vmin.bf16 %v4251, %v4254
  %v4257 = vmin.bf16 %v4255, %v4256
  %4258 = vmin.xlane.bf16.xlu0 %v4257
  %v4259 = vpop.xlane.xlu0 %4258
  %v4260 = vsel %vm4214, %v50, 2139127680
  %v4262 = vsel %vm4043, %v4260, 2139127680
  %4264 = vmin.xlane.bf16.xlu0 %v4262
  %v4265 = vpop.xlane.xlu0 %4264
  %v4266 = vmin.bf16 %v4259, %v4265
  %v4267 = vunpack.c.l.bf16 %v4266
  %v4268 = vmul.f32 %v2995, 0.00048828125
  %v4269 = vmul.f32 %v2995, %v4268
  %v4270 = vsub.f32 %v3705, %v4269
  %v4271 = vmul.f32 %v4270, 0.0004885198
  %v4272 = vmax.f32 %v4271, 0.0
  %v4273 = vrsqrt.pop %v4272
  %v4274 = vmul.f32 %v4272, %v4273
  %vm4275 = vcmp.eq.f32.partialorder %v4272, inf
  %v4276 = vsel %vm4275, %v4272, %v4274
  %vm4277 = vcmp.eq.f32.partialorder %v4272, 0.0
  %v4278 = vand.u32 %v4272, 2147483648
  %v4279 = vsel %vm4277, %v4278, %v4276
  %v4280 = vmul.f32 %v3321, 0.00061236985
  %v4281 = vmul.f32 %v3321, %v4280
  %v4282 = vsub.f32 %v4038, %v4281
  %v4283 = vmul.f32 %v4282, 0.0006127451
  %v4284 = vmax.f32 %v4283, 0.0
  %v4285 = vrsqrt.pop %v4284
  %v4286 = vmul.f32 %v4284, %v4285
  %vm4287 = vcmp.eq.f32.partialorder %v4284, inf
  %v4288 = vsel %vm4287, %v4284, %v4286
  %vm4289 = vcmp.eq.f32.partialorder %v4284, 0.0
  %v4290 = vand.u32 %v4284, 2147483648
  %v4291 = vsel %vm4289, %v4290, %v4288
  %v4292 = vld [vmem:[%s2] sm:$0xff]
  %v4293 = vlaneseq
  %v4294 = vshrl.u32 %v4293, 7
  %v4295 = vsub.s32 0, %v4294
  %v4296 = vrot.slane %v4292, %v4295
  %v4297 = vmul.f32 %v4110, %v4296
  %v4298 = vlaneseq
  %v4299 = vshrl.u32 %v4298, 7
  %v4300 = vsub.s32 1, %v4299
  %v4301 = vrot.slane %v4292, %v4300
  %v4302 = vmul.f32 %v4161, %v4301
  %v4303 = vadd.f32 %v4297, %v4302
  %4305 = vset.pattern.permute.xlu0 0
  %4306 = vperm.xlu0 %4305, %v4268
  %v4307 = vpop.permute.xlu0 %4306
  %v4309 = vlaneseq
  %v4310 = vshrl.u32 %v4309, 7
  %v4311 = vsub.s32 2, %v4310
  %v4312 = vrot.slane %v4292, %v4311
  %v4313 = vmul.f32 %v4307, %v4312
  %4315 = vset.pattern.permute.xlu0 0
  %4316 = vperm.xlu0 %4315, %v4279
  %v4317 = vpop.permute.xlu0 %4316
  %v4319 = vlaneseq
  %v4320 = vshrl.u32 %v4319, 7
  %v4321 = vsub.s32 3, %v4320
  %v4322 = vrot.slane %v4292, %v4321
  %v4323 = vmul.f32 %v4317, %v4322
  %v4324 = vadd.f32 %v4313, %v4323
  %v4325 = vlaneseq
  %v4326 = vshrl.u32 %v4325, 7
  %v4327 = vsub.s32 4, %v4326
  %v4328 = vrot.slane %v4292, %v4327
  %v4329 = vmul.f32 %v4222, %v4328
  %v4330 = vlaneseq
  %v4331 = vshrl.u32 %v4330, 7
  %v4332 = vsub.s32 5, %v4331
  %v4333 = vrot.slane %v4292, %v4332
  %v4334 = vmul.f32 %v4267, %v4333
  %v4335 = vadd.f32 %v4329, %v4334
  %4337 = vset.pattern.permute.xlu0 0
  %4338 = vperm.xlu0 %4337, %v4280
  %v4339 = vpop.permute.xlu0 %4338
  %v4341 = vlaneseq
  %v4342 = vshrl.u32 %v4341, 7
  %v4343 = vsub.s32 6, %v4342
  %v4344 = vrot.slane %v4292, %v4343
  %v4345 = vmul.f32 %v4339, %v4344
  %4347 = vset.pattern.permute.xlu0 0
  %4348 = vperm.xlu0 %4347, %v4291
  %v4349 = vpop.permute.xlu0 %4348
  %v4351 = vlaneseq
  %v4352 = vshrl.u32 %v4351, 7
  %v4353 = vsub.s32 7, %v4352
  %v4354 = vrot.slane %v4292, %v4353
  %v4355 = vmul.f32 %v4349, %v4354
  %v4356 = vadd.f32 %v4345, %v4355
  %v4357 = vadd.f32 %v4303, %v4324
  %v4358 = vadd.f32 %v4335, %v4356
  %v4359 = vadd.f32 %v4357, %v4358
  %v4360 = vld [vmem:[%s3] sm:$0x1]
  %v4362 = vlaneseq
  %v4363 = vshrl.u32 %v4362, 7
  %v4364 = vsub.s32 0, %v4363
  %v4365 = vrot.slane %v4360, %v4364
  %v4367 = vadd.f32 %v4359, %v4365
  %v4368 = vtanh.pop %v4367
  %v4369 = vld [vmem:[%s4] sm:$0xff]
  %v4370 = vld [vmem:[%s4 + $0x8] sm:$0xff]
  %v4371 = vld [vmem:[%s4 + $0x10] sm:$0xff]
  %v4372 = vld [vmem:[%s4 + $0x18] sm:$0xff]
  %v4373 = vld [vmem:[%s4 + $0x20] sm:$0xff]
  %v4374 = vld [vmem:[%s4 + $0x28] sm:$0xff]
  %v4375 = vld [vmem:[%s4 + $0x30] sm:$0xff]
  %v4376 = vld [vmem:[%s4 + $0x38] sm:$0xff]
  %v4377 = vld [vmem:[%s5] sm:$0x1]
  %v4379 = vlaneseq
  %v4380 = vshrl.u32 %v4379, 7
  %v4381 = vsub.s32 0, %v4380
  %v4382 = vrot.slane %v4377, %v4381
  %vm4384 = vcmask 523264
  %v4386 = vsel %vm4384, %v4368, 0
  %4388 = vmatprep.subr.mxu0 0.0
  %4389 = vmatpush1.msra.mxu0 %v4369
  %4390 = vmatprep.subr.mxu0 0.0
  %4391 = vmatpush1.msra.mxu0 %v4370
  %4392 = vmatprep.subr.mxu0 0.0
  %4393 = vmatpush1.msra.mxu0 %v4371
  %4394 = vmatprep.subr.mxu0 0.0
  %4395 = vmatpush1.msra.mxu0 %v4372
  %4396 = vmatprep.subr.mxu0 0.0
  %4397 = vmatpush1.msra.mxu0 %v4373
  %4398 = vmatprep.subr.mxu0 0.0
  %4399 = vmatpush1.msra.mxu0 %v4374
  %4400 = vmatprep.subr.mxu0 0.0
  %4401 = vmatpush1.msra.mxu0 %v4375
  %4402 = vmatprep.subr.mxu0 0.0
  %4403 = vmatpush1.msra.mxu0 %v4376
  %4404 = vmatprep.subr.mxu0 0.0
  %4405 = vmatpush1.msra.mxu0 0.0
  %4406 = vmatprep.subr.mxu0 0.0
  %4407 = vmatpush1.msra.mxu0 0.0
  %4408 = vmatprep.subr.mxu0 0.0
  %4409 = vmatpush1.msra.mxu0 0.0
  %4410 = vmatprep.subr.mxu0 0.0
  %4411 = vmatpush1.msra.mxu0 0.0
  %4412 = vmatprep.subr.mxu0 0.0
  %4413 = vmatpush1.msra.mxu0 0.0
  %4414 = vmatprep.subr.mxu0 0.0
  %4415 = vmatpush1.msra.mxu0 0.0
  %4416 = vmatprep.subr.mxu0 0.0
  %4417 = vmatpush1.msra.mxu0 0.0
  %4418 = vmatprep.subr.mxu0 0.0
  %4419 = vmatpush1.msra.mxu0 0.0
  %4420 = vmatprep.subr.mxu0 0.0
  %4421 = vmatpush1.msra.mxu0 0.0
  %4422 = vmatprep.subr.mxu0 0.0
  %4423 = vmatpush1.msra.mxu0 0.0
  %4424 = vmatprep.subr.mxu0 0.0
  %4425 = vmatpush1.msra.mxu0 0.0
  %4426 = vmatprep.subr.mxu0 0.0
  %4427 = vmatpush1.msra.mxu0 0.0
  %4428 = vmatprep.subr.mxu0 0.0
  %4429 = vmatpush1.msra.mxu0 0.0
  %4430 = vmatprep.subr.mxu0 0.0
  %4431 = vmatpush1.msra.mxu0 0.0
  %4432 = vmatprep.subr.mxu0 0.0
  %4433 = vmatpush1.msra.mxu0 0.0
  %4434 = vmatprep.subr.mxu0 0.0
  %4435 = vmatpush1.msra.mxu0 0.0
  %4436 = vmatprep.subr.mxu0 0.0
  %4437 = vmatpush1.msra.mxu0 0.0
  %4438 = vmatprep.subr.mxu0 0.0
  %4439 = vmatpush1.msra.mxu0 0.0
  %4440 = vmatprep.subr.mxu0 0.0
  %4441 = vmatpush1.msra.mxu0 0.0
  %4442 = vmatprep.subr.mxu0 0.0
  %4443 = vmatpush1.msra.mxu0 0.0
  %4444 = vmatprep.subr.mxu0 0.0
  %4445 = vmatpush1.msra.mxu0 0.0
  %4446 = vmatprep.subr.mxu0 0.0
  %4447 = vmatpush1.msra.mxu0 0.0
  %4448 = vmatprep.subr.mxu0 0.0
  %4449 = vmatpush1.msra.mxu0 0.0
  %4450 = vmatprep.subr.mxu0 0.0
  %4451 = vmatpush1.msra.mxu0 0.0
  %4452 = vmatprep.mubr.f32.mxu0 0.0
  %4453 = vmatmul.mubr.f32.gmra.mrb[0].mxu0 %v4386
  %v4454 = vpop.f32.mrb[0].mxu0
  %v4455 = vadd.f32 %v4382, %v4454
  %v4456 = vpop.f32.mrb[0].mxu0
  %4457 = vdwg.mxu0
  %v4458 = vxor.u32 %v4455, 2147483648
  %v4459 = vmul.f32 %v4458, 1.442695
  %v4460 = vpow.pop %v4459
  %v4461 = vadd.f32 %v4460, 1.0
  %v4462 = vrcp.pop %v4461
  %v4463 = vmul.f32 1.0, %v4462
  %4465 = vset.pattern.permute.xlu0 0
  %4466 = vperm.xlu0 %4465, %v4463
  %v4467 = vpop.permute.xlu0 %4466
  %v4469 = vmul.f32 %v4467, %v1461
  %4470 = vset.pattern.permute.xlu0 1
  %4471 = vperm.xlu0 %4470, %v4463
  %v4472 = vpop.permute.xlu0 %4471
  %v4474 = vmul.f32 %v4472, %v2619
  %v4475 = vadd.f32 %v4469, %v4474
  %v4476 = vld [vmem:[%s8] sm:$0x1]
  %v4478 = vlaneseq
  %v4479 = vshrl.u32 %v4478, 7
  %v4480 = vsub.s32 0, %v4479
  %v4481 = vrot.slane %v4476, %v4480
  %v4483 = vadd.f32 %v4475, %v4481
  %vm4484 = vcmp.lt.s32.totalorder %v4163, 10
  %v4485 = vsel %vm4484, %v4483, -inf
  %vm4486 = vcmask 130048
  %v4487 = vsel %vm4486, %v4485, -inf
  %4488 = vmax.xlane.f32.xlu0 %v4487
  %v4489 = vpop.xlane.xlu0 %4488
  %v4490 = vsub.f32 %v4483, %v4489
  %v4491 = vmul.f32 %v4490, 1.442695
  %v4492 = vpow.pop %v4491
  %v4493 = vsel %vm4484, %v4492, 0.0
  %v4494 = vsel %vm4486, %v4493, 0.0
  %4495 = vadd.xlane.f32.xlu0 %v4494
  %v4496 = vpop.xlane.xlu0 %4495
  %v4497 = vrcp.pop %v4496
  %v4498 = vmul.f32 %v4493, %v4497
  %v4499 = vxor.u32 %v4483, 2147483648
  %v4500 = vmul.f32 %v4499, 1.442695
  %v4501 = vpow.pop %v4500
  %v4502 = vadd.f32 %v4501, 1.0
  %v4503 = vrcp.pop %v4502
  %v4504 = vmul.f32 1.0, %v4503
  %vm4505 = vcmp.eq.s32.totalorder %v4163, 10
  %v4506 = vsel %vm4505, %v4504, 0.0
  %v4507 = vsel %vm4484, %v4498, %v4506
  %4508 = vst.msk [vmem:[%s9] sm:$0xff] %vm4486, %v4507
  // Predicated region
  $region38: #{nima_finetune_forward.1} parent=0 // pred_check
    _
  $region39: #{nima_finetune_forward.1} parent=0 // pred_check_branch
    %4510 = sbr.rel (0) target = $region41
  $region40: #{nima_finetune_forward.1} parent=0 // pred_region
    _
  $region41: #{nima_finetune_forward.1} parent=0 // pred_fallthru
    _
  // Predicated region
  $region42: #{nima_finetune_forward.1} parent=0 // pred_check
    _
  $region43: #{nima_finetune_forward.1} parent=0 // pred_check_branch
    %4512 = sbr.rel (0) target = $region45
  $region44: #{nima_finetune_forward.1} parent=0 // pred_region
    _
  $region45: #{nima_finetune_forward.1} parent=0 // pred_fallthru
    _

</llo_original>
